<compile_context>
chip_gen: v7x
topology: tpu7x:2x2x1
jax: 0.10.0
libtpu: 0.0.40
codegen_flags: <defaults>
</compile_context>

<pallas_src>
import functools

import jax
import jax.numpy as jnp
from jax.experimental import pallas as pl
from jax.experimental.pallas import tpu as pltpu


# --------------------------------------------------------------------------- #
# helpers
# --------------------------------------------------------------------------- #
def _sublane_pack(dtype):
    return {4: 8, 2: 16, 1: 32}.get(jnp.dtype(dtype).itemsize, 8)


def _two_tensorcores():
    """Best-effort check for dual-TensorCore / megacore parts (v7x, v4, v5p)."""
    try:
        kind = jax.devices()[0].device_kind.lower()
    except Exception:
        return False
    return any(tag in kind for tag in ("v7", "v4", "v5p"))


def _vmem_limit_bytes():
    """Per-generation scoped-VMEM limit with headroom (7/8 of physical)."""
    cap = None
    try:
        cap = getattr(pltpu.get_tpu_info(), "vmem_capacity_bytes", None)
    except Exception:
        cap = None
    if not cap:
        cap = 64 * 1024 * 1024            # conservative fallback (v7x floor)
    return int(cap) * 7 // 8              # v7x -> 56 MiB, v5e/v6e -> 112 MiB


def _spec(shape, index_map, buffers=None):
    """BlockSpec helper; buffers=1 single-buffers grid-invariant operands."""
    if buffers is None:
        return pl.BlockSpec(shape, index_map)
    try:
        return pl.BlockSpec(shape, index_map, pipeline_mode=pl.Buffered(buffers))
    except TypeError:                     # older jax without pipeline_mode
        return pl.BlockSpec(shape, index_map)


def _pick_tm(batch, pack, two_tc):
    tm = 256
    if two_tc:
        # keep >= 2 grid steps (one per TensorCore) when the batch allows ...
        while tm > pack and batch < 2 * tm:
            tm //= 2
        # ... and prefer an even tile count so both cores get equal work.
        n = pl.cdiv(batch, tm)
        if (n > 1 and n % 2 == 1 and tm // 2 >= max(pack, 64)
                and pl.cdiv(batch, tm // 2) % 2 == 0):
            tm //= 2
    tm = max(pack, min(tm, pl.cdiv(batch, pack) * pack))
    return (tm // pack) * pack


# --------------------------------------------------------------------------- #
# kernel
# --------------------------------------------------------------------------- #
def _glu_block_kernel(x_ref, gamma_ref, beta_ref, w1_ref, b1_ref, w2_ref, b2_ref,
                      o_ref, xn_ref, acc_ref, *, eps, tn, n_sub, precision):
    j = pl.program_id(1)

    # ---- once per batch tile: LayerNorm (f32 stats) + accumulator init ----
    @pl.when(j == 0)
    def _():
        xf = x_ref[...].astype(jnp.float32)
        mean = jnp.mean(xf, axis=-1, keepdims=True)
        cent = xf - mean
        var = jnp.mean(cent * cent, axis=-1, keepdims=True)
        xn = cent * jax.lax.rsqrt(var + eps)
        xn = xn * gamma_ref[...].astype(jnp.float32) \
             + beta_ref[...].astype(jnp.float32)
        xn_ref[...] = xn.astype(xn_ref.dtype)   # stored in the matmul operand dtype
        acc_ref[...] = jnp.zeros_like(acc_ref)

    # ---- per value/gate chunk: fused linear1 + GLU + partial linear2 ----
    # Sub-blocking the batch tile gives the scheduler ILP across the serialized
    # dot -> sigmoid/mul -> dot chain (sub-block s+1's matmul co-issues with
    # sub-block s's GLU elementwise phase).
    tm = x_ref.shape[0]
    tm_sub = tm // n_sub
    for s in range(n_sub):
        rows = slice(s * tm_sub, (s + 1) * tm_sub)
        xn_s = xn_ref[rows, :]
        y1 = jnp.dot(xn_s, w1_ref[...], precision=precision,
                     preferred_element_type=jnp.float32)
        y1 = y1 + b1_ref[...].astype(jnp.float32)
        a = y1[:, :tn]                       # value half (lane-aligned slice)
        g = y1[:, tn:]                       # gate half
        h = a * jax.nn.sigmoid(g)            # GLU in f32 (sigmoid on EUP)
        acc_ref[rows, :] = acc_ref[rows, :] + jnp.dot(
            h.astype(w2_ref.dtype), w2_ref[...], precision=precision,
            preferred_element_type=jnp.float32)

    # ---- once per batch tile: bias, dropout (eval: identity), residual ----
    # TODO(synk): training-mode dropout (pltpu.prng_seed + prng_random_bits mask).
    @pl.when(j == pl.num_programs(1) - 1)
    def _():
        y = acc_ref[...] + b2_ref[...].astype(jnp.float32)
        o_ref[...] = (y + x_ref[...].astype(jnp.float32)).astype(o_ref.dtype)


# --------------------------------------------------------------------------- #
# wrapper
# --------------------------------------------------------------------------- #
def glu_block(x, params, *, eps=1e-5, tm=None, tn=None, precision=None,
              donate_x=False):
    """x: [B, D_in]; requires output_dim == input_dim (residual add).

    params = (gamma[1,Din], beta[1,Din], w1[Din,2*Dout], b1[1,2*Dout],
              w2[Dout,Dout], b2[1,Dout]); w1 value half = cols [:Dout],
              gate half = cols [Dout:] (PyTorch F.glu(dim=1) ordering).
    """
    B, D_in = x.shape
    gamma, beta, w1, b1, w2, b2 = params
    D_out = w2.shape[1]
    assert w1.shape == (D_in, 2 * D_out)
    assert b1.shape == (1, 2 * D_out) and b2.shape == (1, D_out)
    assert gamma.shape == (1, D_in) and beta.shape == (1, D_in)
    assert D_out == D_in, "residual add requires output_dim == input_dim"
    assert D_out % 128 == 0, "output_dim must be a multiple of 128 (lane-aligned GLU split)"

    pack = max(_sublane_pack(x.dtype), _sublane_pack(w1.dtype))
    two_tc = _two_tensorcores()
    vmem_limit = _vmem_limit_bytes()

    # ---- batch tile ----
    if tm is None:
        tm = _pick_tm(B, pack, two_tc)
    tm = max(pack, (tm // pack) * pack)
    n_tiles = pl.cdiv(B, tm)        # last tile may overhang; OOB rows dropped on writeback
    n_sub = 2 if (tm >= 64 and tm % 64 == 0) else 1

    # ---- value/gate chunk size: keep per-step weight slabs pipelineable in VMEM
    w_isz = jnp.dtype(w1.dtype).itemsize
    if tn is None:
        tn = D_out
        slab = lambda t: 2 * (D_in * 2 * t + t * D_out) * w_isz  # dbl-buffered W1+W2 chunks
        while tn > 128 and tn % 256 == 0 and slab(tn) > vmem_limit // 3:
            tn //= 2
    assert D_out % tn == 0 and tn % 128 == 0
    n_chunks = D_out // tn

    # Interleave W1's value/gate halves per chunk so each grid step runs ONE
    # fused (D_in, 2*tn) MXU pass ([:tn] = value, [tn:] = gate).  For a stacked
    # production model this relayout should be precomputed once.
    if n_chunks > 1:
        w1c = jnp.concatenate(
            [w1[:, :D_out].reshape(D_in, n_chunks, tn),
             w1[:, D_out:].reshape(D_in, n_chunks, tn)], axis=-1,
        ).reshape(D_in, 2 * D_out)
        b1c = jnp.concatenate(
            [b1[:, :D_out].reshape(1, n_chunks, tn),
             b1[:, D_out:].reshape(1, n_chunks, tn)], axis=-1,
        ).reshape(1, 2 * D_out)
    else:
        w1c, b1c = w1, b1

    # Grid-invariant operands single-buffered; chunked weights keep a second
    # buffer only when there is a chunk axis to pipeline over.
    wbuf = 1 if n_chunks == 1 else 2

    weight_bytes = sum(int(p.size) * p.dtype.itemsize
                       for p in (gamma, beta, w1, b1, w2, b2))
    cost = pl.CostEstimate(
        flops=int(2 * B * D_in * 2 * D_out + 2 * B * D_out * D_out + 10 * B * D_in),
        transcendentals=int(B * D_out + B),          # sigmoid + rsqrt
        bytes_accessed=int(2 * B * D_in * x.dtype.itemsize + n_tiles * weight_bytes),
    )

    kernel = functools.partial(_glu_block_kernel, eps=eps, tn=tn, n_sub=n_sub,
                               precision=precision)

    return pl.pallas_call(
        kernel,
        out_shape=jax.ShapeDtypeStruct((B, D_in), x.dtype),
        grid_spec=pltpu.PrefetchScalarGridSpec(
            num_scalar_prefetch=0,
            grid=(n_tiles, n_chunks),
            in_specs=[
                _spec((tm, D_in), lambda i, j: (i, 0)),                    # x tile
                _spec((1, D_in), lambda i, j: (0, 0), buffers=1),          # gamma
                _spec((1, D_in), lambda i, j: (0, 0), buffers=1),          # beta
                _spec((D_in, 2 * tn), lambda i, j: (0, j), buffers=wbuf),  # W1 chunk
                _spec((1, 2 * tn), lambda i, j: (0, j), buffers=wbuf),     # b1 chunk
                _spec((tn, D_out), lambda i, j: (j, 0), buffers=wbuf),     # W2 chunk
                _spec((1, D_out), lambda i, j: (0, 0), buffers=1),         # b2
            ],
            out_specs=pl.BlockSpec((tm, D_in), lambda i, j: (i, 0)),
            scratch_shapes=[
                pltpu.VMEM((tm, D_in), w1.dtype),      # LayerNorm output
                pltpu.VMEM((tm, D_out), jnp.float32),  # linear2 accumulator
            ],
        ),
        compiler_params=pltpu.CompilerParams(
            dimension_semantics=("parallel", "arbitrary"),
            vmem_limit_bytes=vmem_limit,
        ),
        cost_estimate=cost,
        input_output_aliases=({0: 0} if donate_x else {}),
    )(x, gamma, beta, w1c, b1c, w2, b2)


# --------------------------------------------------------------------------- #
# params / reference / demo
# --------------------------------------------------------------------------- #
def init_params(key, input_dim, output_dim, dtype=jnp.float32):
    """Deterministic synthetic params with PyTorch-equivalent shapes, stored
    transposed ([in, out]).  W1 is the fused (in, 2*out) matrix: columns
    [:out] = GLU value half, columns [out:] = GLU gate half."""
    ks = jax.random.split(key, 4)
    s1 = 1.0 / jnp.sqrt(input_dim)
    s2 = 1.0 / jnp.sqrt(output_dim)
    gamma = jnp.ones((1, input_dim), dtype)
    beta = jnp.zeros((1, input_dim), dtype)
    w1 = (jax.random.uniform(ks[0], (input_dim, 2 * output_dim), dtype) * 2 - 1) * s1
    b1 = (jax.random.uniform(ks[1], (1, 2 * output_dim), dtype) * 2 - 1) * s1
    w2 = (jax.random.uniform(ks[2], (output_dim, output_dim), dtype) * 2 - 1) * s2
    b2 = (jax.random.uniform(ks[3], (1, output_dim), dtype) * 2 - 1) * s2
    return gamma, beta, w1, b1, w2, b2


def glu_block_ref(x, params, eps=1e-5, precision=None):
    gamma, beta, w1, b1, w2, b2 = params
    d_out = w2.shape[1]
    mean = jnp.mean(x, axis=-1, keepdims=True)
    var = jnp.mean((x - mean) ** 2, axis=-1, keepdims=True)
    xn = (x - mean) * jax.lax.rsqrt(var + eps) * gamma + beta
    y1 = jnp.dot(xn, w1, precision=precision) + b1
    a, g = y1[:, :d_out], y1[:, d_out:]
    h = a * jax.nn.sigmoid(g)
    y = jnp.dot(h, w2, precision=precision) + b2
    return y + x  # dropout = identity in eval mode


if __name__ == "__main__":
    key = jax.random.PRNGKey(0)
    kx, kp = jax.random.split(key)

    # residual add requires output_dim == input_dim; 128 = smallest lane-aligned dim
    batch, input_dim, output_dim = 192, 128, 128
    x = jax.random.normal(kx, (batch, input_dim), jnp.float32)
    params = init_params(kp, input_dim, output_dim, dtype=jnp.float32)

    # f32 demo uses HIGHEST matmul precision so kernel and reference agree tightly;
    # production callers should pass bf16 weights/activations (default precision).
    hp = jax.lax.Precision.HIGHEST
    out = jax.block_until_ready(glu_block(x, params, precision=hp))
    ref = glu_block_ref(x, params, precision=hp)

    assert out.shape == (batch, input_dim)
    assert jnp.allclose(out, ref, atol=1e-4, rtol=1e-4), "mismatch vs reference"

    print("KERNEL_OK")
</pallas_src>

<mosaic_0001>
module attributes {stable_mosaic.version = 11 : i64} {
  func.func @_glu_block_kernel(%arg0: i32, %arg1: i32, %arg2: memref<192x128xf32, #tpu.memory_space<vmem>>, %arg3: memref<1x128xf32, #tpu.memory_space<vmem>>, %arg4: memref<1x128xf32, #tpu.memory_space<vmem>>, %arg5: memref<128x256xf32, #tpu.memory_space<vmem>>, %arg6: memref<1x256xf32, #tpu.memory_space<vmem>>, %arg7: memref<128x128xf32, #tpu.memory_space<vmem>>, %arg8: memref<1x128xf32, #tpu.memory_space<vmem>>, %arg9: memref<192x128xf32, #tpu.memory_space<vmem>>, %arg10: memref<192x128xf32, #tpu.memory_space<vmem>>, %arg11: memref<192x128xf32, #tpu.memory_space<vmem>>) attributes {dimension_semantics = [#tpu.dimension_semantics<parallel>, #tpu.dimension_semantics<arbitrary>], iteration_bounds = array<i64: 1, 1>, scalar_prefetch = 0 : i64, scratch_operands = 2 : i64, tpu.core_type = #tpu.core_type<tc>, window_params = [{transform_indices = @transform_0, window_bounds = array<i64: 192, 128>}, {pipeline_mode = #tpu.pipeline_mode<synchronous>, transform_indices = @transform_1, window_bounds = array<i64: 1, 128>}, {pipeline_mode = #tpu.pipeline_mode<synchronous>, transform_indices = @transform_2, window_bounds = array<i64: 1, 128>}, {pipeline_mode = #tpu.pipeline_mode<synchronous>, transform_indices = @transform_3, window_bounds = array<i64: 128, 256>}, {pipeline_mode = #tpu.pipeline_mode<synchronous>, transform_indices = @transform_4, window_bounds = array<i64: 1, 256>}, {pipeline_mode = #tpu.pipeline_mode<synchronous>, transform_indices = @transform_5, window_bounds = array<i64: 128, 128>}, {pipeline_mode = #tpu.pipeline_mode<synchronous>, transform_indices = @transform_6, window_bounds = array<i64: 1, 128>}, {transform_indices = @transform_7, window_bounds = array<i64: 192, 128>}]} {
    %c0_i32 = arith.constant 0 : i32
    %0 = arith.cmpi eq, %arg1, %c0_i32 : i32
    %1 = arith.extui %0 : i1 to i32
    %c0_i32_0 = arith.constant 0 : i32
    %2 = arith.cmpi ne, %1, %c0_i32_0 : i32
    scf.if %2 {
      %c0_30 = arith.constant 0 : index
      %c0_31 = arith.constant 0 : index
      %44 = vector.load %arg2[%c0_30, %c0_31] : memref<192x128xf32, #tpu.memory_space<vmem>>, vector<192x128xf32>
      %cst_32 = arith.constant dense<0.000000e+00> : vector<192xf32>
      %45 = vector.multi_reduction <add>, %44, %cst_32 [1] : vector<192x128xf32> to vector<192xf32>
      %46 = vector.shape_cast %45 : vector<192xf32> to vector<192x1xf32>
      %cst_33 = arith.constant 1.280000e+02 : f32
      %47 = vector.broadcast %cst_33 : f32 to vector<192x1xf32>
      %48 = arith.divf %46, %47 : vector<192x1xf32>
      %49 = vector.broadcast %48 : vector<192x1xf32> to vector<192x128xf32>
      %50 = arith.subf %44, %49 : vector<192x128xf32>
      %51 = arith.mulf %50, %50 : vector<192x128xf32>
      %cst_34 = arith.constant dense<0.000000e+00> : vector<192xf32>
      %52 = vector.multi_reduction <add>, %51, %cst_34 [1] : vector<192x128xf32> to vector<192xf32>
      %53 = vector.shape_cast %52 : vector<192xf32> to vector<192x1xf32>
      %cst_35 = arith.constant 1.280000e+02 : f32
      %54 = vector.broadcast %cst_35 : f32 to vector<192x1xf32>
      %55 = arith.divf %53, %54 : vector<192x1xf32>
      %cst_36 = arith.constant 9.99999974E-6 : f32
      %56 = vector.broadcast %cst_36 : f32 to vector<192x1xf32>
      %57 = arith.addf %55, %56 : vector<192x1xf32>
      %58 = math.rsqrt %57 : vector<192x1xf32>
      %59 = vector.broadcast %58 : vector<192x1xf32> to vector<192x128xf32>
      %60 = arith.mulf %50, %59 : vector<192x128xf32>
      %c0_37 = arith.constant 0 : index
      %c0_38 = arith.constant 0 : index
      %61 = vector.load %arg3[%c0_37, %c0_38] : memref<1x128xf32, #tpu.memory_space<vmem>>, vector<1x128xf32>
      %62 = vector.broadcast %61 : vector<1x128xf32> to vector<192x128xf32>
      %63 = arith.mulf %60, %62 : vector<192x128xf32>
      %c0_39 = arith.constant 0 : index
      %c0_40 = arith.constant 0 : index
      %64 = vector.load %arg4[%c0_39, %c0_40] : memref<1x128xf32, #tpu.memory_space<vmem>>, vector<1x128xf32>
      %65 = vector.broadcast %64 : vector<1x128xf32> to vector<192x128xf32>
      %66 = arith.addf %63, %65 : vector<192x128xf32>
      %c0_41 = arith.constant 0 : index
      %c0_42 = arith.constant 0 : index
      %67 = vector.load %arg10[%c0_41, %c0_42] : memref<192x128xf32, #tpu.memory_space<vmem>>, vector<192x128xf32>
      tpu.vector_store %arg10[%c0_41, %c0_42], %66 {strides = array<i32>} : memref<192x128xf32, #tpu.memory_space<vmem>>, vector<192x128xf32>,
      %cst_43 = arith.constant 0.000000e+00 : f32
      %68 = vector.broadcast %cst_43 : f32 to vector<192x128xf32>
      %c0_44 = arith.constant 0 : index
      %c0_45 = arith.constant 0 : index
      %69 = vector.load %arg11[%c0_44, %c0_45] : memref<192x128xf32, #tpu.memory_space<vmem>>, vector<192x128xf32>
      tpu.vector_store %arg11[%c0_44, %c0_45], %68 {strides = array<i32>} : memref<192x128xf32, #tpu.memory_space<vmem>>, vector<192x128xf32>,
    } else {
    }
    %c0 = arith.constant 0 : index
    %c0_1 = arith.constant 0 : index
    %3 = vector.load %arg10[%c0, %c0_1] : memref<192x128xf32, #tpu.memory_space<vmem>>, vector<96x128xf32>
    %c0_2 = arith.constant 0 : index
    %c0_3 = arith.constant 0 : index
    %4 = vector.load %arg5[%c0_2, %c0_3] : memref<128x256xf32, #tpu.memory_space<vmem>>, vector<128x256xf32>
    %cst = arith.constant dense<0.000000e+00> : vector<96x256xf32>
    %5 = tpu.matmul %3, %4, %cst {dimension_numbers = #tpu.dot_dimension_numbers<[1], [0], [0], [1], [0, 0, 1, 1], [], []>, precision = #tpu.contract_precision<fp32>} : vector<96x128xf32>, vector<128x256xf32>, vector<96x256xf32> -> vector<96x256xf32>
    %c0_4 = arith.constant 0 : index
    %c0_5 = arith.constant 0 : index
    %6 = vector.load %arg6[%c0_4, %c0_5] : memref<1x256xf32, #tpu.memory_space<vmem>>, vector<1x256xf32>
    %7 = vector.broadcast %6 : vector<1x256xf32> to vector<96x256xf32>
    %8 = arith.addf %5, %7 : vector<96x256xf32>
    %9 = vector.extract_strided_slice %8 {offsets = [0, 0], sizes = [96, 128], strides = [1, 1]} : vector<96x256xf32> to vector<96x128xf32>
    %10 = vector.extract_strided_slice %8 {offsets = [0, 128], sizes = [96, 128], strides = [1, 1]} : vector<96x256xf32> to vector<96x128xf32>
    %11 = arith.negf %10 : vector<96x128xf32>
    %12 = math.exp %11 : vector<96x128xf32>
    %cst_6 = arith.constant 1.000000e+00 : f32
    %13 = vector.broadcast %cst_6 : f32 to vector<96x128xf32>
    %14 = arith.addf %13, %12 : vector<96x128xf32>
    %15 = arith.divf %13, %14 : vector<96x128xf32>
    %16 = arith.mulf %9, %15 : vector<96x128xf32>
    %c0_7 = arith.constant 0 : index
    %c0_8 = arith.constant 0 : index
    %17 = vector.load %arg11[%c0_7, %c0_8] : memref<192x128xf32, #tpu.memory_space<vmem>>, vector<96x128xf32>
    %c0_9 = arith.constant 0 : index
    %c0_10 = arith.constant 0 : index
    %18 = vector.load %arg7[%c0_9, %c0_10] : memref<128x128xf32, #tpu.memory_space<vmem>>, vector<128x128xf32>
    %cst_11 = arith.constant dense<0.000000e+00> : vector<96x128xf32>
    %19 = tpu.matmul %16, %18, %cst_11 {dimension_numbers = #tpu.dot_dimension_numbers<[1], [0], [0], [1], [0, 0, 1, 1], [], []>, precision = #tpu.contract_precision<fp32>} : vector<96x128xf32>, vector<128x128xf32>, vector<96x128xf32> -> vector<96x128xf32>
    %20 = arith.addf %17, %19 : vector<96x128xf32>
    %c0_12 = arith.constant 0 : index
    %c0_13 = arith.constant 0 : index
    %21 = vector.load %arg11[%c0_12, %c0_13] : memref<192x128xf32, #tpu.memory_space<vmem>>, vector<96x128xf32>
    tpu.vector_store %arg11[%c0_12, %c0_13], %20 {strides = array<i32>} : memref<192x128xf32, #tpu.memory_space<vmem>>, vector<96x128xf32>,
    %c96 = arith.constant 96 : index
    %c0_14 = arith.constant 0 : index
    %22 = vector.load %arg10[%c96, %c0_14] : memref<192x128xf32, #tpu.memory_space<vmem>>, vector<96x128xf32>
    %c0_15 = arith.constant 0 : index
    %c0_16 = arith.constant 0 : index
    %23 = vector.load %arg5[%c0_15, %c0_16] : memref<128x256xf32, #tpu.memory_space<vmem>>, vector<128x256xf32>
    %cst_17 = arith.constant dense<0.000000e+00> : vector<96x256xf32>
    %24 = tpu.matmul %22, %23, %cst_17 {dimension_numbers = #tpu.dot_dimension_numbers<[1], [0], [0], [1], [0, 0, 1, 1], [], []>, precision = #tpu.contract_precision<fp32>} : vector<96x128xf32>, vector<128x256xf32>, vector<96x256xf32> -> vector<96x256xf32>
    %c0_18 = arith.constant 0 : index
    %c0_19 = arith.constant 0 : index
    %25 = vector.load %arg6[%c0_18, %c0_19] : memref<1x256xf32, #tpu.memory_space<vmem>>, vector<1x256xf32>
    %26 = vector.broadcast %25 : vector<1x256xf32> to vector<96x256xf32>
    %27 = arith.addf %24, %26 : vector<96x256xf32>
    %28 = vector.extract_strided_slice %27 {offsets = [0, 0], sizes = [96, 128], strides = [1, 1]} : vector<96x256xf32> to vector<96x128xf32>
    %29 = vector.extract_strided_slice %27 {offsets = [0, 128], sizes = [96, 128], strides = [1, 1]} : vector<96x256xf32> to vector<96x128xf32>
    %30 = arith.negf %29 : vector<96x128xf32>
    %31 = math.exp %30 : vector<96x128xf32>
    %cst_20 = arith.constant 1.000000e+00 : f32
    %32 = vector.broadcast %cst_20 : f32 to vector<96x128xf32>
    %33 = arith.addf %32, %31 : vector<96x128xf32>
    %34 = arith.divf %32, %33 : vector<96x128xf32>
    %35 = arith.mulf %28, %34 : vector<96x128xf32>
    %c96_21 = arith.constant 96 : index
    %c0_22 = arith.constant 0 : index
    %36 = vector.load %arg11[%c96_21, %c0_22] : memref<192x128xf32, #tpu.memory_space<vmem>>, vector<96x128xf32>
    %c0_23 = arith.constant 0 : index
    %c0_24 = arith.constant 0 : index
    %37 = vector.load %arg7[%c0_23, %c0_24] : memref<128x128xf32, #tpu.memory_space<vmem>>, vector<128x128xf32>
    %cst_25 = arith.constant dense<0.000000e+00> : vector<96x128xf32>
    %38 = tpu.matmul %35, %37, %cst_25 {dimension_numbers = #tpu.dot_dimension_numbers<[1], [0], [0], [1], [0, 0, 1, 1], [], []>, precision = #tpu.contract_precision<fp32>} : vector<96x128xf32>, vector<128x128xf32>, vector<96x128xf32> -> vector<96x128xf32>
    %39 = arith.addf %36, %38 : vector<96x128xf32>
    %c96_26 = arith.constant 96 : index
    %c0_27 = arith.constant 0 : index
    %40 = vector.load %arg11[%c96_26, %c0_27] : memref<192x128xf32, #tpu.memory_space<vmem>>, vector<96x128xf32>
    tpu.vector_store %arg11[%c96_26, %c0_27], %39 {strides = array<i32>} : memref<192x128xf32, #tpu.memory_space<vmem>>, vector<96x128xf32>,
    %c0_i32_28 = arith.constant 0 : i32
    %41 = arith.cmpi eq, %arg1, %c0_i32_28 : i32
    %42 = arith.extui %41 : i1 to i32
    %c0_i32_29 = arith.constant 0 : i32
    %43 = arith.cmpi ne, %42, %c0_i32_29 : i32
    scf.if %43 {
      %c0_30 = arith.constant 0 : index
      %c0_31 = arith.constant 0 : index
      %44 = vector.load %arg11[%c0_30, %c0_31] : memref<192x128xf32, #tpu.memory_space<vmem>>, vector<192x128xf32>
      %c0_32 = arith.constant 0 : index
      %c0_33 = arith.constant 0 : index
      %45 = vector.load %arg8[%c0_32, %c0_33] : memref<1x128xf32, #tpu.memory_space<vmem>>, vector<1x128xf32>
      %46 = vector.broadcast %45 : vector<1x128xf32> to vector<192x128xf32>
      %47 = arith.addf %44, %46 : vector<192x128xf32>
      %c0_34 = arith.constant 0 : index
      %c0_35 = arith.constant 0 : index
      %48 = vector.load %arg2[%c0_34, %c0_35] : memref<192x128xf32, #tpu.memory_space<vmem>>, vector<192x128xf32>
      %49 = arith.addf %47, %48 : vector<192x128xf32>
      %c0_36 = arith.constant 0 : index
      %c0_37 = arith.constant 0 : index
      %50 = vector.load %arg9[%c0_36, %c0_37] : memref<192x128xf32, #tpu.memory_space<vmem>>, vector<192x128xf32>
      tpu.vector_store %arg9[%c0_36, %c0_37], %49 {strides = array<i32>} : memref<192x128xf32, #tpu.memory_space<vmem>>, vector<192x128xf32>,
    } else {
    }
    return
  }
  func.func @transform_0(%arg0: i32, %arg1: i32) -> (i32, i32) {
    %c0_i32 = arith.constant 0 : i32
    %c0_i32_0 = arith.constant 0 : i32
    return %arg0, %c0_i32 : i32, i32
  }
  func.func @transform_1(%arg0: i32, %arg1: i32) -> (i32, i32) {
    %c0_i32 = arith.constant 0 : i32
    %c0_i32_0 = arith.constant 0 : i32
    %c0_i32_1 = arith.constant 0 : i32
    return %c0_i32, %c0_i32_0 : i32, i32
  }
  func.func @transform_2(%arg0: i32, %arg1: i32) -> (i32, i32) {
    %c0_i32 = arith.constant 0 : i32
    %c0_i32_0 = arith.constant 0 : i32
    %c0_i32_1 = arith.constant 0 : i32
    return %c0_i32, %c0_i32_0 : i32, i32
  }
  func.func @transform_3(%arg0: i32, %arg1: i32) -> (i32, i32) {
    %c0_i32 = arith.constant 0 : i32
    %c0_i32_0 = arith.constant 0 : i32
    return %c0_i32, %arg1 : i32, i32
  }
  func.func @transform_4(%arg0: i32, %arg1: i32) -> (i32, i32) {
    %c0_i32 = arith.constant 0 : i32
    %c0_i32_0 = arith.constant 0 : i32
    return %c0_i32, %arg1 : i32, i32
  }
  func.func @transform_5(%arg0: i32, %arg1: i32) -> (i32, i32) {
    %c0_i32 = arith.constant 0 : i32
    %c0_i32_0 = arith.constant 0 : i32
    return %arg1, %c0_i32 : i32, i32
  }
  func.func @transform_6(%arg0: i32, %arg1: i32) -> (i32, i32) {
    %c0_i32 = arith.constant 0 : i32
    %c0_i32_0 = arith.constant 0 : i32
    %c0_i32_1 = arith.constant 0 : i32
    return %c0_i32, %c0_i32_0 : i32, i32
  }
  func.func @transform_7(%arg0: i32, %arg1: i32) -> (i32, i32) {
    %c0_i32 = arith.constant 0 : i32
    %c0_i32_0 = arith.constant 0 : i32
    return %arg0, %c0_i32 : i32, i32
  }
}

</mosaic_0001>

<llo_original>
// kernel: tpu_custom_call.1
$region0: #{tpu_custom_call.1}
  #allocation0 [shape = 'u32[]', space=smem, size = 0x4, offset = 0x4, fixed_abs, tag = 'smem constant byte address 0x4 - core index']
  #allocation1 [shape = 'u32[144,128]{1,0:T(1,128)}', space=vmem, size = 0x12000, scoped, tag = 'internal scratch']
  #allocation2 [shape = 'f32[192,128]{1,0:T(8,128)}', space=vmem, size = 0x18000, scoped, tag = 'scratch operand']
  #allocation3 [shape = 'f32[192,128]{1,0:T(8,128)}', space=vmem, size = 0x18000, scoped, tag = 'scratch operand']
  %s0 = inlined_call_operand.hbm [shape: f32[192,128], index: 0, kind: input, shape index: {}]
  %s1 = inlined_call_operand.vmem [shape: f32[1,128], index: 1, kind: input, shape index: {}]
  %s2 = inlined_call_operand.vmem [shape: f32[1,128], index: 2, kind: input, shape index: {}]
  %s3 = inlined_call_operand.hbm [shape: f32[128,256], index: 3, kind: input, shape index: {}]
  %s4 = inlined_call_operand.vmem [shape: f32[1,256], index: 4, kind: input, shape index: {}]
  %s5 = inlined_call_operand.hbm [shape: f32[128,128], index: 5, kind: input, shape index: {}]
  %s6 = inlined_call_operand.vmem [shape: f32[1,128], index: 6, kind: input, shape index: {}]
  %s7 = inlined_call_operand.hbm [shape: f32[192,128], index: 7, kind: output, shape index: {}]
  %s8 = sld [smem:[#allocation0]]
  $region58: #{tpu_custom_call.1} parent=0
    _
  %s10 = ssub.s32 1, %s8
  %s11 = scalar_select 0, %s10, %s8
  $region1: #{tpu_custom_call.1} parent=0
    #allocation4 [shape = 'u8[98304]{0}', space=vmem, size = 0x18000, scoped, tag = 'input window, operand 0, single buffered']
    #allocation5 [shape = 's32[1]{0}', space=sflag, size = 0x4, scoped, tag = 'scoped memory for tpu_custom_call.1']
    #allocation6 [shape = 's32[1]{0}', space=sflag, size = 0x4, scoped, tag = 'scoped memory for tpu_custom_call.1']
    #allocation7 [shape = 'u8[131072]{0}', space=vmem, size = 0x20000, scoped, tag = 'input window, operand 3, single buffered']
    #allocation8 [shape = 's32[1]{0}', space=sflag, size = 0x4, scoped, tag = 'scoped memory for tpu_custom_call.1']
    #allocation9 [shape = 'u8[65536]{0}', space=vmem, size = 0x10000, scoped, tag = 'input window, operand 5, single buffered']
    #allocation10 [shape = 'u8[98304]{0}', space=vmem, size = 0x18000, scoped, tag = 'output window, operand 0, single buffered']
    %12 = vsyncpa [#allocation5], 0
    %13 = vsyncpa [#allocation8], 0
    %14 = vsyncpa [#allocation6], 0
    // Predicated region
    $region2: #{tpu_custom_call.1} parent=1 // pred_check
      _
    $region3: #{tpu_custom_call.1} parent=1 // pred_check_branch
      %16 = sbr.rel (0) target = $region5
    $region4: #{tpu_custom_call.1} parent=1 // pred_region
      %s18 = ssub.s32 3072, 3072
      %19 = vsyncadd [#allocation5], %s18
      %s20 = sshll.u32 [#allocation4], 4
      %s21 = int_to_ptr.vmem [resolvable:$true] %s20
      %26 = dma.hbm_to_vmem [thread:$0]  %s0, 3072, %s21, [#allocation5], 128, 128, 8
    $region5: #{tpu_custom_call.1} parent=1 // pred_fallthru
      _
    // Predicated region
    $region6: #{tpu_custom_call.1} parent=1 // pred_check
      _
    $region7: #{tpu_custom_call.1} parent=1 // pred_check_branch
      %28 = sbr.rel (0) target = $region9
    $region8: #{tpu_custom_call.1} parent=1 // pred_region
      _
    $region9: #{tpu_custom_call.1} parent=1 // pred_fallthru
      _
    // Predicated region
    $region10: #{tpu_custom_call.1} parent=1 // pred_check
      _
    $region11: #{tpu_custom_call.1} parent=1 // pred_check_branch
      %30 = sbr.rel (0) target = $region13
    $region12: #{tpu_custom_call.1} parent=1 // pred_region
      _
    $region13: #{tpu_custom_call.1} parent=1 // pred_fallthru
      _
    // Predicated region
    $region14: #{tpu_custom_call.1} parent=1 // pred_check
      _
    $region15: #{tpu_custom_call.1} parent=1 // pred_check_branch
      %32 = sbr.rel (0) target = $region17
    $region16: #{tpu_custom_call.1} parent=1 // pred_region
      %s34 = ssub.s32 4096, 4096
      %35 = vsyncadd [#allocation8], %s34
      %s36 = sshll.u32 [#allocation7], 4
      %s37 = int_to_ptr.vmem [resolvable:$true] %s36
      %42 = dma.hbm_to_vmem [thread:$0]  %s3, 4096, %s37, [#allocation8], 256, 256, 16
    $region17: #{tpu_custom_call.1} parent=1 // pred_fallthru
      _
    // Predicated region
    $region18: #{tpu_custom_call.1} parent=1 // pred_check
      _
    $region19: #{tpu_custom_call.1} parent=1 // pred_check_branch
      %44 = sbr.rel (0) target = $region21
    $region20: #{tpu_custom_call.1} parent=1 // pred_region
      _
    $region21: #{tpu_custom_call.1} parent=1 // pred_fallthru
      _
    // Predicated region
    $region22: #{tpu_custom_call.1} parent=1 // pred_check
      _
    $region23: #{tpu_custom_call.1} parent=1 // pred_check_branch
      %46 = sbr.rel (0) target = $region25
    $region24: #{tpu_custom_call.1} parent=1 // pred_region
      %s48 = ssub.s32 2048, 2048
      %49 = vsyncadd [#allocation8], %s48
      %s50 = sshll.u32 [#allocation9], 4
      %s51 = int_to_ptr.vmem [resolvable:$true] %s50
      %56 = dma.hbm_to_vmem [thread:$0]  %s5, 2048, %s51, [#allocation8], 128, 128, 8
    $region25: #{tpu_custom_call.1} parent=1 // pred_fallthru
      _
    // Predicated region
    $region26: #{tpu_custom_call.1} parent=1 // pred_check
      _
    $region27: #{tpu_custom_call.1} parent=1 // pred_check_branch
      %58 = sbr.rel (0) target = $region29
    $region28: #{tpu_custom_call.1} parent=1 // pred_region
      _
    $region29: #{tpu_custom_call.1} parent=1 // pred_fallthru
      _
    // Predicated region
    $region30: #{tpu_custom_call.1} parent=1 // pred_check
      _
    $region31: #{tpu_custom_call.1} parent=1 // pred_check_branch
      %60 = sbr.rel (0) target = $region33
    $region32: #{tpu_custom_call.1} parent=1 // pred_region
      %61 = dma.done [#allocation5], 3072
    $region33: #{tpu_custom_call.1} parent=1 // pred_fallthru
      _
    // Predicated region
    $region34: #{tpu_custom_call.1} parent=1 // pred_check
      _
    $region35: #{tpu_custom_call.1} parent=1 // pred_check_branch
      %63 = sbr.rel (0) target = $region37
    $region36: #{tpu_custom_call.1} parent=1 // pred_region
      %64 = dma.done [#allocation8], 4096
    $region37: #{tpu_custom_call.1} parent=1 // pred_fallthru
      _
    // Predicated region
    $region38: #{tpu_custom_call.1} parent=1 // pred_check
      _
    $region39: #{tpu_custom_call.1} parent=1 // pred_check_branch
      %66 = sbr.rel (0) target = $region41
    $region40: #{tpu_custom_call.1} parent=1 // pred_region
      %67 = dma.done [#allocation8], 2048
    $region41: #{tpu_custom_call.1} parent=1 // pred_fallthru
      _
    %p68 = scmp.eq.s32.totalorder 0, 0
    // Predicated region
    $region42: #{tpu_custom_call.1} parent=1 // pred_check
      %p69 = pneg %p68
    $region43: #{tpu_custom_call.1} parent=1 // pred_check_branch
      %71 = sbr.rel (%p69) target = $region45
    $region44: #{tpu_custom_call.1} parent=1 // pred_region
      %v72 = vld [vmem:[#allocation4] sm:$0xff]
      %v73 = vld [vmem:[#allocation4 + $0x8] sm:$0xff]
      %v74 = vld [vmem:[#allocation4 + $0x10] sm:$0xff]
      %v75 = vld [vmem:[#allocation4 + $0x18] sm:$0xff]
      %v76 = vld [vmem:[#allocation4 + $0x20] sm:$0xff]
      %v77 = vld [vmem:[#allocation4 + $0x28] sm:$0xff]
      %v78 = vld [vmem:[#allocation4 + $0x30] sm:$0xff]
      %v79 = vld [vmem:[#allocation4 + $0x38] sm:$0xff]
      %v80 = vld [vmem:[#allocation4 + $0x40] sm:$0xff]
      %v81 = vld [vmem:[#allocation4 + $0x48] sm:$0xff]
      %v82 = vld [vmem:[#allocation4 + $0x50] sm:$0xff]
      %v83 = vld [vmem:[#allocation4 + $0x58] sm:$0xff]
      %v84 = vld [vmem:[#allocation4 + $0x60] sm:$0xff]
      %v85 = vld [vmem:[#allocation4 + $0x68] sm:$0xff]
      %v86 = vld [vmem:[#allocation4 + $0x70] sm:$0xff]
      %v87 = vld [vmem:[#allocation4 + $0x78] sm:$0xff]
      %v88 = vld [vmem:[#allocation4 + $0x80] sm:$0xff]
      %v89 = vld [vmem:[#allocation4 + $0x88] sm:$0xff]
      %v90 = vld [vmem:[#allocation4 + $0x90] sm:$0xff]
      %v91 = vld [vmem:[#allocation4 + $0x98] sm:$0xff]
      %v92 = vld [vmem:[#allocation4 + $0xa0] sm:$0xff]
      %v93 = vld [vmem:[#allocation4 + $0xa8] sm:$0xff]
      %v94 = vld [vmem:[#allocation4 + $0xb0] sm:$0xff]
      %v95 = vld [vmem:[#allocation4 + $0xb8] sm:$0xff]
      %96 = vadd.xlane.f32.xlu0 %v72
      %v97 = vpop.xlane.xlu0 %96
      %98 = vadd.xlane.f32.xlu0 %v73
      %v99 = vpop.xlane.xlu0 %98
      %100 = vadd.xlane.f32.xlu0 %v74
      %v101 = vpop.xlane.xlu0 %100
      %102 = vadd.xlane.f32.xlu0 %v75
      %v103 = vpop.xlane.xlu0 %102
      %104 = vadd.xlane.f32.xlu0 %v76
      %v105 = vpop.xlane.xlu0 %104
      %106 = vadd.xlane.f32.xlu0 %v77
      %v107 = vpop.xlane.xlu0 %106
      %108 = vadd.xlane.f32.xlu0 %v78
      %v109 = vpop.xlane.xlu0 %108
      %110 = vadd.xlane.f32.xlu0 %v79
      %v111 = vpop.xlane.xlu0 %110
      %112 = vadd.xlane.f32.xlu0 %v80
      %v113 = vpop.xlane.xlu0 %112
      %114 = vadd.xlane.f32.xlu0 %v81
      %v115 = vpop.xlane.xlu0 %114
      %116 = vadd.xlane.f32.xlu0 %v82
      %v117 = vpop.xlane.xlu0 %116
      %118 = vadd.xlane.f32.xlu0 %v83
      %v119 = vpop.xlane.xlu0 %118
      %120 = vadd.xlane.f32.xlu0 %v84
      %v121 = vpop.xlane.xlu0 %120
      %122 = vadd.xlane.f32.xlu0 %v85
      %v123 = vpop.xlane.xlu0 %122
      %124 = vadd.xlane.f32.xlu0 %v86
      %v125 = vpop.xlane.xlu0 %124
      %126 = vadd.xlane.f32.xlu0 %v87
      %v127 = vpop.xlane.xlu0 %126
      %128 = vadd.xlane.f32.xlu0 %v88
      %v129 = vpop.xlane.xlu0 %128
      %130 = vadd.xlane.f32.xlu0 %v89
      %v131 = vpop.xlane.xlu0 %130
      %132 = vadd.xlane.f32.xlu0 %v90
      %v133 = vpop.xlane.xlu0 %132
      %134 = vadd.xlane.f32.xlu0 %v91
      %v135 = vpop.xlane.xlu0 %134
      %136 = vadd.xlane.f32.xlu0 %v92
      %v137 = vpop.xlane.xlu0 %136
      %138 = vadd.xlane.f32.xlu0 %v93
      %v139 = vpop.xlane.xlu0 %138
      %140 = vadd.xlane.f32.xlu0 %v94
      %v141 = vpop.xlane.xlu0 %140
      %142 = vadd.xlane.f32.xlu0 %v95
      %v143 = vpop.xlane.xlu0 %142
      %v144 = vrcp.pop 128.0
      %v145 = vmul.f32 %v97, %v144
      %v146 = vmul.f32 %v99, %v144
      %v147 = vmul.f32 %v101, %v144
      %v148 = vmul.f32 %v103, %v144
      %v149 = vmul.f32 %v105, %v144
      %v150 = vmul.f32 %v107, %v144
      %v151 = vmul.f32 %v109, %v144
      %v152 = vmul.f32 %v111, %v144
      %v153 = vmul.f32 %v113, %v144
      %v154 = vmul.f32 %v115, %v144
      %v155 = vmul.f32 %v117, %v144
      %v156 = vmul.f32 %v119, %v144
      %v157 = vmul.f32 %v121, %v144
      %v158 = vmul.f32 %v123, %v144
      %v159 = vmul.f32 %v125, %v144
      %v160 = vmul.f32 %v127, %v144
      %v161 = vmul.f32 %v129, %v144
      %v162 = vmul.f32 %v131, %v144
      %v163 = vmul.f32 %v133, %v144
      %v164 = vmul.f32 %v135, %v144
      %v165 = vmul.f32 %v137, %v144
      %v166 = vmul.f32 %v139, %v144
      %v167 = vmul.f32 %v141, %v144
      %v168 = vmul.f32 %v143, %v144
      %v169 = vsub.f32 %v72, %v145
      %v170 = vsub.f32 %v73, %v146
      %v171 = vsub.f32 %v74, %v147
      %v172 = vsub.f32 %v75, %v148
      %v173 = vsub.f32 %v76, %v149
      %v174 = vsub.f32 %v77, %v150
      %v175 = vsub.f32 %v78, %v151
      %v176 = vsub.f32 %v79, %v152
      %v177 = vsub.f32 %v80, %v153
      %v178 = vsub.f32 %v81, %v154
      %v179 = vsub.f32 %v82, %v155
      %v180 = vsub.f32 %v83, %v156
      %v181 = vsub.f32 %v84, %v157
      %v182 = vsub.f32 %v85, %v158
      %v183 = vsub.f32 %v86, %v159
      %v184 = vsub.f32 %v87, %v160
      %v185 = vsub.f32 %v88, %v161
      %v186 = vsub.f32 %v89, %v162
      %v187 = vsub.f32 %v90, %v163
      %v188 = vsub.f32 %v91, %v164
      %v189 = vsub.f32 %v92, %v165
      %v190 = vsub.f32 %v93, %v166
      %v191 = vsub.f32 %v94, %v167
      %v192 = vsub.f32 %v95, %v168
      %v193 = vmul.f32 %v169, %v169
      %v194 = vmul.f32 %v170, %v170
      %v195 = vmul.f32 %v171, %v171
      %v196 = vmul.f32 %v172, %v172
      %v197 = vmul.f32 %v173, %v173
      %v198 = vmul.f32 %v174, %v174
      %v199 = vmul.f32 %v175, %v175
      %v200 = vmul.f32 %v176, %v176
      %v201 = vmul.f32 %v177, %v177
      %v202 = vmul.f32 %v178, %v178
      %v203 = vmul.f32 %v179, %v179
      %v204 = vmul.f32 %v180, %v180
      %v205 = vmul.f32 %v181, %v181
      %v206 = vmul.f32 %v182, %v182
      %v207 = vmul.f32 %v183, %v183
      %v208 = vmul.f32 %v184, %v184
      %v209 = vmul.f32 %v185, %v185
      %v210 = vmul.f32 %v186, %v186
      %v211 = vmul.f32 %v187, %v187
      %v212 = vmul.f32 %v188, %v188
      %v213 = vmul.f32 %v189, %v189
      %v214 = vmul.f32 %v190, %v190
      %v215 = vmul.f32 %v191, %v191
      %v216 = vmul.f32 %v192, %v192
      %217 = vadd.xlane.f32.xlu0 %v193
      %v218 = vpop.xlane.xlu0 %217
      %219 = vadd.xlane.f32.xlu0 %v194
      %v220 = vpop.xlane.xlu0 %219
      %221 = vadd.xlane.f32.xlu0 %v195
      %v222 = vpop.xlane.xlu0 %221
      %223 = vadd.xlane.f32.xlu0 %v196
      %v224 = vpop.xlane.xlu0 %223
      %225 = vadd.xlane.f32.xlu0 %v197
      %v226 = vpop.xlane.xlu0 %225
      %227 = vadd.xlane.f32.xlu0 %v198
      %v228 = vpop.xlane.xlu0 %227
      %229 = vadd.xlane.f32.xlu0 %v199
      %v230 = vpop.xlane.xlu0 %229
      %231 = vadd.xlane.f32.xlu0 %v200
      %v232 = vpop.xlane.xlu0 %231
      %233 = vadd.xlane.f32.xlu0 %v201
      %v234 = vpop.xlane.xlu0 %233
      %235 = vadd.xlane.f32.xlu0 %v202
      %v236 = vpop.xlane.xlu0 %235
      %237 = vadd.xlane.f32.xlu0 %v203
      %v238 = vpop.xlane.xlu0 %237
      %239 = vadd.xlane.f32.xlu0 %v204
      %v240 = vpop.xlane.xlu0 %239
      %241 = vadd.xlane.f32.xlu0 %v205
      %v242 = vpop.xlane.xlu0 %241
      %243 = vadd.xlane.f32.xlu0 %v206
      %v244 = vpop.xlane.xlu0 %243
      %245 = vadd.xlane.f32.xlu0 %v207
      %v246 = vpop.xlane.xlu0 %245
      %247 = vadd.xlane.f32.xlu0 %v208
      %v248 = vpop.xlane.xlu0 %247
      %249 = vadd.xlane.f32.xlu0 %v209
      %v250 = vpop.xlane.xlu0 %249
      %251 = vadd.xlane.f32.xlu0 %v210
      %v252 = vpop.xlane.xlu0 %251
      %253 = vadd.xlane.f32.xlu0 %v211
      %v254 = vpop.xlane.xlu0 %253
      %255 = vadd.xlane.f32.xlu0 %v212
      %v256 = vpop.xlane.xlu0 %255
      %257 = vadd.xlane.f32.xlu0 %v213
      %v258 = vpop.xlane.xlu0 %257
      %259 = vadd.xlane.f32.xlu0 %v214
      %v260 = vpop.xlane.xlu0 %259
      %261 = vadd.xlane.f32.xlu0 %v215
      %v262 = vpop.xlane.xlu0 %261
      %263 = vadd.xlane.f32.xlu0 %v216
      %v264 = vpop.xlane.xlu0 %263
      %v265 = vmul.f32 %v218, %v144
      %v266 = vmul.f32 %v220, %v144
      %v267 = vmul.f32 %v222, %v144
      %v268 = vmul.f32 %v224, %v144
      %v269 = vmul.f32 %v226, %v144
      %v270 = vmul.f32 %v228, %v144
      %v271 = vmul.f32 %v230, %v144
      %v272 = vmul.f32 %v232, %v144
      %v273 = vmul.f32 %v234, %v144
      %v274 = vmul.f32 %v236, %v144
      %v275 = vmul.f32 %v238, %v144
      %v276 = vmul.f32 %v240, %v144
      %v277 = vmul.f32 %v242, %v144
      %v278 = vmul.f32 %v244, %v144
      %v279 = vmul.f32 %v246, %v144
      %v280 = vmul.f32 %v248, %v144
      %v281 = vmul.f32 %v250, %v144
      %v282 = vmul.f32 %v252, %v144
      %v283 = vmul.f32 %v254, %v144
      %v284 = vmul.f32 %v256, %v144
      %v285 = vmul.f32 %v258, %v144
      %v286 = vmul.f32 %v260, %v144
      %v287 = vmul.f32 %v262, %v144
      %v288 = vmul.f32 %v264, %v144
      %v289 = vadd.f32 %v265, 1e-05
      %v290 = vadd.f32 %v266, 1e-05
      %v291 = vadd.f32 %v267, 1e-05
      %v292 = vadd.f32 %v268, 1e-05
      %v293 = vadd.f32 %v269, 1e-05
      %v294 = vadd.f32 %v270, 1e-05
      %v295 = vadd.f32 %v271, 1e-05
      %v296 = vadd.f32 %v272, 1e-05
      %v297 = vadd.f32 %v273, 1e-05
      %v298 = vadd.f32 %v274, 1e-05
      %v299 = vadd.f32 %v275, 1e-05
      %v300 = vadd.f32 %v276, 1e-05
      %v301 = vadd.f32 %v277, 1e-05
      %v302 = vadd.f32 %v278, 1e-05
      %v303 = vadd.f32 %v279, 1e-05
      %v304 = vadd.f32 %v280, 1e-05
      %v305 = vadd.f32 %v281, 1e-05
      %v306 = vadd.f32 %v282, 1e-05
      %v307 = vadd.f32 %v283, 1e-05
      %v308 = vadd.f32 %v284, 1e-05
      %v309 = vadd.f32 %v285, 1e-05
      %v310 = vadd.f32 %v286, 1e-05
      %v311 = vadd.f32 %v287, 1e-05
      %v312 = vadd.f32 %v288, 1e-05
      %v313 = vrsqrt.pop %v289
      %v314 = vrsqrt.pop %v290
      %v315 = vrsqrt.pop %v291
      %v316 = vrsqrt.pop %v292
      %v317 = vrsqrt.pop %v293
      %v318 = vrsqrt.pop %v294
      %v319 = vrsqrt.pop %v295
      %v320 = vrsqrt.pop %v296
      %v321 = vrsqrt.pop %v297
      %v322 = vrsqrt.pop %v298
      %v323 = vrsqrt.pop %v299
      %v324 = vrsqrt.pop %v300
      %v325 = vrsqrt.pop %v301
      %v326 = vrsqrt.pop %v302
      %v327 = vrsqrt.pop %v303
      %v328 = vrsqrt.pop %v304
      %v329 = vrsqrt.pop %v305
      %v330 = vrsqrt.pop %v306
      %v331 = vrsqrt.pop %v307
      %v332 = vrsqrt.pop %v308
      %v333 = vrsqrt.pop %v309
      %v334 = vrsqrt.pop %v310
      %v335 = vrsqrt.pop %v311
      %v336 = vrsqrt.pop %v312
      %v337 = vmul.f32 %v169, %v313
      %v338 = vmul.f32 %v170, %v314
      %v339 = vmul.f32 %v171, %v315
      %v340 = vmul.f32 %v172, %v316
      %v341 = vmul.f32 %v173, %v317
      %v342 = vmul.f32 %v174, %v318
      %v343 = vmul.f32 %v175, %v319
      %v344 = vmul.f32 %v176, %v320
      %v345 = vmul.f32 %v177, %v321
      %v346 = vmul.f32 %v178, %v322
      %v347 = vmul.f32 %v179, %v323
      %v348 = vmul.f32 %v180, %v324
      %v349 = vmul.f32 %v181, %v325
      %v350 = vmul.f32 %v182, %v326
      %v351 = vmul.f32 %v183, %v327
      %v352 = vmul.f32 %v184, %v328
      %v353 = vmul.f32 %v185, %v329
      %v354 = vmul.f32 %v186, %v330
      %v355 = vmul.f32 %v187, %v331
      %v356 = vmul.f32 %v188, %v332
      %v357 = vmul.f32 %v189, %v333
      %v358 = vmul.f32 %v190, %v334
      %v359 = vmul.f32 %v191, %v335
      %v360 = vmul.f32 %v192, %v336
      %v361 = vld [vmem:[%s1] sm:$0x1]
      %v363 = vlaneseq
      %v364 = vshrl.u32 %v363, 7
      %v365 = vsub.s32 0, %v364
      %v366 = vrot.slane %v361, %v365
      %v368 = vmul.f32 %v337, %v366
      %v369 = vmul.f32 %v338, %v366
      %v370 = vmul.f32 %v339, %v366
      %v371 = vmul.f32 %v340, %v366
      %v372 = vmul.f32 %v341, %v366
      %v373 = vmul.f32 %v342, %v366
      %v374 = vmul.f32 %v343, %v366
      %v375 = vmul.f32 %v344, %v366
      %v376 = vmul.f32 %v345, %v366
      %v377 = vmul.f32 %v346, %v366
      %v378 = vmul.f32 %v347, %v366
      %v379 = vmul.f32 %v348, %v366
      %v380 = vmul.f32 %v349, %v366
      %v381 = vmul.f32 %v350, %v366
      %v382 = vmul.f32 %v351, %v366
      %v383 = vmul.f32 %v352, %v366
      %v384 = vmul.f32 %v353, %v366
      %v385 = vmul.f32 %v354, %v366
      %v386 = vmul.f32 %v355, %v366
      %v387 = vmul.f32 %v356, %v366
      %v388 = vmul.f32 %v357, %v366
      %v389 = vmul.f32 %v358, %v366
      %v390 = vmul.f32 %v359, %v366
      %v391 = vmul.f32 %v360, %v366
      %v392 = vld [vmem:[%s2] sm:$0x1]
      %v394 = vlaneseq
      %v395 = vshrl.u32 %v394, 7
      %v396 = vsub.s32 0, %v395
      %v397 = vrot.slane %v392, %v396
      %v399 = vadd.f32 %v368, %v397
      %v400 = vadd.f32 %v369, %v397
      %v401 = vadd.f32 %v370, %v397
      %v402 = vadd.f32 %v371, %v397
      %v403 = vadd.f32 %v372, %v397
      %v404 = vadd.f32 %v373, %v397
      %v405 = vadd.f32 %v374, %v397
      %v406 = vadd.f32 %v375, %v397
      %v407 = vadd.f32 %v376, %v397
      %v408 = vadd.f32 %v377, %v397
      %v409 = vadd.f32 %v378, %v397
      %v410 = vadd.f32 %v379, %v397
      %v411 = vadd.f32 %v380, %v397
      %v412 = vadd.f32 %v381, %v397
      %v413 = vadd.f32 %v382, %v397
      %v414 = vadd.f32 %v383, %v397
      %v415 = vadd.f32 %v384, %v397
      %v416 = vadd.f32 %v385, %v397
      %v417 = vadd.f32 %v386, %v397
      %v418 = vadd.f32 %v387, %v397
      %v419 = vadd.f32 %v388, %v397
      %v420 = vadd.f32 %v389, %v397
      %v421 = vadd.f32 %v390, %v397
      %v422 = vadd.f32 %v391, %v397
      %423 = vst [vmem:[#allocation2] sm:$0xff] %v399
      %424 = vst [vmem:[#allocation2 + $0x8] sm:$0xff] %v400
      %425 = vst [vmem:[#allocation2 + $0x10] sm:$0xff] %v401
      %426 = vst [vmem:[#allocation2 + $0x18] sm:$0xff] %v402
      %427 = vst [vmem:[#allocation2 + $0x20] sm:$0xff] %v403
      %428 = vst [vmem:[#allocation2 + $0x28] sm:$0xff] %v404
      %429 = vst [vmem:[#allocation2 + $0x30] sm:$0xff] %v405
      %430 = vst [vmem:[#allocation2 + $0x38] sm:$0xff] %v406
      %431 = vst [vmem:[#allocation2 + $0x40] sm:$0xff] %v407
      %432 = vst [vmem:[#allocation2 + $0x48] sm:$0xff] %v408
      %433 = vst [vmem:[#allocation2 + $0x50] sm:$0xff] %v409
      %434 = vst [vmem:[#allocation2 + $0x58] sm:$0xff] %v410
      %435 = vst [vmem:[#allocation2 + $0x60] sm:$0xff] %v411
      %436 = vst [vmem:[#allocation2 + $0x68] sm:$0xff] %v412
      %437 = vst [vmem:[#allocation2 + $0x70] sm:$0xff] %v413
      %438 = vst [vmem:[#allocation2 + $0x78] sm:$0xff] %v414
      %439 = vst [vmem:[#allocation2 + $0x80] sm:$0xff] %v415
      %440 = vst [vmem:[#allocation2 + $0x88] sm:$0xff] %v416
      %441 = vst [vmem:[#allocation2 + $0x90] sm:$0xff] %v417
      %442 = vst [vmem:[#allocation2 + $0x98] sm:$0xff] %v418
      %443 = vst [vmem:[#allocation2 + $0xa0] sm:$0xff] %v419
      %444 = vst [vmem:[#allocation2 + $0xa8] sm:$0xff] %v420
      %445 = vst [vmem:[#allocation2 + $0xb0] sm:$0xff] %v421
      %446 = vst [vmem:[#allocation2 + $0xb8] sm:$0xff] %v422
      %447 = vst [vmem:[#allocation3] sm:$0xff] 0.0
      %448 = vst [vmem:[#allocation3 + $0x8] sm:$0xff] 0.0
      %449 = vst [vmem:[#allocation3 + $0x10] sm:$0xff] 0.0
      %450 = vst [vmem:[#allocation3 + $0x18] sm:$0xff] 0.0
      %451 = vst [vmem:[#allocation3 + $0x20] sm:$0xff] 0.0
      %452 = vst [vmem:[#allocation3 + $0x28] sm:$0xff] 0.0
      %453 = vst [vmem:[#allocation3 + $0x30] sm:$0xff] 0.0
      %454 = vst [vmem:[#allocation3 + $0x38] sm:$0xff] 0.0
      %455 = vst [vmem:[#allocation3 + $0x40] sm:$0xff] 0.0
      %456 = vst [vmem:[#allocation3 + $0x48] sm:$0xff] 0.0
      %457 = vst [vmem:[#allocation3 + $0x50] sm:$0xff] 0.0
      %458 = vst [vmem:[#allocation3 + $0x58] sm:$0xff] 0.0
      %459 = vst [vmem:[#allocation3 + $0x60] sm:$0xff] 0.0
      %460 = vst [vmem:[#allocation3 + $0x68] sm:$0xff] 0.0
      %461 = vst [vmem:[#allocation3 + $0x70] sm:$0xff] 0.0
      %462 = vst [vmem:[#allocation3 + $0x78] sm:$0xff] 0.0
      %463 = vst [vmem:[#allocation3 + $0x80] sm:$0xff] 0.0
      %464 = vst [vmem:[#allocation3 + $0x88] sm:$0xff] 0.0
      %465 = vst [vmem:[#allocation3 + $0x90] sm:$0xff] 0.0
      %466 = vst [vmem:[#allocation3 + $0x98] sm:$0xff] 0.0
      %467 = vst [vmem:[#allocation3 + $0xa0] sm:$0xff] 0.0
      %468 = vst [vmem:[#allocation3 + $0xa8] sm:$0xff] 0.0
      %469 = vst [vmem:[#allocation3 + $0xb0] sm:$0xff] 0.0
      %470 = vst [vmem:[#allocation3 + $0xb8] sm:$0xff] 0.0
    $region45: #{tpu_custom_call.1} parent=1 // pred_fallthru
      _
    %v471 = vld [vmem:[#allocation2] sm:$0xff]
    %v472 = vld [vmem:[#allocation2 + $0x8] sm:$0xff]
    %v473 = vld [vmem:[#allocation2 + $0x10] sm:$0xff]
    %v474 = vld [vmem:[#allocation2 + $0x18] sm:$0xff]
    %v475 = vld [vmem:[#allocation2 + $0x20] sm:$0xff]
    %v476 = vld [vmem:[#allocation2 + $0x28] sm:$0xff]
    %v477 = vld [vmem:[#allocation2 + $0x30] sm:$0xff]
    %v478 = vld [vmem:[#allocation2 + $0x38] sm:$0xff]
    %v479 = vld [vmem:[#allocation2 + $0x40] sm:$0xff]
    %v480 = vld [vmem:[#allocation2 + $0x48] sm:$0xff]
    %v481 = vld [vmem:[#allocation2 + $0x50] sm:$0xff]
    %v482 = vld [vmem:[#allocation2 + $0x58] sm:$0xff]
    %v483 = vld [vmem:[#allocation7] sm:$0xff]
    %v484 = vld [vmem:[#allocation7 + $0x8] sm:$0xff]
    %v485 = vld [vmem:[#allocation7 + $0x10] sm:$0xff]
    %v486 = vld [vmem:[#allocation7 + $0x18] sm:$0xff]
    %v487 = vld [vmem:[#allocation7 + $0x20] sm:$0xff]
    %v488 = vld [vmem:[#allocation7 + $0x28] sm:$0xff]
    %v489 = vld [vmem:[#allocation7 + $0x30] sm:$0xff]
    %v490 = vld [vmem:[#allocation7 + $0x38] sm:$0xff]
    %v491 = vld [vmem:[#allocation7 + $0x40] sm:$0xff]
    %v492 = vld [vmem:[#allocation7 + $0x48] sm:$0xff]
    %v493 = vld [vmem:[#allocation7 + $0x50] sm:$0xff]
    %v494 = vld [vmem:[#allocation7 + $0x58] sm:$0xff]
    %v495 = vld [vmem:[#allocation7 + $0x60] sm:$0xff]
    %v496 = vld [vmem:[#allocation7 + $0x68] sm:$0xff]
    %v497 = vld [vmem:[#allocation7 + $0x70] sm:$0xff]
    %v498 = vld [vmem:[#allocation7 + $0x78] sm:$0xff]
    %v499 = vld [vmem:[#allocation7 + $0x80] sm:$0xff]
    %v500 = vld [vmem:[#allocation7 + $0x88] sm:$0xff]
    %v501 = vld [vmem:[#allocation7 + $0x90] sm:$0xff]
    %v502 = vld [vmem:[#allocation7 + $0x98] sm:$0xff]
    %v503 = vld [vmem:[#allocation7 + $0xa0] sm:$0xff]
    %v504 = vld [vmem:[#allocation7 + $0xa8] sm:$0xff]
    %v505 = vld [vmem:[#allocation7 + $0xb0] sm:$0xff]
    %v506 = vld [vmem:[#allocation7 + $0xb8] sm:$0xff]
    %v507 = vld [vmem:[#allocation7 + $0xc0] sm:$0xff]
    %v508 = vld [vmem:[#allocation7 + $0xc8] sm:$0xff]
    %v509 = vld [vmem:[#allocation7 + $0xd0] sm:$0xff]
    %v510 = vld [vmem:[#allocation7 + $0xd8] sm:$0xff]
    %v511 = vld [vmem:[#allocation7 + $0xe0] sm:$0xff]
    %v512 = vld [vmem:[#allocation7 + $0xe8] sm:$0xff]
    %v513 = vld [vmem:[#allocation7 + $0xf0] sm:$0xff]
    %v514 = vld [vmem:[#allocation7 + $0xf8] sm:$0xff]
    %v515 = vld [vmem:[%s4] sm:$0x3]
    %v517 = vlaneseq
    %v518 = vshrl.u32 %v517, 7
    %v519 = vsub.s32 0, %v518
    %v520 = vrot.slane %v515, %v519
    %v521 = vlaneseq
    %v522 = vshrl.u32 %v521, 7
    %v523 = vsub.s32 1, %v522
    %v524 = vrot.slane %v515, %v523
    %v527 = vand.u32 %v484, 4294901760
    %528 = vmatprep.subr.mxu0 %v527
    %v529 = vand.u32 %v483, 4294901760
    %530 = vmatpush1.msra.mxu0 %v529
    %v531 = vand.u32 %v486, 4294901760
    %532 = vmatprep.subr.mxu0 %v531
    %v533 = vand.u32 %v485, 4294901760
    %534 = vmatpush1.msra.mxu0 %v533
    %v535 = vand.u32 %v488, 4294901760
    %536 = vmatprep.subr.mxu0 %v535
    %v537 = vand.u32 %v487, 4294901760
    %538 = vmatpush1.msra.mxu0 %v537
    %v539 = vand.u32 %v490, 4294901760
    %540 = vmatprep.subr.mxu0 %v539
    %v541 = vand.u32 %v489, 4294901760
    %542 = vmatpush1.msra.mxu0 %v541
    %v543 = vand.u32 %v492, 4294901760
    %544 = vmatprep.subr.mxu0 %v543
    %v545 = vand.u32 %v491, 4294901760
    %546 = vmatpush1.msra.mxu0 %v545
    %v547 = vand.u32 %v494, 4294901760
    %548 = vmatprep.subr.mxu0 %v547
    %v549 = vand.u32 %v493, 4294901760
    %550 = vmatpush1.msra.mxu0 %v549
    %v551 = vand.u32 %v496, 4294901760
    %552 = vmatprep.subr.mxu0 %v551
    %v553 = vand.u32 %v495, 4294901760
    %554 = vmatpush1.msra.mxu0 %v553
    %v555 = vand.u32 %v498, 4294901760
    %556 = vmatprep.subr.mxu0 %v555
    %v557 = vand.u32 %v497, 4294901760
    %558 = vmatpush1.msra.mxu0 %v557
    %v559 = vand.u32 %v500, 4294901760
    %560 = vmatprep.subr.mxu0 %v559
    %v561 = vand.u32 %v499, 4294901760
    %562 = vmatpush1.msra.mxu0 %v561
    %v563 = vand.u32 %v502, 4294901760
    %564 = vmatprep.subr.mxu0 %v563
    %v565 = vand.u32 %v501, 4294901760
    %566 = vmatpush1.msra.mxu0 %v565
    %v567 = vand.u32 %v504, 4294901760
    %568 = vmatprep.subr.mxu0 %v567
    %v569 = vand.u32 %v503, 4294901760
    %570 = vmatpush1.msra.mxu0 %v569
    %v571 = vand.u32 %v506, 4294901760
    %572 = vmatprep.subr.mxu0 %v571
    %v573 = vand.u32 %v505, 4294901760
    %574 = vmatpush1.msra.mxu0 %v573
    %v575 = vand.u32 %v508, 4294901760
    %576 = vmatprep.subr.mxu0 %v575
    %v577 = vand.u32 %v507, 4294901760
    %578 = vmatpush1.msra.mxu0 %v577
    %v579 = vand.u32 %v510, 4294901760
    %580 = vmatprep.subr.mxu0 %v579
    %v581 = vand.u32 %v509, 4294901760
    %582 = vmatpush1.msra.mxu0 %v581
    %v583 = vand.u32 %v512, 4294901760
    %584 = vmatprep.subr.mxu0 %v583
    %v585 = vand.u32 %v511, 4294901760
    %586 = vmatpush1.msra.mxu0 %v585
    %v587 = vand.u32 %v514, 4294901760
    %588 = vmatprep.subr.mxu0 %v587
    %v589 = vand.u32 %v513, 4294901760
    %590 = vmatpush1.msra.mxu0 %v589
    %591 = vmatprep.subr.mxu0 0.0
    %592 = vmatpush1.msra.mxu0 0.0
    %593 = vmatprep.subr.mxu0 0.0
    %594 = vmatpush1.msra.mxu0 0.0
    %595 = vmatprep.subr.mxu0 0.0
    %596 = vmatpush1.msra.mxu0 0.0
    %597 = vmatprep.subr.mxu0 0.0
    %598 = vmatpush1.msra.mxu0 0.0
    %599 = vmatprep.subr.mxu0 0.0
    %600 = vmatpush1.msra.mxu0 0.0
    %601 = vmatprep.subr.mxu0 0.0
    %602 = vmatpush1.msra.mxu0 0.0
    %603 = vmatprep.subr.mxu0 0.0
    %604 = vmatpush1.msra.mxu0 0.0
    %605 = vmatprep.subr.mxu0 0.0
    %606 = vmatpush1.msra.mxu0 0.0
    %607 = vmatprep.subr.mxu0 0.0
    %608 = vmatpush1.msra.mxu0 0.0
    %609 = vmatprep.subr.mxu0 0.0
    %610 = vmatpush1.msra.mxu0 0.0
    %611 = vmatprep.subr.mxu0 0.0
    %612 = vmatpush1.msra.mxu0 0.0
    %613 = vmatprep.subr.mxu0 0.0
    %614 = vmatpush1.msra.mxu0 0.0
    %615 = vmatprep.subr.mxu0 0.0
    %616 = vmatpush1.msra.mxu0 0.0
    %617 = vmatprep.subr.mxu0 0.0
    %618 = vmatpush1.msra.mxu0 0.0
    %619 = vmatprep.subr.mxu0 0.0
    %620 = vmatpush1.msra.mxu0 0.0
    %621 = vmatprep.subr.mxu0 0.0
    %622 = vmatpush1.msra.mxu0 0.0
    %623 = vmatprep.mubr.f32.mxu0 0.0
    %v624 = vand.u32 %v471, 4294901760
    %v625 = vsub.f32 %v471, %v624
    %v626 = vand.u32 %v625, 4294901760
    %v627 = vsub.f32 %v625, %v626
    %v628 = vand.u32 %v627, 4294901760
    %629 = vmatmul.mubr.f32.gmra.mrb[0].mxu0 %v628
    %v630 = vpop.f32.mrb[0].mxu0
    %v631 = vadd.f32 %v520, %v630
    %v632 = vpop.f32.mrb[0].mxu0
    %v633 = vadd.f32 %v524, %v632
    %634 = vmatprep.mubr.f32.mxu0 0.0
    %v635 = vand.u32 %v472, 4294901760
    %v636 = vsub.f32 %v472, %v635
    %v637 = vand.u32 %v636, 4294901760
    %v638 = vsub.f32 %v636, %v637
    %v639 = vand.u32 %v638, 4294901760
    %640 = vmatmul.mubr.f32.gmra.mrb[0].mxu0 %v639
    %v641 = vpop.f32.mrb[0].mxu0
    %v642 = vadd.f32 %v520, %v641
    %v643 = vpop.f32.mrb[0].mxu0
    %v644 = vadd.f32 %v524, %v643
    %645 = vmatprep.mubr.f32.mxu0 0.0
    %v646 = vand.u32 %v473, 4294901760
    %v647 = vsub.f32 %v473, %v646
    %v648 = vand.u32 %v647, 4294901760
    %v649 = vsub.f32 %v647, %v648
    %v650 = vand.u32 %v649, 4294901760
    %651 = vmatmul.mubr.f32.gmra.mrb[0].mxu0 %v650
    %v652 = vpop.f32.mrb[0].mxu0
    %v653 = vadd.f32 %v520, %v652
    %v654 = vpop.f32.mrb[0].mxu0
    %v655 = vadd.f32 %v524, %v654
    %656 = vmatprep.mubr.f32.mxu0 0.0
    %v657 = vand.u32 %v474, 4294901760
    %v658 = vsub.f32 %v474, %v657
    %v659 = vand.u32 %v658, 4294901760
    %v660 = vsub.f32 %v658, %v659
    %v661 = vand.u32 %v660, 4294901760
    %662 = vmatmul.mubr.f32.gmra.mrb[0].mxu0 %v661
    %v663 = vpop.f32.mrb[0].mxu0
    %v664 = vadd.f32 %v520, %v663
    %v665 = vpop.f32.mrb[0].mxu0
    %v666 = vadd.f32 %v524, %v665
    %667 = vmatprep.mubr.f32.mxu0 0.0
    %v668 = vand.u32 %v475, 4294901760
    %v669 = vsub.f32 %v475, %v668
    %v670 = vand.u32 %v669, 4294901760
    %v671 = vsub.f32 %v669, %v670
    %v672 = vand.u32 %v671, 4294901760
    %673 = vmatmul.mubr.f32.gmra.mrb[0].mxu0 %v672
    %v674 = vpop.f32.mrb[0].mxu0
    %v675 = vadd.f32 %v520, %v674
    %v676 = vpop.f32.mrb[0].mxu0
    %v677 = vadd.f32 %v524, %v676
    %678 = vmatprep.mubr.f32.mxu0 0.0
    %v679 = vand.u32 %v476, 4294901760
    %v680 = vsub.f32 %v476, %v679
    %v681 = vand.u32 %v680, 4294901760
    %v682 = vsub.f32 %v680, %v681
    %v683 = vand.u32 %v682, 4294901760
    %684 = vmatmul.mubr.f32.gmra.mrb[0].mxu0 %v683
    %v685 = vpop.f32.mrb[0].mxu0
    %v686 = vadd.f32 %v520, %v685
    %v687 = vpop.f32.mrb[0].mxu0
    %v688 = vadd.f32 %v524, %v687
    %689 = vmatprep.mubr.f32.mxu0 0.0
    %v690 = vand.u32 %v477, 4294901760
    %v691 = vsub.f32 %v477, %v690
    %v692 = vand.u32 %v691, 4294901760
    %v693 = vsub.f32 %v691, %v692
    %v694 = vand.u32 %v693, 4294901760
    %695 = vmatmul.mubr.f32.gmra.mrb[0].mxu0 %v694
    %v696 = vpop.f32.mrb[0].mxu0
    %v697 = vadd.f32 %v520, %v696
    %v698 = vpop.f32.mrb[0].mxu0
    %v699 = vadd.f32 %v524, %v698
    %700 = vmatprep.mubr.f32.mxu0 0.0
    %v701 = vand.u32 %v478, 4294901760
    %v702 = vsub.f32 %v478, %v701
    %v703 = vand.u32 %v702, 4294901760
    %v704 = vsub.f32 %v702, %v703
    %v705 = vand.u32 %v704, 4294901760
    %706 = vmatmul.mubr.f32.gmra.mrb[0].mxu0 %v705
    %v707 = vpop.f32.mrb[0].mxu0
    %v708 = vadd.f32 %v520, %v707
    %v709 = vpop.f32.mrb[0].mxu0
    %v710 = vadd.f32 %v524, %v709
    %711 = vmatprep.mubr.f32.mxu0 0.0
    %v712 = vand.u32 %v479, 4294901760
    %v713 = vsub.f32 %v479, %v712
    %v714 = vand.u32 %v713, 4294901760
    %v715 = vsub.f32 %v713, %v714
    %v716 = vand.u32 %v715, 4294901760
    %717 = vmatmul.mubr.f32.gmra.mrb[0].mxu0 %v716
    %v718 = vpop.f32.mrb[0].mxu0
    %v719 = vadd.f32 %v520, %v718
    %v720 = vpop.f32.mrb[0].mxu0
    %v721 = vadd.f32 %v524, %v720
    %722 = vmatprep.mubr.f32.mxu0 0.0
    %v723 = vand.u32 %v480, 4294901760
    %v724 = vsub.f32 %v480, %v723
    %v725 = vand.u32 %v724, 4294901760
    %v726 = vsub.f32 %v724, %v725
    %v727 = vand.u32 %v726, 4294901760
    %728 = vmatmul.mubr.f32.gmra.mrb[0].mxu0 %v727
    %v729 = vpop.f32.mrb[0].mxu0
    %v730 = vadd.f32 %v520, %v729
    %v731 = vpop.f32.mrb[0].mxu0
    %v732 = vadd.f32 %v524, %v731
    %733 = vmatprep.mubr.f32.mxu0 0.0
    %v734 = vand.u32 %v481, 4294901760
    %v735 = vsub.f32 %v481, %v734
    %v736 = vand.u32 %v735, 4294901760
    %v737 = vsub.f32 %v735, %v736
    %v738 = vand.u32 %v737, 4294901760
    %739 = vmatmul.mubr.f32.gmra.mrb[0].mxu0 %v738
    %v740 = vpop.f32.mrb[0].mxu0
    %v741 = vadd.f32 %v520, %v740
    %v742 = vpop.f32.mrb[0].mxu0
    %v743 = vadd.f32 %v524, %v742
    %744 = vmatprep.mubr.f32.mxu0 0.0
    %v745 = vand.u32 %v482, 4294901760
    %v746 = vsub.f32 %v482, %v745
    %v747 = vand.u32 %v746, 4294901760
    %v748 = vsub.f32 %v746, %v747
    %v749 = vand.u32 %v748, 4294901760
    %750 = vmatmul.mubr.f32.gmra.mrb[0].mxu0 %v749
    %v751 = vpop.f32.mrb[0].mxu0
    %v752 = vadd.f32 %v520, %v751
    %v753 = vpop.f32.mrb[0].mxu0
    %v754 = vadd.f32 %v524, %v753
    %755 = vdwg.mxu0
    %v756 = vand.u32 %v484, 4294901760
    %v757 = vsub.f32 %v484, %v756
    %v758 = vand.u32 %v757, 4294901760
    %v759 = vsub.f32 %v757, %v758
    %v760 = vand.u32 %v759, 4294901760
    %761 = vmatprep.subr.mxu0 %v760
    %v762 = vand.u32 %v483, 4294901760
    %v763 = vsub.f32 %v483, %v762
    %v764 = vand.u32 %v763, 4294901760
    %v765 = vsub.f32 %v763, %v764
    %v766 = vand.u32 %v765, 4294901760
    %767 = vmatpush1.msra.mxu0 %v766
    %v768 = vand.u32 %v486, 4294901760
    %v769 = vsub.f32 %v486, %v768
    %v770 = vand.u32 %v769, 4294901760
    %v771 = vsub.f32 %v769, %v770
    %v772 = vand.u32 %v771, 4294901760
    %773 = vmatprep.subr.mxu0 %v772
    %v774 = vand.u32 %v485, 4294901760
    %v775 = vsub.f32 %v485, %v774
    %v776 = vand.u32 %v775, 4294901760
    %v777 = vsub.f32 %v775, %v776
    %v778 = vand.u32 %v777, 4294901760
    %779 = vmatpush1.msra.mxu0 %v778
    %v780 = vand.u32 %v488, 4294901760
    %v781 = vsub.f32 %v488, %v780
    %v782 = vand.u32 %v781, 4294901760
    %v783 = vsub.f32 %v781, %v782
    %v784 = vand.u32 %v783, 4294901760
    %785 = vmatprep.subr.mxu0 %v784
    %v786 = vand.u32 %v487, 4294901760
    %v787 = vsub.f32 %v487, %v786
    %v788 = vand.u32 %v787, 4294901760
    %v789 = vsub.f32 %v787, %v788
    %v790 = vand.u32 %v789, 4294901760
    %791 = vmatpush1.msra.mxu0 %v790
    %v792 = vand.u32 %v490, 4294901760
    %v793 = vsub.f32 %v490, %v792
    %v794 = vand.u32 %v793, 4294901760
    %v795 = vsub.f32 %v793, %v794
    %v796 = vand.u32 %v795, 4294901760
    %797 = vmatprep.subr.mxu0 %v796
    %v798 = vand.u32 %v489, 4294901760
    %v799 = vsub.f32 %v489, %v798
    %v800 = vand.u32 %v799, 4294901760
    %v801 = vsub.f32 %v799, %v800
    %v802 = vand.u32 %v801, 4294901760
    %803 = vmatpush1.msra.mxu0 %v802
    %v804 = vand.u32 %v492, 4294901760
    %v805 = vsub.f32 %v492, %v804
    %v806 = vand.u32 %v805, 4294901760
    %v807 = vsub.f32 %v805, %v806
    %v808 = vand.u32 %v807, 4294901760
    %809 = vmatprep.subr.mxu0 %v808
    %v810 = vand.u32 %v491, 4294901760
    %v811 = vsub.f32 %v491, %v810
    %v812 = vand.u32 %v811, 4294901760
    %v813 = vsub.f32 %v811, %v812
    %v814 = vand.u32 %v813, 4294901760
    %815 = vmatpush1.msra.mxu0 %v814
    %v816 = vand.u32 %v494, 4294901760
    %v817 = vsub.f32 %v494, %v816
    %v818 = vand.u32 %v817, 4294901760
    %v819 = vsub.f32 %v817, %v818
    %v820 = vand.u32 %v819, 4294901760
    %821 = vmatprep.subr.mxu0 %v820
    %v822 = vand.u32 %v493, 4294901760
    %v823 = vsub.f32 %v493, %v822
    %v824 = vand.u32 %v823, 4294901760
    %v825 = vsub.f32 %v823, %v824
    %v826 = vand.u32 %v825, 4294901760
    %827 = vmatpush1.msra.mxu0 %v826
    %v828 = vand.u32 %v496, 4294901760
    %v829 = vsub.f32 %v496, %v828
    %v830 = vand.u32 %v829, 4294901760
    %v831 = vsub.f32 %v829, %v830
    %v832 = vand.u32 %v831, 4294901760
    %833 = vmatprep.subr.mxu0 %v832
    %v834 = vand.u32 %v495, 4294901760
    %v835 = vsub.f32 %v495, %v834
    %v836 = vand.u32 %v835, 4294901760
    %v837 = vsub.f32 %v835, %v836
    %v838 = vand.u32 %v837, 4294901760
    %839 = vmatpush1.msra.mxu0 %v838
    %v840 = vand.u32 %v498, 4294901760
    %v841 = vsub.f32 %v498, %v840
    %v842 = vand.u32 %v841, 4294901760
    %v843 = vsub.f32 %v841, %v842
    %v844 = vand.u32 %v843, 4294901760
    %845 = vmatprep.subr.mxu0 %v844
    %v846 = vand.u32 %v497, 4294901760
    %v847 = vsub.f32 %v497, %v846
    %v848 = vand.u32 %v847, 4294901760
    %v849 = vsub.f32 %v847, %v848
    %v850 = vand.u32 %v849, 4294901760
    %851 = vmatpush1.msra.mxu0 %v850
    %v852 = vand.u32 %v500, 4294901760
    %v853 = vsub.f32 %v500, %v852
    %v854 = vand.u32 %v853, 4294901760
    %v855 = vsub.f32 %v853, %v854
    %v856 = vand.u32 %v855, 4294901760
    %857 = vmatprep.subr.mxu0 %v856
    %v858 = vand.u32 %v499, 4294901760
    %v859 = vsub.f32 %v499, %v858
    %v860 = vand.u32 %v859, 4294901760
    %v861 = vsub.f32 %v859, %v860
    %v862 = vand.u32 %v861, 4294901760
    %863 = vmatpush1.msra.mxu0 %v862
    %v864 = vand.u32 %v502, 4294901760
    %v865 = vsub.f32 %v502, %v864
    %v866 = vand.u32 %v865, 4294901760
    %v867 = vsub.f32 %v865, %v866
    %v868 = vand.u32 %v867, 4294901760
    %869 = vmatprep.subr.mxu0 %v868
    %v870 = vand.u32 %v501, 4294901760
    %v871 = vsub.f32 %v501, %v870
    %v872 = vand.u32 %v871, 4294901760
    %v873 = vsub.f32 %v871, %v872
    %v874 = vand.u32 %v873, 4294901760
    %875 = vmatpush1.msra.mxu0 %v874
    %v876 = vand.u32 %v504, 4294901760
    %v877 = vsub.f32 %v504, %v876
    %v878 = vand.u32 %v877, 4294901760
    %v879 = vsub.f32 %v877, %v878
    %v880 = vand.u32 %v879, 4294901760
    %881 = vmatprep.subr.mxu0 %v880
    %v882 = vand.u32 %v503, 4294901760
    %v883 = vsub.f32 %v503, %v882
    %v884 = vand.u32 %v883, 4294901760
    %v885 = vsub.f32 %v883, %v884
    %v886 = vand.u32 %v885, 4294901760
    %887 = vmatpush1.msra.mxu0 %v886
    %v888 = vand.u32 %v506, 4294901760
    %v889 = vsub.f32 %v506, %v888
    %v890 = vand.u32 %v889, 4294901760
    %v891 = vsub.f32 %v889, %v890
    %v892 = vand.u32 %v891, 4294901760
    %893 = vmatprep.subr.mxu0 %v892
    %v894 = vand.u32 %v505, 4294901760
    %v895 = vsub.f32 %v505, %v894
    %v896 = vand.u32 %v895, 4294901760
    %v897 = vsub.f32 %v895, %v896
    %v898 = vand.u32 %v897, 4294901760
    %899 = vmatpush1.msra.mxu0 %v898
    %v900 = vand.u32 %v508, 4294901760
    %v901 = vsub.f32 %v508, %v900
    %v902 = vand.u32 %v901, 4294901760
    %v903 = vsub.f32 %v901, %v902
    %v904 = vand.u32 %v903, 4294901760
    %905 = vmatprep.subr.mxu0 %v904
    %v906 = vand.u32 %v507, 4294901760
    %v907 = vsub.f32 %v507, %v906
    %v908 = vand.u32 %v907, 4294901760
    %v909 = vsub.f32 %v907, %v908
    %v910 = vand.u32 %v909, 4294901760
    %911 = vmatpush1.msra.mxu0 %v910
    %v912 = vand.u32 %v510, 4294901760
    %v913 = vsub.f32 %v510, %v912
    %v914 = vand.u32 %v913, 4294901760
    %v915 = vsub.f32 %v913, %v914
    %v916 = vand.u32 %v915, 4294901760
    %917 = vmatprep.subr.mxu0 %v916
    %v918 = vand.u32 %v509, 4294901760
    %v919 = vsub.f32 %v509, %v918
    %v920 = vand.u32 %v919, 4294901760
    %v921 = vsub.f32 %v919, %v920
    %v922 = vand.u32 %v921, 4294901760
    %923 = vmatpush1.msra.mxu0 %v922
    %v924 = vand.u32 %v512, 4294901760
    %v925 = vsub.f32 %v512, %v924
    %v926 = vand.u32 %v925, 4294901760
    %v927 = vsub.f32 %v925, %v926
    %v928 = vand.u32 %v927, 4294901760
    %929 = vmatprep.subr.mxu0 %v928
    %v930 = vand.u32 %v511, 4294901760
    %v931 = vsub.f32 %v511, %v930
    %v932 = vand.u32 %v931, 4294901760
    %v933 = vsub.f32 %v931, %v932
    %v934 = vand.u32 %v933, 4294901760
    %935 = vmatpush1.msra.mxu0 %v934
    %v936 = vand.u32 %v514, 4294901760
    %v937 = vsub.f32 %v514, %v936
    %v938 = vand.u32 %v937, 4294901760
    %v939 = vsub.f32 %v937, %v938
    %v940 = vand.u32 %v939, 4294901760
    %941 = vmatprep.subr.mxu0 %v940
    %v942 = vand.u32 %v513, 4294901760
    %v943 = vsub.f32 %v513, %v942
    %v944 = vand.u32 %v943, 4294901760
    %v945 = vsub.f32 %v943, %v944
    %v946 = vand.u32 %v945, 4294901760
    %947 = vmatpush1.msra.mxu0 %v946
    %948 = vmatprep.subr.mxu0 0.0
    %949 = vmatpush1.msra.mxu0 0.0
    %950 = vmatprep.subr.mxu0 0.0
    %951 = vmatpush1.msra.mxu0 0.0
    %952 = vmatprep.subr.mxu0 0.0
    %953 = vmatpush1.msra.mxu0 0.0
    %954 = vmatprep.subr.mxu0 0.0
    %955 = vmatpush1.msra.mxu0 0.0
    %956 = vmatprep.subr.mxu0 0.0
    %957 = vmatpush1.msra.mxu0 0.0
    %958 = vmatprep.subr.mxu0 0.0
    %959 = vmatpush1.msra.mxu0 0.0
    %960 = vmatprep.subr.mxu0 0.0
    %961 = vmatpush1.msra.mxu0 0.0
    %962 = vmatprep.subr.mxu0 0.0
    %963 = vmatpush1.msra.mxu0 0.0
    %964 = vmatprep.subr.mxu0 0.0
    %965 = vmatpush1.msra.mxu0 0.0
    %966 = vmatprep.subr.mxu0 0.0
    %967 = vmatpush1.msra.mxu0 0.0
    %968 = vmatprep.subr.mxu0 0.0
    %969 = vmatpush1.msra.mxu0 0.0
    %970 = vmatprep.subr.mxu0 0.0
    %971 = vmatpush1.msra.mxu0 0.0
    %972 = vmatprep.subr.mxu0 0.0
    %973 = vmatpush1.msra.mxu0 0.0
    %974 = vmatprep.subr.mxu0 0.0
    %975 = vmatpush1.msra.mxu0 0.0
    %976 = vmatprep.subr.mxu0 0.0
    %977 = vmatpush1.msra.mxu0 0.0
    %978 = vmatprep.subr.mxu0 0.0
    %979 = vmatpush1.msra.mxu0 0.0
    %980 = vmatprep.mubr.f32.mxu0 0.0
    %v981 = vand.u32 %v471, 4294901760
    %982 = vmatmul.mubr.f32.gmra.mrb[0].mxu0 %v981
    %v983 = vpop.f32.mrb[0].mxu0
    %v984 = vadd.f32 %v631, %v983
    %v985 = vpop.f32.mrb[0].mxu0
    %v986 = vadd.f32 %v633, %v985
    %987 = vmatprep.mubr.f32.mxu0 0.0
    %v988 = vand.u32 %v472, 4294901760
    %989 = vmatmul.mubr.f32.gmra.mrb[0].mxu0 %v988
    %v990 = vpop.f32.mrb[0].mxu0
    %v991 = vadd.f32 %v642, %v990
    %v992 = vpop.f32.mrb[0].mxu0
    %v993 = vadd.f32 %v644, %v992
    %994 = vmatprep.mubr.f32.mxu0 0.0
    %v995 = vand.u32 %v473, 4294901760
    %996 = vmatmul.mubr.f32.gmra.mrb[0].mxu0 %v995
    %v997 = vpop.f32.mrb[0].mxu0
    %v998 = vadd.f32 %v653, %v997
    %v999 = vpop.f32.mrb[0].mxu0
    %v1000 = vadd.f32 %v655, %v999
    %1001 = vmatprep.mubr.f32.mxu0 0.0
    %v1002 = vand.u32 %v474, 4294901760
    %1003 = vmatmul.mubr.f32.gmra.mrb[0].mxu0 %v1002
    %v1004 = vpop.f32.mrb[0].mxu0
    %v1005 = vadd.f32 %v664, %v1004
    %v1006 = vpop.f32.mrb[0].mxu0
    %v1007 = vadd.f32 %v666, %v1006
    %1008 = vmatprep.mubr.f32.mxu0 0.0
    %v1009 = vand.u32 %v475, 4294901760
    %1010 = vmatmul.mubr.f32.gmra.mrb[0].mxu0 %v1009
    %v1011 = vpop.f32.mrb[0].mxu0
    %v1012 = vadd.f32 %v675, %v1011
    %v1013 = vpop.f32.mrb[0].mxu0
    %v1014 = vadd.f32 %v677, %v1013
    %1015 = vmatprep.mubr.f32.mxu0 0.0
    %v1016 = vand.u32 %v476, 4294901760
    %1017 = vmatmul.mubr.f32.gmra.mrb[0].mxu0 %v1016
    %v1018 = vpop.f32.mrb[0].mxu0
    %v1019 = vadd.f32 %v686, %v1018
    %v1020 = vpop.f32.mrb[0].mxu0
    %v1021 = vadd.f32 %v688, %v1020
    %1022 = vmatprep.mubr.f32.mxu0 0.0
    %v1023 = vand.u32 %v477, 4294901760
    %1024 = vmatmul.mubr.f32.gmra.mrb[0].mxu0 %v1023
    %v1025 = vpop.f32.mrb[0].mxu0
    %v1026 = vadd.f32 %v697, %v1025
    %v1027 = vpop.f32.mrb[0].mxu0
    %v1028 = vadd.f32 %v699, %v1027
    %1029 = vmatprep.mubr.f32.mxu0 0.0
    %v1030 = vand.u32 %v478, 4294901760
    %1031 = vmatmul.mubr.f32.gmra.mrb[0].mxu0 %v1030
    %v1032 = vpop.f32.mrb[0].mxu0
    %v1033 = vadd.f32 %v708, %v1032
    %v1034 = vpop.f32.mrb[0].mxu0
    %v1035 = vadd.f32 %v710, %v1034
    %1036 = vmatprep.mubr.f32.mxu0 0.0
    %v1037 = vand.u32 %v479, 4294901760
    %1038 = vmatmul.mubr.f32.gmra.mrb[0].mxu0 %v1037
    %v1039 = vpop.f32.mrb[0].mxu0
    %v1040 = vadd.f32 %v719, %v1039
    %v1041 = vpop.f32.mrb[0].mxu0
    %v1042 = vadd.f32 %v721, %v1041
    %1043 = vmatprep.mubr.f32.mxu0 0.0
    %v1044 = vand.u32 %v480, 4294901760
    %1045 = vmatmul.mubr.f32.gmra.mrb[0].mxu0 %v1044
    %v1046 = vpop.f32.mrb[0].mxu0
    %v1047 = vadd.f32 %v730, %v1046
    %v1048 = vpop.f32.mrb[0].mxu0
    %v1049 = vadd.f32 %v732, %v1048
    %1050 = vmatprep.mubr.f32.mxu0 0.0
    %v1051 = vand.u32 %v481, 4294901760
    %1052 = vmatmul.mubr.f32.gmra.mrb[0].mxu0 %v1051
    %v1053 = vpop.f32.mrb[0].mxu0
    %v1054 = vadd.f32 %v741, %v1053
    %v1055 = vpop.f32.mrb[0].mxu0
    %v1056 = vadd.f32 %v743, %v1055
    %1057 = vmatprep.mubr.f32.mxu0 0.0
    %v1058 = vand.u32 %v482, 4294901760
    %1059 = vmatmul.mubr.f32.gmra.mrb[0].mxu0 %v1058
    %v1060 = vpop.f32.mrb[0].mxu0
    %v1061 = vadd.f32 %v752, %v1060
    %v1062 = vpop.f32.mrb[0].mxu0
    %v1063 = vadd.f32 %v754, %v1062
    %1064 = vdwg.mxu0
    %v1065 = vand.u32 %v484, 4294901760
    %v1066 = vsub.f32 %v484, %v1065
    %1067 = vmatprep.subr.mxu0 %v1066
    %v1068 = vand.u32 %v483, 4294901760
    %v1069 = vsub.f32 %v483, %v1068
    %1070 = vmatpush1.msra.mxu0 %v1069
    %v1071 = vand.u32 %v486, 4294901760
    %v1072 = vsub.f32 %v486, %v1071
    %1073 = vmatprep.subr.mxu0 %v1072
    %v1074 = vand.u32 %v485, 4294901760
    %v1075 = vsub.f32 %v485, %v1074
    %1076 = vmatpush1.msra.mxu0 %v1075
    %v1077 = vand.u32 %v488, 4294901760
    %v1078 = vsub.f32 %v488, %v1077
    %1079 = vmatprep.subr.mxu0 %v1078
    %v1080 = vand.u32 %v487, 4294901760
    %v1081 = vsub.f32 %v487, %v1080
    %1082 = vmatpush1.msra.mxu0 %v1081
    %v1083 = vand.u32 %v490, 4294901760
    %v1084 = vsub.f32 %v490, %v1083
    %1085 = vmatprep.subr.mxu0 %v1084
    %v1086 = vand.u32 %v489, 4294901760
    %v1087 = vsub.f32 %v489, %v1086
    %1088 = vmatpush1.msra.mxu0 %v1087
    %v1089 = vand.u32 %v492, 4294901760
    %v1090 = vsub.f32 %v492, %v1089
    %1091 = vmatprep.subr.mxu0 %v1090
    %v1092 = vand.u32 %v491, 4294901760
    %v1093 = vsub.f32 %v491, %v1092
    %1094 = vmatpush1.msra.mxu0 %v1093
    %v1095 = vand.u32 %v494, 4294901760
    %v1096 = vsub.f32 %v494, %v1095
    %1097 = vmatprep.subr.mxu0 %v1096
    %v1098 = vand.u32 %v493, 4294901760
    %v1099 = vsub.f32 %v493, %v1098
    %1100 = vmatpush1.msra.mxu0 %v1099
    %v1101 = vand.u32 %v496, 4294901760
    %v1102 = vsub.f32 %v496, %v1101
    %1103 = vmatprep.subr.mxu0 %v1102
    %v1104 = vand.u32 %v495, 4294901760
    %v1105 = vsub.f32 %v495, %v1104
    %1106 = vmatpush1.msra.mxu0 %v1105
    %v1107 = vand.u32 %v498, 4294901760
    %v1108 = vsub.f32 %v498, %v1107
    %1109 = vmatprep.subr.mxu0 %v1108
    %v1110 = vand.u32 %v497, 4294901760
    %v1111 = vsub.f32 %v497, %v1110
    %1112 = vmatpush1.msra.mxu0 %v1111
    %v1113 = vand.u32 %v500, 4294901760
    %v1114 = vsub.f32 %v500, %v1113
    %1115 = vmatprep.subr.mxu0 %v1114
    %v1116 = vand.u32 %v499, 4294901760
    %v1117 = vsub.f32 %v499, %v1116
    %1118 = vmatpush1.msra.mxu0 %v1117
    %v1119 = vand.u32 %v502, 4294901760
    %v1120 = vsub.f32 %v502, %v1119
    %1121 = vmatprep.subr.mxu0 %v1120
    %v1122 = vand.u32 %v501, 4294901760
    %v1123 = vsub.f32 %v501, %v1122
    %1124 = vmatpush1.msra.mxu0 %v1123
    %v1125 = vand.u32 %v504, 4294901760
    %v1126 = vsub.f32 %v504, %v1125
    %1127 = vmatprep.subr.mxu0 %v1126
    %v1128 = vand.u32 %v503, 4294901760
    %v1129 = vsub.f32 %v503, %v1128
    %1130 = vmatpush1.msra.mxu0 %v1129
    %v1131 = vand.u32 %v506, 4294901760
    %v1132 = vsub.f32 %v506, %v1131
    %1133 = vmatprep.subr.mxu0 %v1132
    %v1134 = vand.u32 %v505, 4294901760
    %v1135 = vsub.f32 %v505, %v1134
    %1136 = vmatpush1.msra.mxu0 %v1135
    %v1137 = vand.u32 %v508, 4294901760
    %v1138 = vsub.f32 %v508, %v1137
    %1139 = vmatprep.subr.mxu0 %v1138
    %v1140 = vand.u32 %v507, 4294901760
    %v1141 = vsub.f32 %v507, %v1140
    %1142 = vmatpush1.msra.mxu0 %v1141
    %v1143 = vand.u32 %v510, 4294901760
    %v1144 = vsub.f32 %v510, %v1143
    %1145 = vmatprep.subr.mxu0 %v1144
    %v1146 = vand.u32 %v509, 4294901760
    %v1147 = vsub.f32 %v509, %v1146
    %1148 = vmatpush1.msra.mxu0 %v1147
    %v1149 = vand.u32 %v512, 4294901760
    %v1150 = vsub.f32 %v512, %v1149
    %1151 = vmatprep.subr.mxu0 %v1150
    %v1152 = vand.u32 %v511, 4294901760
    %v1153 = vsub.f32 %v511, %v1152
    %1154 = vmatpush1.msra.mxu0 %v1153
    %v1155 = vand.u32 %v514, 4294901760
    %v1156 = vsub.f32 %v514, %v1155
    %1157 = vmatprep.subr.mxu0 %v1156
    %v1158 = vand.u32 %v513, 4294901760
    %v1159 = vsub.f32 %v513, %v1158
    %1160 = vmatpush1.msra.mxu0 %v1159
    %1161 = vmatprep.subr.mxu0 0.0
    %1162 = vmatpush1.msra.mxu0 0.0
    %1163 = vmatprep.subr.mxu0 0.0
    %1164 = vmatpush1.msra.mxu0 0.0
    %1165 = vmatprep.subr.mxu0 0.0
    %1166 = vmatpush1.msra.mxu0 0.0
    %1167 = vmatprep.subr.mxu0 0.0
    %1168 = vmatpush1.msra.mxu0 0.0
    %1169 = vmatprep.subr.mxu0 0.0
    %1170 = vmatpush1.msra.mxu0 0.0
    %1171 = vmatprep.subr.mxu0 0.0
    %1172 = vmatpush1.msra.mxu0 0.0
    %1173 = vmatprep.subr.mxu0 0.0
    %1174 = vmatpush1.msra.mxu0 0.0
    %1175 = vmatprep.subr.mxu0 0.0
    %1176 = vmatpush1.msra.mxu0 0.0
    %1177 = vmatprep.subr.mxu0 0.0
    %1178 = vmatpush1.msra.mxu0 0.0
    %1179 = vmatprep.subr.mxu0 0.0
    %1180 = vmatpush1.msra.mxu0 0.0
    %1181 = vmatprep.subr.mxu0 0.0
    %1182 = vmatpush1.msra.mxu0 0.0
    %1183 = vmatprep.subr.mxu0 0.0
    %1184 = vmatpush1.msra.mxu0 0.0
    %1185 = vmatprep.subr.mxu0 0.0
    %1186 = vmatpush1.msra.mxu0 0.0
    %1187 = vmatprep.subr.mxu0 0.0
    %1188 = vmatpush1.msra.mxu0 0.0
    %1189 = vmatprep.subr.mxu0 0.0
    %1190 = vmatpush1.msra.mxu0 0.0
    %1191 = vmatprep.subr.mxu0 0.0
    %1192 = vmatpush1.msra.mxu0 0.0
    %1193 = vmatprep.mubr.f32.mxu0 0.0
    %v1194 = vand.u32 %v471, 4294901760
    %v1195 = vsub.f32 %v471, %v1194
    %1196 = vmatmul.mubr.f32.gmra.mrb[0].mxu0 %v1195
    %v1197 = vpop.f32.mrb[0].mxu0
    %v1198 = vadd.f32 %v984, %v1197
    %v1199 = vpop.f32.mrb[0].mxu0
    %v1200 = vadd.f32 %v986, %v1199
    %1201 = vmatprep.mubr.f32.mxu0 0.0
    %v1202 = vand.u32 %v472, 4294901760
    %v1203 = vsub.f32 %v472, %v1202
    %1204 = vmatmul.mubr.f32.gmra.mrb[0].mxu0 %v1203
    %v1205 = vpop.f32.mrb[0].mxu0
    %v1206 = vadd.f32 %v991, %v1205
    %v1207 = vpop.f32.mrb[0].mxu0
    %v1208 = vadd.f32 %v993, %v1207
    %1209 = vmatprep.mubr.f32.mxu0 0.0
    %v1210 = vand.u32 %v473, 4294901760
    %v1211 = vsub.f32 %v473, %v1210
    %1212 = vmatmul.mubr.f32.gmra.mrb[0].mxu0 %v1211
    %v1213 = vpop.f32.mrb[0].mxu0
    %v1214 = vadd.f32 %v998, %v1213
    %v1215 = vpop.f32.mrb[0].mxu0
    %v1216 = vadd.f32 %v1000, %v1215
    %1217 = vmatprep.mubr.f32.mxu0 0.0
    %v1218 = vand.u32 %v474, 4294901760
    %v1219 = vsub.f32 %v474, %v1218
    %1220 = vmatmul.mubr.f32.gmra.mrb[0].mxu0 %v1219
    %v1221 = vpop.f32.mrb[0].mxu0
    %v1222 = vadd.f32 %v1005, %v1221
    %v1223 = vpop.f32.mrb[0].mxu0
    %v1224 = vadd.f32 %v1007, %v1223
    %1225 = vmatprep.mubr.f32.mxu0 0.0
    %v1226 = vand.u32 %v475, 4294901760
    %v1227 = vsub.f32 %v475, %v1226
    %1228 = vmatmul.mubr.f32.gmra.mrb[0].mxu0 %v1227
    %v1229 = vpop.f32.mrb[0].mxu0
    %v1230 = vadd.f32 %v1012, %v1229
    %v1231 = vpop.f32.mrb[0].mxu0
    %v1232 = vadd.f32 %v1014, %v1231
    %1233 = vmatprep.mubr.f32.mxu0 0.0
    %v1234 = vand.u32 %v476, 4294901760
    %v1235 = vsub.f32 %v476, %v1234
    %1236 = vmatmul.mubr.f32.gmra.mrb[0].mxu0 %v1235
    %v1237 = vpop.f32.mrb[0].mxu0
    %v1238 = vadd.f32 %v1019, %v1237
    %v1239 = vpop.f32.mrb[0].mxu0
    %v1240 = vadd.f32 %v1021, %v1239
    %1241 = vmatprep.mubr.f32.mxu0 0.0
    %v1242 = vand.u32 %v477, 4294901760
    %v1243 = vsub.f32 %v477, %v1242
    %1244 = vmatmul.mubr.f32.gmra.mrb[0].mxu0 %v1243
    %v1245 = vpop.f32.mrb[0].mxu0
    %v1246 = vadd.f32 %v1026, %v1245
    %v1247 = vpop.f32.mrb[0].mxu0
    %v1248 = vadd.f32 %v1028, %v1247
    %1249 = vmatprep.mubr.f32.mxu0 0.0
    %v1250 = vand.u32 %v478, 4294901760
    %v1251 = vsub.f32 %v478, %v1250
    %1252 = vmatmul.mubr.f32.gmra.mrb[0].mxu0 %v1251
    %v1253 = vpop.f32.mrb[0].mxu0
    %v1254 = vadd.f32 %v1033, %v1253
    %v1255 = vpop.f32.mrb[0].mxu0
    %v1256 = vadd.f32 %v1035, %v1255
    %1257 = vmatprep.mubr.f32.mxu0 0.0
    %v1258 = vand.u32 %v479, 4294901760
    %v1259 = vsub.f32 %v479, %v1258
    %1260 = vmatmul.mubr.f32.gmra.mrb[0].mxu0 %v1259
    %v1261 = vpop.f32.mrb[0].mxu0
    %v1262 = vadd.f32 %v1040, %v1261
    %v1263 = vpop.f32.mrb[0].mxu0
    %v1264 = vadd.f32 %v1042, %v1263
    %1265 = vmatprep.mubr.f32.mxu0 0.0
    %v1266 = vand.u32 %v480, 4294901760
    %v1267 = vsub.f32 %v480, %v1266
    %1268 = vmatmul.mubr.f32.gmra.mrb[0].mxu0 %v1267
    %v1269 = vpop.f32.mrb[0].mxu0
    %v1270 = vadd.f32 %v1047, %v1269
    %v1271 = vpop.f32.mrb[0].mxu0
    %v1272 = vadd.f32 %v1049, %v1271
    %1273 = vmatprep.mubr.f32.mxu0 0.0
    %v1274 = vand.u32 %v481, 4294901760
    %v1275 = vsub.f32 %v481, %v1274
    %1276 = vmatmul.mubr.f32.gmra.mrb[0].mxu0 %v1275
    %v1277 = vpop.f32.mrb[0].mxu0
    %v1278 = vadd.f32 %v1054, %v1277
    %v1279 = vpop.f32.mrb[0].mxu0
    %v1280 = vadd.f32 %v1056, %v1279
    %1281 = vmatprep.mubr.f32.mxu0 0.0
    %v1282 = vand.u32 %v482, 4294901760
    %v1283 = vsub.f32 %v482, %v1282
    %1284 = vmatmul.mubr.f32.gmra.mrb[0].mxu0 %v1283
    %v1285 = vpop.f32.mrb[0].mxu0
    %v1286 = vadd.f32 %v1061, %v1285
    %v1287 = vpop.f32.mrb[0].mxu0
    %v1288 = vadd.f32 %v1063, %v1287
    %1289 = vdwg.mxu0
    %v1290 = vand.u32 %v484, 4294901760
    %1291 = vmatprep.subr.mxu0 %v1290
    %v1292 = vand.u32 %v483, 4294901760
    %1293 = vmatpush1.msra.mxu0 %v1292
    %v1294 = vand.u32 %v486, 4294901760
    %1295 = vmatprep.subr.mxu0 %v1294
    %v1296 = vand.u32 %v485, 4294901760
    %1297 = vmatpush1.msra.mxu0 %v1296
    %v1298 = vand.u32 %v488, 4294901760
    %1299 = vmatprep.subr.mxu0 %v1298
    %v1300 = vand.u32 %v487, 4294901760
    %1301 = vmatpush1.msra.mxu0 %v1300
    %v1302 = vand.u32 %v490, 4294901760
    %1303 = vmatprep.subr.mxu0 %v1302
    %v1304 = vand.u32 %v489, 4294901760
    %1305 = vmatpush1.msra.mxu0 %v1304
    %v1306 = vand.u32 %v492, 4294901760
    %1307 = vmatprep.subr.mxu0 %v1306
    %v1308 = vand.u32 %v491, 4294901760
    %1309 = vmatpush1.msra.mxu0 %v1308
    %v1310 = vand.u32 %v494, 4294901760
    %1311 = vmatprep.subr.mxu0 %v1310
    %v1312 = vand.u32 %v493, 4294901760
    %1313 = vmatpush1.msra.mxu0 %v1312
    %v1314 = vand.u32 %v496, 4294901760
    %1315 = vmatprep.subr.mxu0 %v1314
    %v1316 = vand.u32 %v495, 4294901760
    %1317 = vmatpush1.msra.mxu0 %v1316
    %v1318 = vand.u32 %v498, 4294901760
    %1319 = vmatprep.subr.mxu0 %v1318
    %v1320 = vand.u32 %v497, 4294901760
    %1321 = vmatpush1.msra.mxu0 %v1320
    %v1322 = vand.u32 %v500, 4294901760
    %1323 = vmatprep.subr.mxu0 %v1322
    %v1324 = vand.u32 %v499, 4294901760
    %1325 = vmatpush1.msra.mxu0 %v1324
    %v1326 = vand.u32 %v502, 4294901760
    %1327 = vmatprep.subr.mxu0 %v1326
    %v1328 = vand.u32 %v501, 4294901760
    %1329 = vmatpush1.msra.mxu0 %v1328
    %v1330 = vand.u32 %v504, 4294901760
    %1331 = vmatprep.subr.mxu0 %v1330
    %v1332 = vand.u32 %v503, 4294901760
    %1333 = vmatpush1.msra.mxu0 %v1332
    %v1334 = vand.u32 %v506, 4294901760
    %1335 = vmatprep.subr.mxu0 %v1334
    %v1336 = vand.u32 %v505, 4294901760
    %1337 = vmatpush1.msra.mxu0 %v1336
    %v1338 = vand.u32 %v508, 4294901760
    %1339 = vmatprep.subr.mxu0 %v1338
    %v1340 = vand.u32 %v507, 4294901760
    %1341 = vmatpush1.msra.mxu0 %v1340
    %v1342 = vand.u32 %v510, 4294901760
    %1343 = vmatprep.subr.mxu0 %v1342
    %v1344 = vand.u32 %v509, 4294901760
    %1345 = vmatpush1.msra.mxu0 %v1344
    %v1346 = vand.u32 %v512, 4294901760
    %1347 = vmatprep.subr.mxu0 %v1346
    %v1348 = vand.u32 %v511, 4294901760
    %1349 = vmatpush1.msra.mxu0 %v1348
    %v1350 = vand.u32 %v514, 4294901760
    %1351 = vmatprep.subr.mxu0 %v1350
    %v1352 = vand.u32 %v513, 4294901760
    %1353 = vmatpush1.msra.mxu0 %v1352
    %1354 = vmatprep.subr.mxu0 0.0
    %1355 = vmatpush1.msra.mxu0 0.0
    %1356 = vmatprep.subr.mxu0 0.0
    %1357 = vmatpush1.msra.mxu0 0.0
    %1358 = vmatprep.subr.mxu0 0.0
    %1359 = vmatpush1.msra.mxu0 0.0
    %1360 = vmatprep.subr.mxu0 0.0
    %1361 = vmatpush1.msra.mxu0 0.0
    %1362 = vmatprep.subr.mxu0 0.0
    %1363 = vmatpush1.msra.mxu0 0.0
    %1364 = vmatprep.subr.mxu0 0.0
    %1365 = vmatpush1.msra.mxu0 0.0
    %1366 = vmatprep.subr.mxu0 0.0
    %1367 = vmatpush1.msra.mxu0 0.0
    %1368 = vmatprep.subr.mxu0 0.0
    %1369 = vmatpush1.msra.mxu0 0.0
    %1370 = vmatprep.subr.mxu0 0.0
    %1371 = vmatpush1.msra.mxu0 0.0
    %1372 = vmatprep.subr.mxu0 0.0
    %1373 = vmatpush1.msra.mxu0 0.0
    %1374 = vmatprep.subr.mxu0 0.0
    %1375 = vmatpush1.msra.mxu0 0.0
    %1376 = vmatprep.subr.mxu0 0.0
    %1377 = vmatpush1.msra.mxu0 0.0
    %1378 = vmatprep.subr.mxu0 0.0
    %1379 = vmatpush1.msra.mxu0 0.0
    %1380 = vmatprep.subr.mxu0 0.0
    %1381 = vmatpush1.msra.mxu0 0.0
    %1382 = vmatprep.subr.mxu0 0.0
    %1383 = vmatpush1.msra.mxu0 0.0
    %1384 = vmatprep.subr.mxu0 0.0
    %1385 = vmatpush1.msra.mxu0 0.0
    %1386 = vmatprep.mubr.f32.mxu0 0.0
    %v1387 = vand.u32 %v471, 4294901760
    %v1388 = vsub.f32 %v471, %v1387
    %v1389 = vand.u32 %v1388, 4294901760
    %1390 = vmatmul.mubr.f32.gmra.mrb[0].mxu0 %v1389
    %v1391 = vpop.f32.mrb[0].mxu0
    %v1392 = vadd.f32 %v1198, %v1391
    %v1393 = vpop.f32.mrb[0].mxu0
    %v1394 = vadd.f32 %v1200, %v1393
    %1395 = vmatprep.mubr.f32.mxu0 0.0
    %v1396 = vand.u32 %v472, 4294901760
    %v1397 = vsub.f32 %v472, %v1396
    %v1398 = vand.u32 %v1397, 4294901760
    %1399 = vmatmul.mubr.f32.gmra.mrb[0].mxu0 %v1398
    %v1400 = vpop.f32.mrb[0].mxu0
    %v1401 = vadd.f32 %v1206, %v1400
    %v1402 = vpop.f32.mrb[0].mxu0
    %v1403 = vadd.f32 %v1208, %v1402
    %1404 = vmatprep.mubr.f32.mxu0 0.0
    %v1405 = vand.u32 %v473, 4294901760
    %v1406 = vsub.f32 %v473, %v1405
    %v1407 = vand.u32 %v1406, 4294901760
    %1408 = vmatmul.mubr.f32.gmra.mrb[0].mxu0 %v1407
    %v1409 = vpop.f32.mrb[0].mxu0
    %v1410 = vadd.f32 %v1214, %v1409
    %v1411 = vpop.f32.mrb[0].mxu0
    %v1412 = vadd.f32 %v1216, %v1411
    %1413 = vmatprep.mubr.f32.mxu0 0.0
    %v1414 = vand.u32 %v474, 4294901760
    %v1415 = vsub.f32 %v474, %v1414
    %v1416 = vand.u32 %v1415, 4294901760
    %1417 = vmatmul.mubr.f32.gmra.mrb[0].mxu0 %v1416
    %v1418 = vpop.f32.mrb[0].mxu0
    %v1419 = vadd.f32 %v1222, %v1418
    %v1420 = vpop.f32.mrb[0].mxu0
    %v1421 = vadd.f32 %v1224, %v1420
    %1422 = vmatprep.mubr.f32.mxu0 0.0
    %v1423 = vand.u32 %v475, 4294901760
    %v1424 = vsub.f32 %v475, %v1423
    %v1425 = vand.u32 %v1424, 4294901760
    %1426 = vmatmul.mubr.f32.gmra.mrb[0].mxu0 %v1425
    %v1427 = vpop.f32.mrb[0].mxu0
    %v1428 = vadd.f32 %v1230, %v1427
    %v1429 = vpop.f32.mrb[0].mxu0
    %v1430 = vadd.f32 %v1232, %v1429
    %1431 = vmatprep.mubr.f32.mxu0 0.0
    %v1432 = vand.u32 %v476, 4294901760
    %v1433 = vsub.f32 %v476, %v1432
    %v1434 = vand.u32 %v1433, 4294901760
    %1435 = vmatmul.mubr.f32.gmra.mrb[0].mxu0 %v1434
    %v1436 = vpop.f32.mrb[0].mxu0
    %v1437 = vadd.f32 %v1238, %v1436
    %v1438 = vpop.f32.mrb[0].mxu0
    %v1439 = vadd.f32 %v1240, %v1438
    %1440 = vmatprep.mubr.f32.mxu0 0.0
    %v1441 = vand.u32 %v477, 4294901760
    %v1442 = vsub.f32 %v477, %v1441
    %v1443 = vand.u32 %v1442, 4294901760
    %1444 = vmatmul.mubr.f32.gmra.mrb[0].mxu0 %v1443
    %v1445 = vpop.f32.mrb[0].mxu0
    %v1446 = vadd.f32 %v1246, %v1445
    %v1447 = vpop.f32.mrb[0].mxu0
    %v1448 = vadd.f32 %v1248, %v1447
    %1449 = vmatprep.mubr.f32.mxu0 0.0
    %v1450 = vand.u32 %v478, 4294901760
    %v1451 = vsub.f32 %v478, %v1450
    %v1452 = vand.u32 %v1451, 4294901760
    %1453 = vmatmul.mubr.f32.gmra.mrb[0].mxu0 %v1452
    %v1454 = vpop.f32.mrb[0].mxu0
    %v1455 = vadd.f32 %v1254, %v1454
    %v1456 = vpop.f32.mrb[0].mxu0
    %v1457 = vadd.f32 %v1256, %v1456
    %1458 = vmatprep.mubr.f32.mxu0 0.0
    %v1459 = vand.u32 %v479, 4294901760
    %v1460 = vsub.f32 %v479, %v1459
    %v1461 = vand.u32 %v1460, 4294901760
    %1462 = vmatmul.mubr.f32.gmra.mrb[0].mxu0 %v1461
    %v1463 = vpop.f32.mrb[0].mxu0
    %v1464 = vadd.f32 %v1262, %v1463
    %v1465 = vpop.f32.mrb[0].mxu0
    %v1466 = vadd.f32 %v1264, %v1465
    %1467 = vmatprep.mubr.f32.mxu0 0.0
    %v1468 = vand.u32 %v480, 4294901760
    %v1469 = vsub.f32 %v480, %v1468
    %v1470 = vand.u32 %v1469, 4294901760
    %1471 = vmatmul.mubr.f32.gmra.mrb[0].mxu0 %v1470
    %v1472 = vpop.f32.mrb[0].mxu0
    %v1473 = vadd.f32 %v1270, %v1472
    %v1474 = vpop.f32.mrb[0].mxu0
    %v1475 = vadd.f32 %v1272, %v1474
    %1476 = vmatprep.mubr.f32.mxu0 0.0
    %v1477 = vand.u32 %v481, 4294901760
    %v1478 = vsub.f32 %v481, %v1477
    %v1479 = vand.u32 %v1478, 4294901760
    %1480 = vmatmul.mubr.f32.gmra.mrb[0].mxu0 %v1479
    %v1481 = vpop.f32.mrb[0].mxu0
    %v1482 = vadd.f32 %v1278, %v1481
    %v1483 = vpop.f32.mrb[0].mxu0
    %v1484 = vadd.f32 %v1280, %v1483
    %1485 = vmatprep.mubr.f32.mxu0 0.0
    %v1486 = vand.u32 %v482, 4294901760
    %v1487 = vsub.f32 %v482, %v1486
    %v1488 = vand.u32 %v1487, 4294901760
    %1489 = vmatmul.mubr.f32.gmra.mrb[0].mxu0 %v1488
    %v1490 = vpop.f32.mrb[0].mxu0
    %v1491 = vadd.f32 %v1286, %v1490
    %v1492 = vpop.f32.mrb[0].mxu0
    %v1493 = vadd.f32 %v1288, %v1492
    %1494 = vdwg.mxu0
    %v1495 = vand.u32 %v484, 4294901760
    %v1496 = vsub.f32 %v484, %v1495
    %v1497 = vand.u32 %v1496, 4294901760
    %1498 = vmatprep.subr.mxu0 %v1497
    %v1499 = vand.u32 %v483, 4294901760
    %v1500 = vsub.f32 %v483, %v1499
    %v1501 = vand.u32 %v1500, 4294901760
    %1502 = vmatpush1.msra.mxu0 %v1501
    %v1503 = vand.u32 %v486, 4294901760
    %v1504 = vsub.f32 %v486, %v1503
    %v1505 = vand.u32 %v1504, 4294901760
    %1506 = vmatprep.subr.mxu0 %v1505
    %v1507 = vand.u32 %v485, 4294901760
    %v1508 = vsub.f32 %v485, %v1507
    %v1509 = vand.u32 %v1508, 4294901760
    %1510 = vmatpush1.msra.mxu0 %v1509
    %v1511 = vand.u32 %v488, 4294901760
    %v1512 = vsub.f32 %v488, %v1511
    %v1513 = vand.u32 %v1512, 4294901760
    %1514 = vmatprep.subr.mxu0 %v1513
    %v1515 = vand.u32 %v487, 4294901760
    %v1516 = vsub.f32 %v487, %v1515
    %v1517 = vand.u32 %v1516, 4294901760
    %1518 = vmatpush1.msra.mxu0 %v1517
    %v1519 = vand.u32 %v490, 4294901760
    %v1520 = vsub.f32 %v490, %v1519
    %v1521 = vand.u32 %v1520, 4294901760
    %1522 = vmatprep.subr.mxu0 %v1521
    %v1523 = vand.u32 %v489, 4294901760
    %v1524 = vsub.f32 %v489, %v1523
    %v1525 = vand.u32 %v1524, 4294901760
    %1526 = vmatpush1.msra.mxu0 %v1525
    %v1527 = vand.u32 %v492, 4294901760
    %v1528 = vsub.f32 %v492, %v1527
    %v1529 = vand.u32 %v1528, 4294901760
    %1530 = vmatprep.subr.mxu0 %v1529
    %v1531 = vand.u32 %v491, 4294901760
    %v1532 = vsub.f32 %v491, %v1531
    %v1533 = vand.u32 %v1532, 4294901760
    %1534 = vmatpush1.msra.mxu0 %v1533
    %v1535 = vand.u32 %v494, 4294901760
    %v1536 = vsub.f32 %v494, %v1535
    %v1537 = vand.u32 %v1536, 4294901760
    %1538 = vmatprep.subr.mxu0 %v1537
    %v1539 = vand.u32 %v493, 4294901760
    %v1540 = vsub.f32 %v493, %v1539
    %v1541 = vand.u32 %v1540, 4294901760
    %1542 = vmatpush1.msra.mxu0 %v1541
    %v1543 = vand.u32 %v496, 4294901760
    %v1544 = vsub.f32 %v496, %v1543
    %v1545 = vand.u32 %v1544, 4294901760
    %1546 = vmatprep.subr.mxu0 %v1545
    %v1547 = vand.u32 %v495, 4294901760
    %v1548 = vsub.f32 %v495, %v1547
    %v1549 = vand.u32 %v1548, 4294901760
    %1550 = vmatpush1.msra.mxu0 %v1549
    %v1551 = vand.u32 %v498, 4294901760
    %v1552 = vsub.f32 %v498, %v1551
    %v1553 = vand.u32 %v1552, 4294901760
    %1554 = vmatprep.subr.mxu0 %v1553
    %v1555 = vand.u32 %v497, 4294901760
    %v1556 = vsub.f32 %v497, %v1555
    %v1557 = vand.u32 %v1556, 4294901760
    %1558 = vmatpush1.msra.mxu0 %v1557
    %v1559 = vand.u32 %v500, 4294901760
    %v1560 = vsub.f32 %v500, %v1559
    %v1561 = vand.u32 %v1560, 4294901760
    %1562 = vmatprep.subr.mxu0 %v1561
    %v1563 = vand.u32 %v499, 4294901760
    %v1564 = vsub.f32 %v499, %v1563
    %v1565 = vand.u32 %v1564, 4294901760
    %1566 = vmatpush1.msra.mxu0 %v1565
    %v1567 = vand.u32 %v502, 4294901760
    %v1568 = vsub.f32 %v502, %v1567
    %v1569 = vand.u32 %v1568, 4294901760
    %1570 = vmatprep.subr.mxu0 %v1569
    %v1571 = vand.u32 %v501, 4294901760
    %v1572 = vsub.f32 %v501, %v1571
    %v1573 = vand.u32 %v1572, 4294901760
    %1574 = vmatpush1.msra.mxu0 %v1573
    %v1575 = vand.u32 %v504, 4294901760
    %v1576 = vsub.f32 %v504, %v1575
    %v1577 = vand.u32 %v1576, 4294901760
    %1578 = vmatprep.subr.mxu0 %v1577
    %v1579 = vand.u32 %v503, 4294901760
    %v1580 = vsub.f32 %v503, %v1579
    %v1581 = vand.u32 %v1580, 4294901760
    %1582 = vmatpush1.msra.mxu0 %v1581
    %v1583 = vand.u32 %v506, 4294901760
    %v1584 = vsub.f32 %v506, %v1583
    %v1585 = vand.u32 %v1584, 4294901760
    %1586 = vmatprep.subr.mxu0 %v1585
    %v1587 = vand.u32 %v505, 4294901760
    %v1588 = vsub.f32 %v505, %v1587
    %v1589 = vand.u32 %v1588, 4294901760
    %1590 = vmatpush1.msra.mxu0 %v1589
    %v1591 = vand.u32 %v508, 4294901760
    %v1592 = vsub.f32 %v508, %v1591
    %v1593 = vand.u32 %v1592, 4294901760
    %1594 = vmatprep.subr.mxu0 %v1593
    %v1595 = vand.u32 %v507, 4294901760
    %v1596 = vsub.f32 %v507, %v1595
    %v1597 = vand.u32 %v1596, 4294901760
    %1598 = vmatpush1.msra.mxu0 %v1597
    %v1599 = vand.u32 %v510, 4294901760
    %v1600 = vsub.f32 %v510, %v1599
    %v1601 = vand.u32 %v1600, 4294901760
    %1602 = vmatprep.subr.mxu0 %v1601
    %v1603 = vand.u32 %v509, 4294901760
    %v1604 = vsub.f32 %v509, %v1603
    %v1605 = vand.u32 %v1604, 4294901760
    %1606 = vmatpush1.msra.mxu0 %v1605
    %v1607 = vand.u32 %v512, 4294901760
    %v1608 = vsub.f32 %v512, %v1607
    %v1609 = vand.u32 %v1608, 4294901760
    %1610 = vmatprep.subr.mxu0 %v1609
    %v1611 = vand.u32 %v511, 4294901760
    %v1612 = vsub.f32 %v511, %v1611
    %v1613 = vand.u32 %v1612, 4294901760
    %1614 = vmatpush1.msra.mxu0 %v1613
    %v1615 = vand.u32 %v514, 4294901760
    %v1616 = vsub.f32 %v514, %v1615
    %v1617 = vand.u32 %v1616, 4294901760
    %1618 = vmatprep.subr.mxu0 %v1617
    %v1619 = vand.u32 %v513, 4294901760
    %v1620 = vsub.f32 %v513, %v1619
    %v1621 = vand.u32 %v1620, 4294901760
    %1622 = vmatpush1.msra.mxu0 %v1621
    %1623 = vmatprep.subr.mxu0 0.0
    %1624 = vmatpush1.msra.mxu0 0.0
    %1625 = vmatprep.subr.mxu0 0.0
    %1626 = vmatpush1.msra.mxu0 0.0
    %1627 = vmatprep.subr.mxu0 0.0
    %1628 = vmatpush1.msra.mxu0 0.0
    %1629 = vmatprep.subr.mxu0 0.0
    %1630 = vmatpush1.msra.mxu0 0.0
    %1631 = vmatprep.subr.mxu0 0.0
    %1632 = vmatpush1.msra.mxu0 0.0
    %1633 = vmatprep.subr.mxu0 0.0
    %1634 = vmatpush1.msra.mxu0 0.0
    %1635 = vmatprep.subr.mxu0 0.0
    %1636 = vmatpush1.msra.mxu0 0.0
    %1637 = vmatprep.subr.mxu0 0.0
    %1638 = vmatpush1.msra.mxu0 0.0
    %1639 = vmatprep.subr.mxu0 0.0
    %1640 = vmatpush1.msra.mxu0 0.0
    %1641 = vmatprep.subr.mxu0 0.0
    %1642 = vmatpush1.msra.mxu0 0.0
    %1643 = vmatprep.subr.mxu0 0.0
    %1644 = vmatpush1.msra.mxu0 0.0
    %1645 = vmatprep.subr.mxu0 0.0
    %1646 = vmatpush1.msra.mxu0 0.0
    %1647 = vmatprep.subr.mxu0 0.0
    %1648 = vmatpush1.msra.mxu0 0.0
    %1649 = vmatprep.subr.mxu0 0.0
    %1650 = vmatpush1.msra.mxu0 0.0
    %1651 = vmatprep.subr.mxu0 0.0
    %1652 = vmatpush1.msra.mxu0 0.0
    %1653 = vmatprep.subr.mxu0 0.0
    %1654 = vmatpush1.msra.mxu0 0.0
    %1655 = vmatprep.mubr.f32.mxu0 0.0
    %v1656 = vand.u32 %v471, 4294901760
    %1657 = vmatmul.mubr.f32.gmra.mrb[0].mxu0 %v1656
    %v1658 = vpop.f32.mrb[0].mxu0
    %v1659 = vadd.f32 %v1392, %v1658
    %v1660 = vpop.f32.mrb[0].mxu0
    %v1661 = vadd.f32 %v1394, %v1660
    %1662 = vmatprep.mubr.f32.mxu0 0.0
    %v1663 = vand.u32 %v472, 4294901760
    %1664 = vmatmul.mubr.f32.gmra.mrb[0].mxu0 %v1663
    %v1665 = vpop.f32.mrb[0].mxu0
    %v1666 = vadd.f32 %v1401, %v1665
    %v1667 = vpop.f32.mrb[0].mxu0
    %v1668 = vadd.f32 %v1403, %v1667
    %1669 = vmatprep.mubr.f32.mxu0 0.0
    %v1670 = vand.u32 %v473, 4294901760
    %1671 = vmatmul.mubr.f32.gmra.mrb[0].mxu0 %v1670
    %v1672 = vpop.f32.mrb[0].mxu0
    %v1673 = vadd.f32 %v1410, %v1672
    %v1674 = vpop.f32.mrb[0].mxu0
    %v1675 = vadd.f32 %v1412, %v1674
    %1676 = vmatprep.mubr.f32.mxu0 0.0
    %v1677 = vand.u32 %v474, 4294901760
    %1678 = vmatmul.mubr.f32.gmra.mrb[0].mxu0 %v1677
    %v1679 = vpop.f32.mrb[0].mxu0
    %v1680 = vadd.f32 %v1419, %v1679
    %v1681 = vpop.f32.mrb[0].mxu0
    %v1682 = vadd.f32 %v1421, %v1681
    %1683 = vmatprep.mubr.f32.mxu0 0.0
    %v1684 = vand.u32 %v475, 4294901760
    %1685 = vmatmul.mubr.f32.gmra.mrb[0].mxu0 %v1684
    %v1686 = vpop.f32.mrb[0].mxu0
    %v1687 = vadd.f32 %v1428, %v1686
    %v1688 = vpop.f32.mrb[0].mxu0
    %v1689 = vadd.f32 %v1430, %v1688
    %1690 = vmatprep.mubr.f32.mxu0 0.0
    %v1691 = vand.u32 %v476, 4294901760
    %1692 = vmatmul.mubr.f32.gmra.mrb[0].mxu0 %v1691
    %v1693 = vpop.f32.mrb[0].mxu0
    %v1694 = vadd.f32 %v1437, %v1693
    %v1695 = vpop.f32.mrb[0].mxu0
    %v1696 = vadd.f32 %v1439, %v1695
    %1697 = vmatprep.mubr.f32.mxu0 0.0
    %v1698 = vand.u32 %v477, 4294901760
    %1699 = vmatmul.mubr.f32.gmra.mrb[0].mxu0 %v1698
    %v1700 = vpop.f32.mrb[0].mxu0
    %v1701 = vadd.f32 %v1446, %v1700
    %v1702 = vpop.f32.mrb[0].mxu0
    %v1703 = vadd.f32 %v1448, %v1702
    %1704 = vmatprep.mubr.f32.mxu0 0.0
    %v1705 = vand.u32 %v478, 4294901760
    %1706 = vmatmul.mubr.f32.gmra.mrb[0].mxu0 %v1705
    %v1707 = vpop.f32.mrb[0].mxu0
    %v1708 = vadd.f32 %v1455, %v1707
    %v1709 = vpop.f32.mrb[0].mxu0
    %v1710 = vadd.f32 %v1457, %v1709
    %1711 = vmatprep.mubr.f32.mxu0 0.0
    %v1712 = vand.u32 %v479, 4294901760
    %1713 = vmatmul.mubr.f32.gmra.mrb[0].mxu0 %v1712
    %v1714 = vpop.f32.mrb[0].mxu0
    %v1715 = vadd.f32 %v1464, %v1714
    %v1716 = vpop.f32.mrb[0].mxu0
    %v1717 = vadd.f32 %v1466, %v1716
    %1718 = vmatprep.mubr.f32.mxu0 0.0
    %v1719 = vand.u32 %v480, 4294901760
    %1720 = vmatmul.mubr.f32.gmra.mrb[0].mxu0 %v1719
    %v1721 = vpop.f32.mrb[0].mxu0
    %v1722 = vadd.f32 %v1473, %v1721
    %v1723 = vpop.f32.mrb[0].mxu0
    %v1724 = vadd.f32 %v1475, %v1723
    %1725 = vmatprep.mubr.f32.mxu0 0.0
    %v1726 = vand.u32 %v481, 4294901760
    %1727 = vmatmul.mubr.f32.gmra.mrb[0].mxu0 %v1726
    %v1728 = vpop.f32.mrb[0].mxu0
    %v1729 = vadd.f32 %v1482, %v1728
    %v1730 = vpop.f32.mrb[0].mxu0
    %v1731 = vadd.f32 %v1484, %v1730
    %1732 = vmatprep.mubr.f32.mxu0 0.0
    %v1733 = vand.u32 %v482, 4294901760
    %1734 = vmatmul.mubr.f32.gmra.mrb[0].mxu0 %v1733
    %v1735 = vpop.f32.mrb[0].mxu0
    %v1736 = vadd.f32 %v1491, %v1735
    %v1737 = vpop.f32.mrb[0].mxu0
    %v1738 = vadd.f32 %v1493, %v1737
    %1739 = vdwg.mxu0
    %v1740 = vand.u32 %v484, 4294901760
    %1741 = vmatprep.subr.mxu0 %v1740
    %v1742 = vand.u32 %v483, 4294901760
    %1743 = vmatpush1.msra.mxu0 %v1742
    %v1744 = vand.u32 %v486, 4294901760
    %1745 = vmatprep.subr.mxu0 %v1744
    %v1746 = vand.u32 %v485, 4294901760
    %1747 = vmatpush1.msra.mxu0 %v1746
    %v1748 = vand.u32 %v488, 4294901760
    %1749 = vmatprep.subr.mxu0 %v1748
    %v1750 = vand.u32 %v487, 4294901760
    %1751 = vmatpush1.msra.mxu0 %v1750
    %v1752 = vand.u32 %v490, 4294901760
    %1753 = vmatprep.subr.mxu0 %v1752
    %v1754 = vand.u32 %v489, 4294901760
    %1755 = vmatpush1.msra.mxu0 %v1754
    %v1756 = vand.u32 %v492, 4294901760
    %1757 = vmatprep.subr.mxu0 %v1756
    %v1758 = vand.u32 %v491, 4294901760
    %1759 = vmatpush1.msra.mxu0 %v1758
    %v1760 = vand.u32 %v494, 4294901760
    %1761 = vmatprep.subr.mxu0 %v1760
    %v1762 = vand.u32 %v493, 4294901760
    %1763 = vmatpush1.msra.mxu0 %v1762
    %v1764 = vand.u32 %v496, 4294901760
    %1765 = vmatprep.subr.mxu0 %v1764
    %v1766 = vand.u32 %v495, 4294901760
    %1767 = vmatpush1.msra.mxu0 %v1766
    %v1768 = vand.u32 %v498, 4294901760
    %1769 = vmatprep.subr.mxu0 %v1768
    %v1770 = vand.u32 %v497, 4294901760
    %1771 = vmatpush1.msra.mxu0 %v1770
    %v1772 = vand.u32 %v500, 4294901760
    %1773 = vmatprep.subr.mxu0 %v1772
    %v1774 = vand.u32 %v499, 4294901760
    %1775 = vmatpush1.msra.mxu0 %v1774
    %v1776 = vand.u32 %v502, 4294901760
    %1777 = vmatprep.subr.mxu0 %v1776
    %v1778 = vand.u32 %v501, 4294901760
    %1779 = vmatpush1.msra.mxu0 %v1778
    %v1780 = vand.u32 %v504, 4294901760
    %1781 = vmatprep.subr.mxu0 %v1780
    %v1782 = vand.u32 %v503, 4294901760
    %1783 = vmatpush1.msra.mxu0 %v1782
    %v1784 = vand.u32 %v506, 4294901760
    %1785 = vmatprep.subr.mxu0 %v1784
    %v1786 = vand.u32 %v505, 4294901760
    %1787 = vmatpush1.msra.mxu0 %v1786
    %v1788 = vand.u32 %v508, 4294901760
    %1789 = vmatprep.subr.mxu0 %v1788
    %v1790 = vand.u32 %v507, 4294901760
    %1791 = vmatpush1.msra.mxu0 %v1790
    %v1792 = vand.u32 %v510, 4294901760
    %1793 = vmatprep.subr.mxu0 %v1792
    %v1794 = vand.u32 %v509, 4294901760
    %1795 = vmatpush1.msra.mxu0 %v1794
    %v1796 = vand.u32 %v512, 4294901760
    %1797 = vmatprep.subr.mxu0 %v1796
    %v1798 = vand.u32 %v511, 4294901760
    %1799 = vmatpush1.msra.mxu0 %v1798
    %v1800 = vand.u32 %v514, 4294901760
    %1801 = vmatprep.subr.mxu0 %v1800
    %v1802 = vand.u32 %v513, 4294901760
    %1803 = vmatpush1.msra.mxu0 %v1802
    %1804 = vmatprep.subr.mxu0 0.0
    %1805 = vmatpush1.msra.mxu0 0.0
    %1806 = vmatprep.subr.mxu0 0.0
    %1807 = vmatpush1.msra.mxu0 0.0
    %1808 = vmatprep.subr.mxu0 0.0
    %1809 = vmatpush1.msra.mxu0 0.0
    %1810 = vmatprep.subr.mxu0 0.0
    %1811 = vmatpush1.msra.mxu0 0.0
    %1812 = vmatprep.subr.mxu0 0.0
    %1813 = vmatpush1.msra.mxu0 0.0
    %1814 = vmatprep.subr.mxu0 0.0
    %1815 = vmatpush1.msra.mxu0 0.0
    %1816 = vmatprep.subr.mxu0 0.0
    %1817 = vmatpush1.msra.mxu0 0.0
    %1818 = vmatprep.subr.mxu0 0.0
    %1819 = vmatpush1.msra.mxu0 0.0
    %1820 = vmatprep.subr.mxu0 0.0
    %1821 = vmatpush1.msra.mxu0 0.0
    %1822 = vmatprep.subr.mxu0 0.0
    %1823 = vmatpush1.msra.mxu0 0.0
    %1824 = vmatprep.subr.mxu0 0.0
    %1825 = vmatpush1.msra.mxu0 0.0
    %1826 = vmatprep.subr.mxu0 0.0
    %1827 = vmatpush1.msra.mxu0 0.0
    %1828 = vmatprep.subr.mxu0 0.0
    %1829 = vmatpush1.msra.mxu0 0.0
    %1830 = vmatprep.subr.mxu0 0.0
    %1831 = vmatpush1.msra.mxu0 0.0
    %1832 = vmatprep.subr.mxu0 0.0
    %1833 = vmatpush1.msra.mxu0 0.0
    %1834 = vmatprep.subr.mxu0 0.0
    %1835 = vmatpush1.msra.mxu0 0.0
    %1836 = vmatprep.mubr.f32.mxu0 0.0
    %v1837 = vand.u32 %v471, 4294901760
    %1838 = vmatmul.mubr.f32.gmra.mrb[0].mxu0 %v1837
    %v1839 = vpop.f32.mrb[0].mxu0
    %v1840 = vadd.f32 %v1659, %v1839
    %v1841 = vpop.f32.mrb[0].mxu0
    %v1842 = vadd.f32 %v1661, %v1841
    %1843 = vmatprep.mubr.f32.mxu0 0.0
    %v1844 = vand.u32 %v472, 4294901760
    %1845 = vmatmul.mubr.f32.gmra.mrb[0].mxu0 %v1844
    %v1846 = vpop.f32.mrb[0].mxu0
    %v1847 = vadd.f32 %v1666, %v1846
    %v1848 = vpop.f32.mrb[0].mxu0
    %v1849 = vadd.f32 %v1668, %v1848
    %1850 = vmatprep.mubr.f32.mxu0 0.0
    %v1851 = vand.u32 %v473, 4294901760
    %1852 = vmatmul.mubr.f32.gmra.mrb[0].mxu0 %v1851
    %v1853 = vpop.f32.mrb[0].mxu0
    %v1854 = vadd.f32 %v1673, %v1853
    %v1855 = vpop.f32.mrb[0].mxu0
    %v1856 = vadd.f32 %v1675, %v1855
    %1857 = vmatprep.mubr.f32.mxu0 0.0
    %v1858 = vand.u32 %v474, 4294901760
    %1859 = vmatmul.mubr.f32.gmra.mrb[0].mxu0 %v1858
    %v1860 = vpop.f32.mrb[0].mxu0
    %v1861 = vadd.f32 %v1680, %v1860
    %v1862 = vpop.f32.mrb[0].mxu0
    %v1863 = vadd.f32 %v1682, %v1862
    %1864 = vmatprep.mubr.f32.mxu0 0.0
    %v1865 = vand.u32 %v475, 4294901760
    %1866 = vmatmul.mubr.f32.gmra.mrb[0].mxu0 %v1865
    %v1867 = vpop.f32.mrb[0].mxu0
    %v1868 = vadd.f32 %v1687, %v1867
    %v1869 = vpop.f32.mrb[0].mxu0
    %v1870 = vadd.f32 %v1689, %v1869
    %1871 = vmatprep.mubr.f32.mxu0 0.0
    %v1872 = vand.u32 %v476, 4294901760
    %1873 = vmatmul.mubr.f32.gmra.mrb[0].mxu0 %v1872
    %v1874 = vpop.f32.mrb[0].mxu0
    %v1875 = vadd.f32 %v1694, %v1874
    %v1876 = vpop.f32.mrb[0].mxu0
    %v1877 = vadd.f32 %v1696, %v1876
    %1878 = vmatprep.mubr.f32.mxu0 0.0
    %v1879 = vand.u32 %v477, 4294901760
    %1880 = vmatmul.mubr.f32.gmra.mrb[0].mxu0 %v1879
    %v1881 = vpop.f32.mrb[0].mxu0
    %v1882 = vadd.f32 %v1701, %v1881
    %v1883 = vpop.f32.mrb[0].mxu0
    %v1884 = vadd.f32 %v1703, %v1883
    %1885 = vmatprep.mubr.f32.mxu0 0.0
    %v1886 = vand.u32 %v478, 4294901760
    %1887 = vmatmul.mubr.f32.gmra.mrb[0].mxu0 %v1886
    %v1888 = vpop.f32.mrb[0].mxu0
    %v1889 = vadd.f32 %v1708, %v1888
    %v1890 = vpop.f32.mrb[0].mxu0
    %v1891 = vadd.f32 %v1710, %v1890
    %1892 = vmatprep.mubr.f32.mxu0 0.0
    %v1893 = vand.u32 %v479, 4294901760
    %1894 = vmatmul.mubr.f32.gmra.mrb[0].mxu0 %v1893
    %v1895 = vpop.f32.mrb[0].mxu0
    %v1896 = vadd.f32 %v1715, %v1895
    %v1897 = vpop.f32.mrb[0].mxu0
    %v1898 = vadd.f32 %v1717, %v1897
    %1899 = vmatprep.mubr.f32.mxu0 0.0
    %v1900 = vand.u32 %v480, 4294901760
    %1901 = vmatmul.mubr.f32.gmra.mrb[0].mxu0 %v1900
    %v1902 = vpop.f32.mrb[0].mxu0
    %v1903 = vadd.f32 %v1722, %v1902
    %v1904 = vpop.f32.mrb[0].mxu0
    %v1905 = vadd.f32 %v1724, %v1904
    %1906 = vmatprep.mubr.f32.mxu0 0.0
    %v1907 = vand.u32 %v481, 4294901760
    %1908 = vmatmul.mubr.f32.gmra.mrb[0].mxu0 %v1907
    %v1909 = vpop.f32.mrb[0].mxu0
    %v1910 = vadd.f32 %v1729, %v1909
    %v1911 = vpop.f32.mrb[0].mxu0
    %v1912 = vadd.f32 %v1731, %v1911
    %1913 = vmatprep.mubr.f32.mxu0 0.0
    %v1914 = vand.u32 %v482, 4294901760
    %1915 = vmatmul.mubr.f32.gmra.mrb[0].mxu0 %v1914
    %v1916 = vpop.f32.mrb[0].mxu0
    %v1917 = vadd.f32 %v1736, %v1916
    %v1918 = vpop.f32.mrb[0].mxu0
    %v1919 = vadd.f32 %v1738, %v1918
    %1920 = vdwg.mxu0
    %v1921 = vxor.u32 %v1842, 2147483648
    %v1922 = vxor.u32 %v1849, 2147483648
    %v1923 = vxor.u32 %v1856, 2147483648
    %v1924 = vxor.u32 %v1863, 2147483648
    %v1925 = vxor.u32 %v1870, 2147483648
    %v1926 = vxor.u32 %v1877, 2147483648
    %v1927 = vxor.u32 %v1884, 2147483648
    %v1928 = vxor.u32 %v1891, 2147483648
    %v1929 = vxor.u32 %v1898, 2147483648
    %v1930 = vxor.u32 %v1905, 2147483648
    %v1931 = vxor.u32 %v1912, 2147483648
    %v1932 = vxor.u32 %v1919, 2147483648
    %v1933 = vmul.f32 %v1921, 1.442695
    %v1934 = vpow.pop %v1933
    %v1935 = vmul.f32 %v1922, 1.442695
    %v1936 = vpow.pop %v1935
    %v1937 = vmul.f32 %v1923, 1.442695
    %v1938 = vpow.pop %v1937
    %v1939 = vmul.f32 %v1924, 1.442695
    %v1940 = vpow.pop %v1939
    %v1941 = vmul.f32 %v1925, 1.442695
    %v1942 = vpow.pop %v1941
    %v1943 = vmul.f32 %v1926, 1.442695
    %v1944 = vpow.pop %v1943
    %v1945 = vmul.f32 %v1927, 1.442695
    %v1946 = vpow.pop %v1945
    %v1947 = vmul.f32 %v1928, 1.442695
    %v1948 = vpow.pop %v1947
    %v1949 = vmul.f32 %v1929, 1.442695
    %v1950 = vpow.pop %v1949
    %v1951 = vmul.f32 %v1930, 1.442695
    %v1952 = vpow.pop %v1951
    %v1953 = vmul.f32 %v1931, 1.442695
    %v1954 = vpow.pop %v1953
    %v1955 = vmul.f32 %v1932, 1.442695
    %v1956 = vpow.pop %v1955
    %v1957 = vadd.f32 %v1934, 1.0
    %v1958 = vadd.f32 %v1936, 1.0
    %v1959 = vadd.f32 %v1938, 1.0
    %v1960 = vadd.f32 %v1940, 1.0
    %v1961 = vadd.f32 %v1942, 1.0
    %v1962 = vadd.f32 %v1944, 1.0
    %v1963 = vadd.f32 %v1946, 1.0
    %v1964 = vadd.f32 %v1948, 1.0
    %v1965 = vadd.f32 %v1950, 1.0
    %v1966 = vadd.f32 %v1952, 1.0
    %v1967 = vadd.f32 %v1954, 1.0
    %v1968 = vadd.f32 %v1956, 1.0
    %v1969 = vrcp.pop %v1957
    %v1970 = vmul.f32 1.0, %v1969
    %v1971 = vrcp.pop %v1958
    %v1972 = vmul.f32 1.0, %v1971
    %v1973 = vrcp.pop %v1959
    %v1974 = vmul.f32 1.0, %v1973
    %v1975 = vrcp.pop %v1960
    %v1976 = vmul.f32 1.0, %v1975
    %v1977 = vrcp.pop %v1961
    %v1978 = vmul.f32 1.0, %v1977
    %v1979 = vrcp.pop %v1962
    %v1980 = vmul.f32 1.0, %v1979
    %v1981 = vrcp.pop %v1963
    %v1982 = vmul.f32 1.0, %v1981
    %v1983 = vrcp.pop %v1964
    %v1984 = vmul.f32 1.0, %v1983
    %v1985 = vrcp.pop %v1965
    %v1986 = vmul.f32 1.0, %v1985
    %v1987 = vrcp.pop %v1966
    %v1988 = vmul.f32 1.0, %v1987
    %v1989 = vrcp.pop %v1967
    %v1990 = vmul.f32 1.0, %v1989
    %v1991 = vrcp.pop %v1968
    %v1992 = vmul.f32 1.0, %v1991
    %v1993 = vmul.f32 %v1840, %v1970
    %v1994 = vmul.f32 %v1847, %v1972
    %v1995 = vmul.f32 %v1854, %v1974
    %v1996 = vmul.f32 %v1861, %v1976
    %v1997 = vmul.f32 %v1868, %v1978
    %v1998 = vmul.f32 %v1875, %v1980
    %v1999 = vmul.f32 %v1882, %v1982
    %v2000 = vmul.f32 %v1889, %v1984
    %v2001 = vmul.f32 %v1896, %v1986
    %v2002 = vmul.f32 %v1903, %v1988
    %v2003 = vmul.f32 %v1910, %v1990
    %v2004 = vmul.f32 %v1917, %v1992
    %v2005 = vld [vmem:[#allocation3] sm:$0xff]
    %v2006 = vld [vmem:[#allocation3 + $0x8] sm:$0xff]
    %v2007 = vld [vmem:[#allocation3 + $0x10] sm:$0xff]
    %v2008 = vld [vmem:[#allocation3 + $0x18] sm:$0xff]
    %v2009 = vld [vmem:[#allocation3 + $0x20] sm:$0xff]
    %v2010 = vld [vmem:[#allocation3 + $0x28] sm:$0xff]
    %v2011 = vld [vmem:[#allocation3 + $0x30] sm:$0xff]
    %v2012 = vld [vmem:[#allocation3 + $0x38] sm:$0xff]
    %v2013 = vld [vmem:[#allocation3 + $0x40] sm:$0xff]
    %v2014 = vld [vmem:[#allocation3 + $0x48] sm:$0xff]
    %v2015 = vld [vmem:[#allocation3 + $0x50] sm:$0xff]
    %v2016 = vld [vmem:[#allocation3 + $0x58] sm:$0xff]
    %v2017 = vld [vmem:[#allocation9] sm:$0xff]
    %v2018 = vld [vmem:[#allocation9 + $0x8] sm:$0xff]
    %v2019 = vld [vmem:[#allocation9 + $0x10] sm:$0xff]
    %v2020 = vld [vmem:[#allocation9 + $0x18] sm:$0xff]
    %v2021 = vld [vmem:[#allocation9 + $0x20] sm:$0xff]
    %v2022 = vld [vmem:[#allocation9 + $0x28] sm:$0xff]
    %v2023 = vld [vmem:[#allocation9 + $0x30] sm:$0xff]
    %v2024 = vld [vmem:[#allocation9 + $0x38] sm:$0xff]
    %v2025 = vld [vmem:[#allocation9 + $0x40] sm:$0xff]
    %v2026 = vld [vmem:[#allocation9 + $0x48] sm:$0xff]
    %v2027 = vld [vmem:[#allocation9 + $0x50] sm:$0xff]
    %v2028 = vld [vmem:[#allocation9 + $0x58] sm:$0xff]
    %v2029 = vld [vmem:[#allocation9 + $0x60] sm:$0xff]
    %v2030 = vld [vmem:[#allocation9 + $0x68] sm:$0xff]
    %v2031 = vld [vmem:[#allocation9 + $0x70] sm:$0xff]
    %v2032 = vld [vmem:[#allocation9 + $0x78] sm:$0xff]
    %2033 = vmatprep.subr.mxu0 0.0
    %v2034 = vand.u32 %v2017, 4294901760
    %2035 = vmatpush1.msra.mxu0 %v2034
    %2036 = vmatprep.subr.mxu0 0.0
    %v2037 = vand.u32 %v2018, 4294901760
    %2038 = vmatpush1.msra.mxu0 %v2037
    %2039 = vmatprep.subr.mxu0 0.0
    %v2040 = vand.u32 %v2019, 4294901760
    %2041 = vmatpush1.msra.mxu0 %v2040
    %2042 = vmatprep.subr.mxu0 0.0
    %v2043 = vand.u32 %v2020, 4294901760
    %2044 = vmatpush1.msra.mxu0 %v2043
    %2045 = vmatprep.subr.mxu0 0.0
    %v2046 = vand.u32 %v2021, 4294901760
    %2047 = vmatpush1.msra.mxu0 %v2046
    %2048 = vmatprep.subr.mxu0 0.0
    %v2049 = vand.u32 %v2022, 4294901760
    %2050 = vmatpush1.msra.mxu0 %v2049
    %2051 = vmatprep.subr.mxu0 0.0
    %v2052 = vand.u32 %v2023, 4294901760
    %2053 = vmatpush1.msra.mxu0 %v2052
    %2054 = vmatprep.subr.mxu0 0.0
    %v2055 = vand.u32 %v2024, 4294901760
    %2056 = vmatpush1.msra.mxu0 %v2055
    %2057 = vmatprep.subr.mxu0 0.0
    %v2058 = vand.u32 %v2025, 4294901760
    %2059 = vmatpush1.msra.mxu0 %v2058
    %2060 = vmatprep.subr.mxu0 0.0
    %v2061 = vand.u32 %v2026, 4294901760
    %2062 = vmatpush1.msra.mxu0 %v2061
    %2063 = vmatprep.subr.mxu0 0.0
    %v2064 = vand.u32 %v2027, 4294901760
    %2065 = vmatpush1.msra.mxu0 %v2064
    %2066 = vmatprep.subr.mxu0 0.0
    %v2067 = vand.u32 %v2028, 4294901760
    %2068 = vmatpush1.msra.mxu0 %v2067
    %2069 = vmatprep.subr.mxu0 0.0
    %v2070 = vand.u32 %v2029, 4294901760
    %2071 = vmatpush1.msra.mxu0 %v2070
    %2072 = vmatprep.subr.mxu0 0.0
    %v2073 = vand.u32 %v2030, 4294901760
    %2074 = vmatpush1.msra.mxu0 %v2073
    %2075 = vmatprep.subr.mxu0 0.0
    %v2076 = vand.u32 %v2031, 4294901760
    %2077 = vmatpush1.msra.mxu0 %v2076
    %2078 = vmatprep.subr.mxu0 0.0
    %v2079 = vand.u32 %v2032, 4294901760
    %2080 = vmatpush1.msra.mxu0 %v2079
    %2081 = vmatprep.subr.mxu0 0.0
    %2082 = vmatpush1.msra.mxu0 0.0
    %2083 = vmatprep.subr.mxu0 0.0
    %2084 = vmatpush1.msra.mxu0 0.0
    %2085 = vmatprep.subr.mxu0 0.0
    %2086 = vmatpush1.msra.mxu0 0.0
    %2087 = vmatprep.subr.mxu0 0.0
    %2088 = vmatpush1.msra.mxu0 0.0
    %2089 = vmatprep.subr.mxu0 0.0
    %2090 = vmatpush1.msra.mxu0 0.0
    %2091 = vmatprep.subr.mxu0 0.0
    %2092 = vmatpush1.msra.mxu0 0.0
    %2093 = vmatprep.subr.mxu0 0.0
    %2094 = vmatpush1.msra.mxu0 0.0
    %2095 = vmatprep.subr.mxu0 0.0
    %2096 = vmatpush1.msra.mxu0 0.0
    %2097 = vmatprep.subr.mxu0 0.0
    %2098 = vmatpush1.msra.mxu0 0.0
    %2099 = vmatprep.subr.mxu0 0.0
    %2100 = vmatpush1.msra.mxu0 0.0
    %2101 = vmatprep.subr.mxu0 0.0
    %2102 = vmatpush1.msra.mxu0 0.0
    %2103 = vmatprep.subr.mxu0 0.0
    %2104 = vmatpush1.msra.mxu0 0.0
    %2105 = vmatprep.subr.mxu0 0.0
    %2106 = vmatpush1.msra.mxu0 0.0
    %2107 = vmatprep.subr.mxu0 0.0
    %2108 = vmatpush1.msra.mxu0 0.0
    %2109 = vmatprep.subr.mxu0 0.0
    %2110 = vmatpush1.msra.mxu0 0.0
    %2111 = vmatprep.subr.mxu0 0.0
    %2112 = vmatpush1.msra.mxu0 0.0
    %2113 = vmatprep.mubr.f32.mxu0 0.0
    %v2114 = vand.u32 %v1993, 4294901760
    %v2115 = vsub.f32 %v1993, %v2114
    %v2116 = vand.u32 %v2115, 4294901760
    %v2117 = vsub.f32 %v2115, %v2116
    %v2118 = vand.u32 %v2117, 4294901760
    %2119 = vmatmul.mubr.f32.gmra.mrb[0].mxu0 %v2118
    %v2120 = vpop.f32.mrb[0].mxu0
    %v2121 = vadd.f32 0.0, %v2120
    %v2122 = vpop.f32.mrb[0].mxu0
    %2123 = vmatprep.mubr.f32.mxu0 0.0
    %v2124 = vand.u32 %v1994, 4294901760
    %v2125 = vsub.f32 %v1994, %v2124
    %v2126 = vand.u32 %v2125, 4294901760
    %v2127 = vsub.f32 %v2125, %v2126
    %v2128 = vand.u32 %v2127, 4294901760
    %2129 = vmatmul.mubr.f32.gmra.mrb[0].mxu0 %v2128
    %v2130 = vpop.f32.mrb[0].mxu0
    %v2131 = vadd.f32 0.0, %v2130
    %v2132 = vpop.f32.mrb[0].mxu0
    %2133 = vmatprep.mubr.f32.mxu0 0.0
    %v2134 = vand.u32 %v1995, 4294901760
    %v2135 = vsub.f32 %v1995, %v2134
    %v2136 = vand.u32 %v2135, 4294901760
    %v2137 = vsub.f32 %v2135, %v2136
    %v2138 = vand.u32 %v2137, 4294901760
    %2139 = vmatmul.mubr.f32.gmra.mrb[0].mxu0 %v2138
    %v2140 = vpop.f32.mrb[0].mxu0
    %v2141 = vadd.f32 0.0, %v2140
    %v2142 = vpop.f32.mrb[0].mxu0
    %2143 = vmatprep.mubr.f32.mxu0 0.0
    %v2144 = vand.u32 %v1996, 4294901760
    %v2145 = vsub.f32 %v1996, %v2144
    %v2146 = vand.u32 %v2145, 4294901760
    %v2147 = vsub.f32 %v2145, %v2146
    %v2148 = vand.u32 %v2147, 4294901760
    %2149 = vmatmul.mubr.f32.gmra.mrb[0].mxu0 %v2148
    %v2150 = vpop.f32.mrb[0].mxu0
    %v2151 = vadd.f32 0.0, %v2150
    %v2152 = vpop.f32.mrb[0].mxu0
    %2153 = vmatprep.mubr.f32.mxu0 0.0
    %v2154 = vand.u32 %v1997, 4294901760
    %v2155 = vsub.f32 %v1997, %v2154
    %v2156 = vand.u32 %v2155, 4294901760
    %v2157 = vsub.f32 %v2155, %v2156
    %v2158 = vand.u32 %v2157, 4294901760
    %2159 = vmatmul.mubr.f32.gmra.mrb[0].mxu0 %v2158
    %v2160 = vpop.f32.mrb[0].mxu0
    %v2161 = vadd.f32 0.0, %v2160
    %v2162 = vpop.f32.mrb[0].mxu0
    %2163 = vmatprep.mubr.f32.mxu0 0.0
    %v2164 = vand.u32 %v1998, 4294901760
    %v2165 = vsub.f32 %v1998, %v2164
    %v2166 = vand.u32 %v2165, 4294901760
    %v2167 = vsub.f32 %v2165, %v2166
    %v2168 = vand.u32 %v2167, 4294901760
    %2169 = vmatmul.mubr.f32.gmra.mrb[0].mxu0 %v2168
    %v2170 = vpop.f32.mrb[0].mxu0
    %v2171 = vadd.f32 0.0, %v2170
    %v2172 = vpop.f32.mrb[0].mxu0
    %2173 = vmatprep.mubr.f32.mxu0 0.0
    %v2174 = vand.u32 %v1999, 4294901760
    %v2175 = vsub.f32 %v1999, %v2174
    %v2176 = vand.u32 %v2175, 4294901760
    %v2177 = vsub.f32 %v2175, %v2176
    %v2178 = vand.u32 %v2177, 4294901760
    %2179 = vmatmul.mubr.f32.gmra.mrb[0].mxu0 %v2178
    %v2180 = vpop.f32.mrb[0].mxu0
    %v2181 = vadd.f32 0.0, %v2180
    %v2182 = vpop.f32.mrb[0].mxu0
    %2183 = vmatprep.mubr.f32.mxu0 0.0
    %v2184 = vand.u32 %v2000, 4294901760
    %v2185 = vsub.f32 %v2000, %v2184
    %v2186 = vand.u32 %v2185, 4294901760
    %v2187 = vsub.f32 %v2185, %v2186
    %v2188 = vand.u32 %v2187, 4294901760
    %2189 = vmatmul.mubr.f32.gmra.mrb[0].mxu0 %v2188
    %v2190 = vpop.f32.mrb[0].mxu0
    %v2191 = vadd.f32 0.0, %v2190
    %v2192 = vpop.f32.mrb[0].mxu0
    %2193 = vmatprep.mubr.f32.mxu0 0.0
    %v2194 = vand.u32 %v2001, 4294901760
    %v2195 = vsub.f32 %v2001, %v2194
    %v2196 = vand.u32 %v2195, 4294901760
    %v2197 = vsub.f32 %v2195, %v2196
    %v2198 = vand.u32 %v2197, 4294901760
    %2199 = vmatmul.mubr.f32.gmra.mrb[0].mxu0 %v2198
    %v2200 = vpop.f32.mrb[0].mxu0
    %v2201 = vadd.f32 0.0, %v2200
    %v2202 = vpop.f32.mrb[0].mxu0
    %2203 = vmatprep.mubr.f32.mxu0 0.0
    %v2204 = vand.u32 %v2002, 4294901760
    %v2205 = vsub.f32 %v2002, %v2204
    %v2206 = vand.u32 %v2205, 4294901760
    %v2207 = vsub.f32 %v2205, %v2206
    %v2208 = vand.u32 %v2207, 4294901760
    %2209 = vmatmul.mubr.f32.gmra.mrb[0].mxu0 %v2208
    %v2210 = vpop.f32.mrb[0].mxu0
    %v2211 = vadd.f32 0.0, %v2210
    %v2212 = vpop.f32.mrb[0].mxu0
    %2213 = vmatprep.mubr.f32.mxu0 0.0
    %v2214 = vand.u32 %v2003, 4294901760
    %v2215 = vsub.f32 %v2003, %v2214
    %v2216 = vand.u32 %v2215, 4294901760
    %v2217 = vsub.f32 %v2215, %v2216
    %v2218 = vand.u32 %v2217, 4294901760
    %2219 = vmatmul.mubr.f32.gmra.mrb[0].mxu0 %v2218
    %v2220 = vpop.f32.mrb[0].mxu0
    %v2221 = vadd.f32 0.0, %v2220
    %v2222 = vpop.f32.mrb[0].mxu0
    %2223 = vmatprep.mubr.f32.mxu0 0.0
    %v2224 = vand.u32 %v2004, 4294901760
    %v2225 = vsub.f32 %v2004, %v2224
    %v2226 = vand.u32 %v2225, 4294901760
    %v2227 = vsub.f32 %v2225, %v2226
    %v2228 = vand.u32 %v2227, 4294901760
    %2229 = vmatmul.mubr.f32.gmra.mrb[0].mxu0 %v2228
    %v2230 = vpop.f32.mrb[0].mxu0
    %v2231 = vadd.f32 0.0, %v2230
    %v2232 = vpop.f32.mrb[0].mxu0
    %2233 = vdwg.mxu0
    %2234 = vmatprep.subr.mxu0 0.0
    %v2235 = vand.u32 %v2017, 4294901760
    %v2236 = vsub.f32 %v2017, %v2235
    %v2237 = vand.u32 %v2236, 4294901760
    %v2238 = vsub.f32 %v2236, %v2237
    %v2239 = vand.u32 %v2238, 4294901760
    %2240 = vmatpush1.msra.mxu0 %v2239
    %2241 = vmatprep.subr.mxu0 0.0
    %v2242 = vand.u32 %v2018, 4294901760
    %v2243 = vsub.f32 %v2018, %v2242
    %v2244 = vand.u32 %v2243, 4294901760
    %v2245 = vsub.f32 %v2243, %v2244
    %v2246 = vand.u32 %v2245, 4294901760
    %2247 = vmatpush1.msra.mxu0 %v2246
    %2248 = vmatprep.subr.mxu0 0.0
    %v2249 = vand.u32 %v2019, 4294901760
    %v2250 = vsub.f32 %v2019, %v2249
    %v2251 = vand.u32 %v2250, 4294901760
    %v2252 = vsub.f32 %v2250, %v2251
    %v2253 = vand.u32 %v2252, 4294901760
    %2254 = vmatpush1.msra.mxu0 %v2253
    %2255 = vmatprep.subr.mxu0 0.0
    %v2256 = vand.u32 %v2020, 4294901760
    %v2257 = vsub.f32 %v2020, %v2256
    %v2258 = vand.u32 %v2257, 4294901760
    %v2259 = vsub.f32 %v2257, %v2258
    %v2260 = vand.u32 %v2259, 4294901760
    %2261 = vmatpush1.msra.mxu0 %v2260
    %2262 = vmatprep.subr.mxu0 0.0
    %v2263 = vand.u32 %v2021, 4294901760
    %v2264 = vsub.f32 %v2021, %v2263
    %v2265 = vand.u32 %v2264, 4294901760
    %v2266 = vsub.f32 %v2264, %v2265
    %v2267 = vand.u32 %v2266, 4294901760
    %2268 = vmatpush1.msra.mxu0 %v2267
    %2269 = vmatprep.subr.mxu0 0.0
    %v2270 = vand.u32 %v2022, 4294901760
    %v2271 = vsub.f32 %v2022, %v2270
    %v2272 = vand.u32 %v2271, 4294901760
    %v2273 = vsub.f32 %v2271, %v2272
    %v2274 = vand.u32 %v2273, 4294901760
    %2275 = vmatpush1.msra.mxu0 %v2274
    %2276 = vmatprep.subr.mxu0 0.0
    %v2277 = vand.u32 %v2023, 4294901760
    %v2278 = vsub.f32 %v2023, %v2277
    %v2279 = vand.u32 %v2278, 4294901760
    %v2280 = vsub.f32 %v2278, %v2279
    %v2281 = vand.u32 %v2280, 4294901760
    %2282 = vmatpush1.msra.mxu0 %v2281
    %2283 = vmatprep.subr.mxu0 0.0
    %v2284 = vand.u32 %v2024, 4294901760
    %v2285 = vsub.f32 %v2024, %v2284
    %v2286 = vand.u32 %v2285, 4294901760
    %v2287 = vsub.f32 %v2285, %v2286
    %v2288 = vand.u32 %v2287, 4294901760
    %2289 = vmatpush1.msra.mxu0 %v2288
    %2290 = vmatprep.subr.mxu0 0.0
    %v2291 = vand.u32 %v2025, 4294901760
    %v2292 = vsub.f32 %v2025, %v2291
    %v2293 = vand.u32 %v2292, 4294901760
    %v2294 = vsub.f32 %v2292, %v2293
    %v2295 = vand.u32 %v2294, 4294901760
    %2296 = vmatpush1.msra.mxu0 %v2295
    %2297 = vmatprep.subr.mxu0 0.0
    %v2298 = vand.u32 %v2026, 4294901760
    %v2299 = vsub.f32 %v2026, %v2298
    %v2300 = vand.u32 %v2299, 4294901760
    %v2301 = vsub.f32 %v2299, %v2300
    %v2302 = vand.u32 %v2301, 4294901760
    %2303 = vmatpush1.msra.mxu0 %v2302
    %2304 = vmatprep.subr.mxu0 0.0
    %v2305 = vand.u32 %v2027, 4294901760
    %v2306 = vsub.f32 %v2027, %v2305
    %v2307 = vand.u32 %v2306, 4294901760
    %v2308 = vsub.f32 %v2306, %v2307
    %v2309 = vand.u32 %v2308, 4294901760
    %2310 = vmatpush1.msra.mxu0 %v2309
    %2311 = vmatprep.subr.mxu0 0.0
    %v2312 = vand.u32 %v2028, 4294901760
    %v2313 = vsub.f32 %v2028, %v2312
    %v2314 = vand.u32 %v2313, 4294901760
    %v2315 = vsub.f32 %v2313, %v2314
    %v2316 = vand.u32 %v2315, 4294901760
    %2317 = vmatpush1.msra.mxu0 %v2316
    %2318 = vmatprep.subr.mxu0 0.0
    %v2319 = vand.u32 %v2029, 4294901760
    %v2320 = vsub.f32 %v2029, %v2319
    %v2321 = vand.u32 %v2320, 4294901760
    %v2322 = vsub.f32 %v2320, %v2321
    %v2323 = vand.u32 %v2322, 4294901760
    %2324 = vmatpush1.msra.mxu0 %v2323
    %2325 = vmatprep.subr.mxu0 0.0
    %v2326 = vand.u32 %v2030, 4294901760
    %v2327 = vsub.f32 %v2030, %v2326
    %v2328 = vand.u32 %v2327, 4294901760
    %v2329 = vsub.f32 %v2327, %v2328
    %v2330 = vand.u32 %v2329, 4294901760
    %2331 = vmatpush1.msra.mxu0 %v2330
    %2332 = vmatprep.subr.mxu0 0.0
    %v2333 = vand.u32 %v2031, 4294901760
    %v2334 = vsub.f32 %v2031, %v2333
    %v2335 = vand.u32 %v2334, 4294901760
    %v2336 = vsub.f32 %v2334, %v2335
    %v2337 = vand.u32 %v2336, 4294901760
    %2338 = vmatpush1.msra.mxu0 %v2337
    %2339 = vmatprep.subr.mxu0 0.0
    %v2340 = vand.u32 %v2032, 4294901760
    %v2341 = vsub.f32 %v2032, %v2340
    %v2342 = vand.u32 %v2341, 4294901760
    %v2343 = vsub.f32 %v2341, %v2342
    %v2344 = vand.u32 %v2343, 4294901760
    %2345 = vmatpush1.msra.mxu0 %v2344
    %2346 = vmatprep.subr.mxu0 0.0
    %2347 = vmatpush1.msra.mxu0 0.0
    %2348 = vmatprep.subr.mxu0 0.0
    %2349 = vmatpush1.msra.mxu0 0.0
    %2350 = vmatprep.subr.mxu0 0.0
    %2351 = vmatpush1.msra.mxu0 0.0
    %2352 = vmatprep.subr.mxu0 0.0
    %2353 = vmatpush1.msra.mxu0 0.0
    %2354 = vmatprep.subr.mxu0 0.0
    %2355 = vmatpush1.msra.mxu0 0.0
    %2356 = vmatprep.subr.mxu0 0.0
    %2357 = vmatpush1.msra.mxu0 0.0
    %2358 = vmatprep.subr.mxu0 0.0
    %2359 = vmatpush1.msra.mxu0 0.0
    %2360 = vmatprep.subr.mxu0 0.0
    %2361 = vmatpush1.msra.mxu0 0.0
    %2362 = vmatprep.subr.mxu0 0.0
    %2363 = vmatpush1.msra.mxu0 0.0
    %2364 = vmatprep.subr.mxu0 0.0
    %2365 = vmatpush1.msra.mxu0 0.0
    %2366 = vmatprep.subr.mxu0 0.0
    %2367 = vmatpush1.msra.mxu0 0.0
    %2368 = vmatprep.subr.mxu0 0.0
    %2369 = vmatpush1.msra.mxu0 0.0
    %2370 = vmatprep.subr.mxu0 0.0
    %2371 = vmatpush1.msra.mxu0 0.0
    %2372 = vmatprep.subr.mxu0 0.0
    %2373 = vmatpush1.msra.mxu0 0.0
    %2374 = vmatprep.subr.mxu0 0.0
    %2375 = vmatpush1.msra.mxu0 0.0
    %2376 = vmatprep.subr.mxu0 0.0
    %2377 = vmatpush1.msra.mxu0 0.0
    %2378 = vmatprep.mubr.f32.mxu0 0.0
    %v2379 = vand.u32 %v1993, 4294901760
    %2380 = vmatmul.mubr.f32.gmra.mrb[0].mxu0 %v2379
    %v2381 = vpop.f32.mrb[0].mxu0
    %v2382 = vadd.f32 %v2121, %v2381
    %v2383 = vpop.f32.mrb[0].mxu0
    %2384 = vmatprep.mubr.f32.mxu0 0.0
    %v2385 = vand.u32 %v1994, 4294901760
    %2386 = vmatmul.mubr.f32.gmra.mrb[0].mxu0 %v2385
    %v2387 = vpop.f32.mrb[0].mxu0
    %v2388 = vadd.f32 %v2131, %v2387
    %v2389 = vpop.f32.mrb[0].mxu0
    %2390 = vmatprep.mubr.f32.mxu0 0.0
    %v2391 = vand.u32 %v1995, 4294901760
    %2392 = vmatmul.mubr.f32.gmra.mrb[0].mxu0 %v2391
    %v2393 = vpop.f32.mrb[0].mxu0
    %v2394 = vadd.f32 %v2141, %v2393
    %v2395 = vpop.f32.mrb[0].mxu0
    %2396 = vmatprep.mubr.f32.mxu0 0.0
    %v2397 = vand.u32 %v1996, 4294901760
    %2398 = vmatmul.mubr.f32.gmra.mrb[0].mxu0 %v2397
    %v2399 = vpop.f32.mrb[0].mxu0
    %v2400 = vadd.f32 %v2151, %v2399
    %v2401 = vpop.f32.mrb[0].mxu0
    %2402 = vmatprep.mubr.f32.mxu0 0.0
    %v2403 = vand.u32 %v1997, 4294901760
    %2404 = vmatmul.mubr.f32.gmra.mrb[0].mxu0 %v2403
    %v2405 = vpop.f32.mrb[0].mxu0
    %v2406 = vadd.f32 %v2161, %v2405
    %v2407 = vpop.f32.mrb[0].mxu0
    %2408 = vmatprep.mubr.f32.mxu0 0.0
    %v2409 = vand.u32 %v1998, 4294901760
    %2410 = vmatmul.mubr.f32.gmra.mrb[0].mxu0 %v2409
    %v2411 = vpop.f32.mrb[0].mxu0
    %v2412 = vadd.f32 %v2171, %v2411
    %v2413 = vpop.f32.mrb[0].mxu0
    %2414 = vmatprep.mubr.f32.mxu0 0.0
    %v2415 = vand.u32 %v1999, 4294901760
    %2416 = vmatmul.mubr.f32.gmra.mrb[0].mxu0 %v2415
    %v2417 = vpop.f32.mrb[0].mxu0
    %v2418 = vadd.f32 %v2181, %v2417
    %v2419 = vpop.f32.mrb[0].mxu0
    %2420 = vmatprep.mubr.f32.mxu0 0.0
    %v2421 = vand.u32 %v2000, 4294901760
    %2422 = vmatmul.mubr.f32.gmra.mrb[0].mxu0 %v2421
    %v2423 = vpop.f32.mrb[0].mxu0
    %v2424 = vadd.f32 %v2191, %v2423
    %v2425 = vpop.f32.mrb[0].mxu0
    %2426 = vmatprep.mubr.f32.mxu0 0.0
    %v2427 = vand.u32 %v2001, 4294901760
    %2428 = vmatmul.mubr.f32.gmra.mrb[0].mxu0 %v2427
    %v2429 = vpop.f32.mrb[0].mxu0
    %v2430 = vadd.f32 %v2201, %v2429
    %v2431 = vpop.f32.mrb[0].mxu0
    %2432 = vmatprep.mubr.f32.mxu0 0.0
    %v2433 = vand.u32 %v2002, 4294901760
    %2434 = vmatmul.mubr.f32.gmra.mrb[0].mxu0 %v2433
    %v2435 = vpop.f32.mrb[0].mxu0
    %v2436 = vadd.f32 %v2211, %v2435
    %v2437 = vpop.f32.mrb[0].mxu0
    %2438 = vmatprep.mubr.f32.mxu0 0.0
    %v2439 = vand.u32 %v2003, 4294901760
    %2440 = vmatmul.mubr.f32.gmra.mrb[0].mxu0 %v2439
    %v2441 = vpop.f32.mrb[0].mxu0
    %v2442 = vadd.f32 %v2221, %v2441
    %v2443 = vpop.f32.mrb[0].mxu0
    %2444 = vmatprep.mubr.f32.mxu0 0.0
    %v2445 = vand.u32 %v2004, 4294901760
    %2446 = vmatmul.mubr.f32.gmra.mrb[0].mxu0 %v2445
    %v2447 = vpop.f32.mrb[0].mxu0
    %v2448 = vadd.f32 %v2231, %v2447
    %v2449 = vpop.f32.mrb[0].mxu0
    %2450 = vdwg.mxu0
    %2451 = vmatprep.subr.mxu0 0.0
    %v2452 = vand.u32 %v2017, 4294901760
    %v2453 = vsub.f32 %v2017, %v2452
    %2454 = vmatpush1.msra.mxu0 %v2453
    %2455 = vmatprep.subr.mxu0 0.0
    %v2456 = vand.u32 %v2018, 4294901760
    %v2457 = vsub.f32 %v2018, %v2456
    %2458 = vmatpush1.msra.mxu0 %v2457
    %2459 = vmatprep.subr.mxu0 0.0
    %v2460 = vand.u32 %v2019, 4294901760
    %v2461 = vsub.f32 %v2019, %v2460
    %2462 = vmatpush1.msra.mxu0 %v2461
    %2463 = vmatprep.subr.mxu0 0.0
    %v2464 = vand.u32 %v2020, 4294901760
    %v2465 = vsub.f32 %v2020, %v2464
    %2466 = vmatpush1.msra.mxu0 %v2465
    %2467 = vmatprep.subr.mxu0 0.0
    %v2468 = vand.u32 %v2021, 4294901760
    %v2469 = vsub.f32 %v2021, %v2468
    %2470 = vmatpush1.msra.mxu0 %v2469
    %2471 = vmatprep.subr.mxu0 0.0
    %v2472 = vand.u32 %v2022, 4294901760
    %v2473 = vsub.f32 %v2022, %v2472
    %2474 = vmatpush1.msra.mxu0 %v2473
    %2475 = vmatprep.subr.mxu0 0.0
    %v2476 = vand.u32 %v2023, 4294901760
    %v2477 = vsub.f32 %v2023, %v2476
    %2478 = vmatpush1.msra.mxu0 %v2477
    %2479 = vmatprep.subr.mxu0 0.0
    %v2480 = vand.u32 %v2024, 4294901760
    %v2481 = vsub.f32 %v2024, %v2480
    %2482 = vmatpush1.msra.mxu0 %v2481
    %2483 = vmatprep.subr.mxu0 0.0
    %v2484 = vand.u32 %v2025, 4294901760
    %v2485 = vsub.f32 %v2025, %v2484
    %2486 = vmatpush1.msra.mxu0 %v2485
    %2487 = vmatprep.subr.mxu0 0.0
    %v2488 = vand.u32 %v2026, 4294901760
    %v2489 = vsub.f32 %v2026, %v2488
    %2490 = vmatpush1.msra.mxu0 %v2489
    %2491 = vmatprep.subr.mxu0 0.0
    %v2492 = vand.u32 %v2027, 4294901760
    %v2493 = vsub.f32 %v2027, %v2492
    %2494 = vmatpush1.msra.mxu0 %v2493
    %2495 = vmatprep.subr.mxu0 0.0
    %v2496 = vand.u32 %v2028, 4294901760
    %v2497 = vsub.f32 %v2028, %v2496
    %2498 = vmatpush1.msra.mxu0 %v2497
    %2499 = vmatprep.subr.mxu0 0.0
    %v2500 = vand.u32 %v2029, 4294901760
    %v2501 = vsub.f32 %v2029, %v2500
    %2502 = vmatpush1.msra.mxu0 %v2501
    %2503 = vmatprep.subr.mxu0 0.0
    %v2504 = vand.u32 %v2030, 4294901760
    %v2505 = vsub.f32 %v2030, %v2504
    %2506 = vmatpush1.msra.mxu0 %v2505
    %2507 = vmatprep.subr.mxu0 0.0
    %v2508 = vand.u32 %v2031, 4294901760
    %v2509 = vsub.f32 %v2031, %v2508
    %2510 = vmatpush1.msra.mxu0 %v2509
    %2511 = vmatprep.subr.mxu0 0.0
    %v2512 = vand.u32 %v2032, 4294901760
    %v2513 = vsub.f32 %v2032, %v2512
    %2514 = vmatpush1.msra.mxu0 %v2513
    %2515 = vmatprep.subr.mxu0 0.0
    %2516 = vmatpush1.msra.mxu0 0.0
    %2517 = vmatprep.subr.mxu0 0.0
    %2518 = vmatpush1.msra.mxu0 0.0
    %2519 = vmatprep.subr.mxu0 0.0
    %2520 = vmatpush1.msra.mxu0 0.0
    %2521 = vmatprep.subr.mxu0 0.0
    %2522 = vmatpush1.msra.mxu0 0.0
    %2523 = vmatprep.subr.mxu0 0.0
    %2524 = vmatpush1.msra.mxu0 0.0
    %2525 = vmatprep.subr.mxu0 0.0
    %2526 = vmatpush1.msra.mxu0 0.0
    %2527 = vmatprep.subr.mxu0 0.0
    %2528 = vmatpush1.msra.mxu0 0.0
    %2529 = vmatprep.subr.mxu0 0.0
    %2530 = vmatpush1.msra.mxu0 0.0
    %2531 = vmatprep.subr.mxu0 0.0
    %2532 = vmatpush1.msra.mxu0 0.0
    %2533 = vmatprep.subr.mxu0 0.0
    %2534 = vmatpush1.msra.mxu0 0.0
    %2535 = vmatprep.subr.mxu0 0.0
    %2536 = vmatpush1.msra.mxu0 0.0
    %2537 = vmatprep.subr.mxu0 0.0
    %2538 = vmatpush1.msra.mxu0 0.0
    %2539 = vmatprep.subr.mxu0 0.0
    %2540 = vmatpush1.msra.mxu0 0.0
    %2541 = vmatprep.subr.mxu0 0.0
    %2542 = vmatpush1.msra.mxu0 0.0
    %2543 = vmatprep.subr.mxu0 0.0
    %2544 = vmatpush1.msra.mxu0 0.0
    %2545 = vmatprep.subr.mxu0 0.0
    %2546 = vmatpush1.msra.mxu0 0.0
    %2547 = vmatprep.mubr.f32.mxu0 0.0
    %v2548 = vand.u32 %v1993, 4294901760
    %v2549 = vsub.f32 %v1993, %v2548
    %2550 = vmatmul.mubr.f32.gmra.mrb[0].mxu0 %v2549
    %v2551 = vpop.f32.mrb[0].mxu0
    %v2552 = vadd.f32 %v2382, %v2551
    %v2553 = vpop.f32.mrb[0].mxu0
    %2554 = vmatprep.mubr.f32.mxu0 0.0
    %v2555 = vand.u32 %v1994, 4294901760
    %v2556 = vsub.f32 %v1994, %v2555
    %2557 = vmatmul.mubr.f32.gmra.mrb[0].mxu0 %v2556
    %v2558 = vpop.f32.mrb[0].mxu0
    %v2559 = vadd.f32 %v2388, %v2558
    %v2560 = vpop.f32.mrb[0].mxu0
    %2561 = vmatprep.mubr.f32.mxu0 0.0
    %v2562 = vand.u32 %v1995, 4294901760
    %v2563 = vsub.f32 %v1995, %v2562
    %2564 = vmatmul.mubr.f32.gmra.mrb[0].mxu0 %v2563
    %v2565 = vpop.f32.mrb[0].mxu0
    %v2566 = vadd.f32 %v2394, %v2565
    %v2567 = vpop.f32.mrb[0].mxu0
    %2568 = vmatprep.mubr.f32.mxu0 0.0
    %v2569 = vand.u32 %v1996, 4294901760
    %v2570 = vsub.f32 %v1996, %v2569
    %2571 = vmatmul.mubr.f32.gmra.mrb[0].mxu0 %v2570
    %v2572 = vpop.f32.mrb[0].mxu0
    %v2573 = vadd.f32 %v2400, %v2572
    %v2574 = vpop.f32.mrb[0].mxu0
    %2575 = vmatprep.mubr.f32.mxu0 0.0
    %v2576 = vand.u32 %v1997, 4294901760
    %v2577 = vsub.f32 %v1997, %v2576
    %2578 = vmatmul.mubr.f32.gmra.mrb[0].mxu0 %v2577
    %v2579 = vpop.f32.mrb[0].mxu0
    %v2580 = vadd.f32 %v2406, %v2579
    %v2581 = vpop.f32.mrb[0].mxu0
    %2582 = vmatprep.mubr.f32.mxu0 0.0
    %v2583 = vand.u32 %v1998, 4294901760
    %v2584 = vsub.f32 %v1998, %v2583
    %2585 = vmatmul.mubr.f32.gmra.mrb[0].mxu0 %v2584
    %v2586 = vpop.f32.mrb[0].mxu0
    %v2587 = vadd.f32 %v2412, %v2586
    %v2588 = vpop.f32.mrb[0].mxu0
    %2589 = vmatprep.mubr.f32.mxu0 0.0
    %v2590 = vand.u32 %v1999, 4294901760
    %v2591 = vsub.f32 %v1999, %v2590
    %2592 = vmatmul.mubr.f32.gmra.mrb[0].mxu0 %v2591
    %v2593 = vpop.f32.mrb[0].mxu0
    %v2594 = vadd.f32 %v2418, %v2593
    %v2595 = vpop.f32.mrb[0].mxu0
    %2596 = vmatprep.mubr.f32.mxu0 0.0
    %v2597 = vand.u32 %v2000, 4294901760
    %v2598 = vsub.f32 %v2000, %v2597
    %2599 = vmatmul.mubr.f32.gmra.mrb[0].mxu0 %v2598
    %v2600 = vpop.f32.mrb[0].mxu0
    %v2601 = vadd.f32 %v2424, %v2600
    %v2602 = vpop.f32.mrb[0].mxu0
    %2603 = vmatprep.mubr.f32.mxu0 0.0
    %v2604 = vand.u32 %v2001, 4294901760
    %v2605 = vsub.f32 %v2001, %v2604
    %2606 = vmatmul.mubr.f32.gmra.mrb[0].mxu0 %v2605
    %v2607 = vpop.f32.mrb[0].mxu0
    %v2608 = vadd.f32 %v2430, %v2607
    %v2609 = vpop.f32.mrb[0].mxu0
    %2610 = vmatprep.mubr.f32.mxu0 0.0
    %v2611 = vand.u32 %v2002, 4294901760
    %v2612 = vsub.f32 %v2002, %v2611
    %2613 = vmatmul.mubr.f32.gmra.mrb[0].mxu0 %v2612
    %v2614 = vpop.f32.mrb[0].mxu0
    %v2615 = vadd.f32 %v2436, %v2614
    %v2616 = vpop.f32.mrb[0].mxu0
    %2617 = vmatprep.mubr.f32.mxu0 0.0
    %v2618 = vand.u32 %v2003, 4294901760
    %v2619 = vsub.f32 %v2003, %v2618
    %2620 = vmatmul.mubr.f32.gmra.mrb[0].mxu0 %v2619
    %v2621 = vpop.f32.mrb[0].mxu0
    %v2622 = vadd.f32 %v2442, %v2621
    %v2623 = vpop.f32.mrb[0].mxu0
    %2624 = vmatprep.mubr.f32.mxu0 0.0
    %v2625 = vand.u32 %v2004, 4294901760
    %v2626 = vsub.f32 %v2004, %v2625
    %2627 = vmatmul.mubr.f32.gmra.mrb[0].mxu0 %v2626
    %v2628 = vpop.f32.mrb[0].mxu0
    %v2629 = vadd.f32 %v2448, %v2628
    %v2630 = vpop.f32.mrb[0].mxu0
    %2631 = vdwg.mxu0
    %2632 = vmatprep.subr.mxu0 0.0
    %v2633 = vand.u32 %v2017, 4294901760
    %2634 = vmatpush1.msra.mxu0 %v2633
    %2635 = vmatprep.subr.mxu0 0.0
    %v2636 = vand.u32 %v2018, 4294901760
    %2637 = vmatpush1.msra.mxu0 %v2636
    %2638 = vmatprep.subr.mxu0 0.0
    %v2639 = vand.u32 %v2019, 4294901760
    %2640 = vmatpush1.msra.mxu0 %v2639
    %2641 = vmatprep.subr.mxu0 0.0
    %v2642 = vand.u32 %v2020, 4294901760
    %2643 = vmatpush1.msra.mxu0 %v2642
    %2644 = vmatprep.subr.mxu0 0.0
    %v2645 = vand.u32 %v2021, 4294901760
    %2646 = vmatpush1.msra.mxu0 %v2645
    %2647 = vmatprep.subr.mxu0 0.0
    %v2648 = vand.u32 %v2022, 4294901760
    %2649 = vmatpush1.msra.mxu0 %v2648
    %2650 = vmatprep.subr.mxu0 0.0
    %v2651 = vand.u32 %v2023, 4294901760
    %2652 = vmatpush1.msra.mxu0 %v2651
    %2653 = vmatprep.subr.mxu0 0.0
    %v2654 = vand.u32 %v2024, 4294901760
    %2655 = vmatpush1.msra.mxu0 %v2654
    %2656 = vmatprep.subr.mxu0 0.0
    %v2657 = vand.u32 %v2025, 4294901760
    %2658 = vmatpush1.msra.mxu0 %v2657
    %2659 = vmatprep.subr.mxu0 0.0
    %v2660 = vand.u32 %v2026, 4294901760
    %2661 = vmatpush1.msra.mxu0 %v2660
    %2662 = vmatprep.subr.mxu0 0.0
    %v2663 = vand.u32 %v2027, 4294901760
    %2664 = vmatpush1.msra.mxu0 %v2663
    %2665 = vmatprep.subr.mxu0 0.0
    %v2666 = vand.u32 %v2028, 4294901760
    %2667 = vmatpush1.msra.mxu0 %v2666
    %2668 = vmatprep.subr.mxu0 0.0
    %v2669 = vand.u32 %v2029, 4294901760
    %2670 = vmatpush1.msra.mxu0 %v2669
    %2671 = vmatprep.subr.mxu0 0.0
    %v2672 = vand.u32 %v2030, 4294901760
    %2673 = vmatpush1.msra.mxu0 %v2672
    %2674 = vmatprep.subr.mxu0 0.0
    %v2675 = vand.u32 %v2031, 4294901760
    %2676 = vmatpush1.msra.mxu0 %v2675
    %2677 = vmatprep.subr.mxu0 0.0
    %v2678 = vand.u32 %v2032, 4294901760
    %2679 = vmatpush1.msra.mxu0 %v2678
    %2680 = vmatprep.subr.mxu0 0.0
    %2681 = vmatpush1.msra.mxu0 0.0
    %2682 = vmatprep.subr.mxu0 0.0
    %2683 = vmatpush1.msra.mxu0 0.0
    %2684 = vmatprep.subr.mxu0 0.0
    %2685 = vmatpush1.msra.mxu0 0.0
    %2686 = vmatprep.subr.mxu0 0.0
    %2687 = vmatpush1.msra.mxu0 0.0
    %2688 = vmatprep.subr.mxu0 0.0
    %2689 = vmatpush1.msra.mxu0 0.0
    %2690 = vmatprep.subr.mxu0 0.0
    %2691 = vmatpush1.msra.mxu0 0.0
    %2692 = vmatprep.subr.mxu0 0.0
    %2693 = vmatpush1.msra.mxu0 0.0
    %2694 = vmatprep.subr.mxu0 0.0
    %2695 = vmatpush1.msra.mxu0 0.0
    %2696 = vmatprep.subr.mxu0 0.0
    %2697 = vmatpush1.msra.mxu0 0.0
    %2698 = vmatprep.subr.mxu0 0.0
    %2699 = vmatpush1.msra.mxu0 0.0
    %2700 = vmatprep.subr.mxu0 0.0
    %2701 = vmatpush1.msra.mxu0 0.0
    %2702 = vmatprep.subr.mxu0 0.0
    %2703 = vmatpush1.msra.mxu0 0.0
    %2704 = vmatprep.subr.mxu0 0.0
    %2705 = vmatpush1.msra.mxu0 0.0
    %2706 = vmatprep.subr.mxu0 0.0
    %2707 = vmatpush1.msra.mxu0 0.0
    %2708 = vmatprep.subr.mxu0 0.0
    %2709 = vmatpush1.msra.mxu0 0.0
    %2710 = vmatprep.subr.mxu0 0.0
    %2711 = vmatpush1.msra.mxu0 0.0
    %2712 = vmatprep.mubr.f32.mxu0 0.0
    %v2713 = vand.u32 %v1993, 4294901760
    %v2714 = vsub.f32 %v1993, %v2713
    %v2715 = vand.u32 %v2714, 4294901760
    %2716 = vmatmul.mubr.f32.gmra.mrb[0].mxu0 %v2715
    %v2717 = vpop.f32.mrb[0].mxu0
    %v2718 = vadd.f32 %v2552, %v2717
    %v2719 = vpop.f32.mrb[0].mxu0
    %2720 = vmatprep.mubr.f32.mxu0 0.0
    %v2721 = vand.u32 %v1994, 4294901760
    %v2722 = vsub.f32 %v1994, %v2721
    %v2723 = vand.u32 %v2722, 4294901760
    %2724 = vmatmul.mubr.f32.gmra.mrb[0].mxu0 %v2723
    %v2725 = vpop.f32.mrb[0].mxu0
    %v2726 = vadd.f32 %v2559, %v2725
    %v2727 = vpop.f32.mrb[0].mxu0
    %2728 = vmatprep.mubr.f32.mxu0 0.0
    %v2729 = vand.u32 %v1995, 4294901760
    %v2730 = vsub.f32 %v1995, %v2729
    %v2731 = vand.u32 %v2730, 4294901760
    %2732 = vmatmul.mubr.f32.gmra.mrb[0].mxu0 %v2731
    %v2733 = vpop.f32.mrb[0].mxu0
    %v2734 = vadd.f32 %v2566, %v2733
    %v2735 = vpop.f32.mrb[0].mxu0
    %2736 = vmatprep.mubr.f32.mxu0 0.0
    %v2737 = vand.u32 %v1996, 4294901760
    %v2738 = vsub.f32 %v1996, %v2737
    %v2739 = vand.u32 %v2738, 4294901760
    %2740 = vmatmul.mubr.f32.gmra.mrb[0].mxu0 %v2739
    %v2741 = vpop.f32.mrb[0].mxu0
    %v2742 = vadd.f32 %v2573, %v2741
    %v2743 = vpop.f32.mrb[0].mxu0
    %2744 = vmatprep.mubr.f32.mxu0 0.0
    %v2745 = vand.u32 %v1997, 4294901760
    %v2746 = vsub.f32 %v1997, %v2745
    %v2747 = vand.u32 %v2746, 4294901760
    %2748 = vmatmul.mubr.f32.gmra.mrb[0].mxu0 %v2747
    %v2749 = vpop.f32.mrb[0].mxu0
    %v2750 = vadd.f32 %v2580, %v2749
    %v2751 = vpop.f32.mrb[0].mxu0
    %2752 = vmatprep.mubr.f32.mxu0 0.0
    %v2753 = vand.u32 %v1998, 4294901760
    %v2754 = vsub.f32 %v1998, %v2753
    %v2755 = vand.u32 %v2754, 4294901760
    %2756 = vmatmul.mubr.f32.gmra.mrb[0].mxu0 %v2755
    %v2757 = vpop.f32.mrb[0].mxu0
    %v2758 = vadd.f32 %v2587, %v2757
    %v2759 = vpop.f32.mrb[0].mxu0
    %2760 = vmatprep.mubr.f32.mxu0 0.0
    %v2761 = vand.u32 %v1999, 4294901760
    %v2762 = vsub.f32 %v1999, %v2761
    %v2763 = vand.u32 %v2762, 4294901760
    %2764 = vmatmul.mubr.f32.gmra.mrb[0].mxu0 %v2763
    %v2765 = vpop.f32.mrb[0].mxu0
    %v2766 = vadd.f32 %v2594, %v2765
    %v2767 = vpop.f32.mrb[0].mxu0
    %2768 = vmatprep.mubr.f32.mxu0 0.0
    %v2769 = vand.u32 %v2000, 4294901760
    %v2770 = vsub.f32 %v2000, %v2769
    %v2771 = vand.u32 %v2770, 4294901760
    %2772 = vmatmul.mubr.f32.gmra.mrb[0].mxu0 %v2771
    %v2773 = vpop.f32.mrb[0].mxu0
    %v2774 = vadd.f32 %v2601, %v2773
    %v2775 = vpop.f32.mrb[0].mxu0
    %2776 = vmatprep.mubr.f32.mxu0 0.0
    %v2777 = vand.u32 %v2001, 4294901760
    %v2778 = vsub.f32 %v2001, %v2777
    %v2779 = vand.u32 %v2778, 4294901760
    %2780 = vmatmul.mubr.f32.gmra.mrb[0].mxu0 %v2779
    %v2781 = vpop.f32.mrb[0].mxu0
    %v2782 = vadd.f32 %v2608, %v2781
    %v2783 = vpop.f32.mrb[0].mxu0
    %2784 = vmatprep.mubr.f32.mxu0 0.0
    %v2785 = vand.u32 %v2002, 4294901760
    %v2786 = vsub.f32 %v2002, %v2785
    %v2787 = vand.u32 %v2786, 4294901760
    %2788 = vmatmul.mubr.f32.gmra.mrb[0].mxu0 %v2787
    %v2789 = vpop.f32.mrb[0].mxu0
    %v2790 = vadd.f32 %v2615, %v2789
    %v2791 = vpop.f32.mrb[0].mxu0
    %2792 = vmatprep.mubr.f32.mxu0 0.0
    %v2793 = vand.u32 %v2003, 4294901760
    %v2794 = vsub.f32 %v2003, %v2793
    %v2795 = vand.u32 %v2794, 4294901760
    %2796 = vmatmul.mubr.f32.gmra.mrb[0].mxu0 %v2795
    %v2797 = vpop.f32.mrb[0].mxu0
    %v2798 = vadd.f32 %v2622, %v2797
    %v2799 = vpop.f32.mrb[0].mxu0
    %2800 = vmatprep.mubr.f32.mxu0 0.0
    %v2801 = vand.u32 %v2004, 4294901760
    %v2802 = vsub.f32 %v2004, %v2801
    %v2803 = vand.u32 %v2802, 4294901760
    %2804 = vmatmul.mubr.f32.gmra.mrb[0].mxu0 %v2803
    %v2805 = vpop.f32.mrb[0].mxu0
    %v2806 = vadd.f32 %v2629, %v2805
    %v2807 = vpop.f32.mrb[0].mxu0
    %2808 = vdwg.mxu0
    %2809 = vmatprep.subr.mxu0 0.0
    %v2810 = vand.u32 %v2017, 4294901760
    %v2811 = vsub.f32 %v2017, %v2810
    %v2812 = vand.u32 %v2811, 4294901760
    %2813 = vmatpush1.msra.mxu0 %v2812
    %2814 = vmatprep.subr.mxu0 0.0
    %v2815 = vand.u32 %v2018, 4294901760
    %v2816 = vsub.f32 %v2018, %v2815
    %v2817 = vand.u32 %v2816, 4294901760
    %2818 = vmatpush1.msra.mxu0 %v2817
    %2819 = vmatprep.subr.mxu0 0.0
    %v2820 = vand.u32 %v2019, 4294901760
    %v2821 = vsub.f32 %v2019, %v2820
    %v2822 = vand.u32 %v2821, 4294901760
    %2823 = vmatpush1.msra.mxu0 %v2822
    %2824 = vmatprep.subr.mxu0 0.0
    %v2825 = vand.u32 %v2020, 4294901760
    %v2826 = vsub.f32 %v2020, %v2825
    %v2827 = vand.u32 %v2826, 4294901760
    %2828 = vmatpush1.msra.mxu0 %v2827
    %2829 = vmatprep.subr.mxu0 0.0
    %v2830 = vand.u32 %v2021, 4294901760
    %v2831 = vsub.f32 %v2021, %v2830
    %v2832 = vand.u32 %v2831, 4294901760
    %2833 = vmatpush1.msra.mxu0 %v2832
    %2834 = vmatprep.subr.mxu0 0.0
    %v2835 = vand.u32 %v2022, 4294901760
    %v2836 = vsub.f32 %v2022, %v2835
    %v2837 = vand.u32 %v2836, 4294901760
    %2838 = vmatpush1.msra.mxu0 %v2837
    %2839 = vmatprep.subr.mxu0 0.0
    %v2840 = vand.u32 %v2023, 4294901760
    %v2841 = vsub.f32 %v2023, %v2840
    %v2842 = vand.u32 %v2841, 4294901760
    %2843 = vmatpush1.msra.mxu0 %v2842
    %2844 = vmatprep.subr.mxu0 0.0
    %v2845 = vand.u32 %v2024, 4294901760
    %v2846 = vsub.f32 %v2024, %v2845
    %v2847 = vand.u32 %v2846, 4294901760
    %2848 = vmatpush1.msra.mxu0 %v2847
    %2849 = vmatprep.subr.mxu0 0.0
    %v2850 = vand.u32 %v2025, 4294901760
    %v2851 = vsub.f32 %v2025, %v2850
    %v2852 = vand.u32 %v2851, 4294901760
    %2853 = vmatpush1.msra.mxu0 %v2852
    %2854 = vmatprep.subr.mxu0 0.0
    %v2855 = vand.u32 %v2026, 4294901760
    %v2856 = vsub.f32 %v2026, %v2855
    %v2857 = vand.u32 %v2856, 4294901760
    %2858 = vmatpush1.msra.mxu0 %v2857
    %2859 = vmatprep.subr.mxu0 0.0
    %v2860 = vand.u32 %v2027, 4294901760
    %v2861 = vsub.f32 %v2027, %v2860
    %v2862 = vand.u32 %v2861, 4294901760
    %2863 = vmatpush1.msra.mxu0 %v2862
    %2864 = vmatprep.subr.mxu0 0.0
    %v2865 = vand.u32 %v2028, 4294901760
    %v2866 = vsub.f32 %v2028, %v2865
    %v2867 = vand.u32 %v2866, 4294901760
    %2868 = vmatpush1.msra.mxu0 %v2867
    %2869 = vmatprep.subr.mxu0 0.0
    %v2870 = vand.u32 %v2029, 4294901760
    %v2871 = vsub.f32 %v2029, %v2870
    %v2872 = vand.u32 %v2871, 4294901760
    %2873 = vmatpush1.msra.mxu0 %v2872
    %2874 = vmatprep.subr.mxu0 0.0
    %v2875 = vand.u32 %v2030, 4294901760
    %v2876 = vsub.f32 %v2030, %v2875
    %v2877 = vand.u32 %v2876, 4294901760
    %2878 = vmatpush1.msra.mxu0 %v2877
    %2879 = vmatprep.subr.mxu0 0.0
    %v2880 = vand.u32 %v2031, 4294901760
    %v2881 = vsub.f32 %v2031, %v2880
    %v2882 = vand.u32 %v2881, 4294901760
    %2883 = vmatpush1.msra.mxu0 %v2882
    %2884 = vmatprep.subr.mxu0 0.0
    %v2885 = vand.u32 %v2032, 4294901760
    %v2886 = vsub.f32 %v2032, %v2885
    %v2887 = vand.u32 %v2886, 4294901760
    %2888 = vmatpush1.msra.mxu0 %v2887
    %2889 = vmatprep.subr.mxu0 0.0
    %2890 = vmatpush1.msra.mxu0 0.0
    %2891 = vmatprep.subr.mxu0 0.0
    %2892 = vmatpush1.msra.mxu0 0.0
    %2893 = vmatprep.subr.mxu0 0.0
    %2894 = vmatpush1.msra.mxu0 0.0
    %2895 = vmatprep.subr.mxu0 0.0
    %2896 = vmatpush1.msra.mxu0 0.0
    %2897 = vmatprep.subr.mxu0 0.0
    %2898 = vmatpush1.msra.mxu0 0.0
    %2899 = vmatprep.subr.mxu0 0.0
    %2900 = vmatpush1.msra.mxu0 0.0
    %2901 = vmatprep.subr.mxu0 0.0
    %2902 = vmatpush1.msra.mxu0 0.0
    %2903 = vmatprep.subr.mxu0 0.0
    %2904 = vmatpush1.msra.mxu0 0.0
    %2905 = vmatprep.subr.mxu0 0.0
    %2906 = vmatpush1.msra.mxu0 0.0
    %2907 = vmatprep.subr.mxu0 0.0
    %2908 = vmatpush1.msra.mxu0 0.0
    %2909 = vmatprep.subr.mxu0 0.0
    %2910 = vmatpush1.msra.mxu0 0.0
    %2911 = vmatprep.subr.mxu0 0.0
    %2912 = vmatpush1.msra.mxu0 0.0
    %2913 = vmatprep.subr.mxu0 0.0
    %2914 = vmatpush1.msra.mxu0 0.0
    %2915 = vmatprep.subr.mxu0 0.0
    %2916 = vmatpush1.msra.mxu0 0.0
    %2917 = vmatprep.subr.mxu0 0.0
    %2918 = vmatpush1.msra.mxu0 0.0
    %2919 = vmatprep.subr.mxu0 0.0
    %2920 = vmatpush1.msra.mxu0 0.0
    %2921 = vmatprep.mubr.f32.mxu0 0.0
    %v2922 = vand.u32 %v1993, 4294901760
    %2923 = vmatmul.mubr.f32.gmra.mrb[0].mxu0 %v2922
    %v2924 = vpop.f32.mrb[0].mxu0
    %v2925 = vadd.f32 %v2718, %v2924
    %v2926 = vpop.f32.mrb[0].mxu0
    %2927 = vmatprep.mubr.f32.mxu0 0.0
    %v2928 = vand.u32 %v1994, 4294901760
    %2929 = vmatmul.mubr.f32.gmra.mrb[0].mxu0 %v2928
    %v2930 = vpop.f32.mrb[0].mxu0
    %v2931 = vadd.f32 %v2726, %v2930
    %v2932 = vpop.f32.mrb[0].mxu0
    %2933 = vmatprep.mubr.f32.mxu0 0.0
    %v2934 = vand.u32 %v1995, 4294901760
    %2935 = vmatmul.mubr.f32.gmra.mrb[0].mxu0 %v2934
    %v2936 = vpop.f32.mrb[0].mxu0
    %v2937 = vadd.f32 %v2734, %v2936
    %v2938 = vpop.f32.mrb[0].mxu0
    %2939 = vmatprep.mubr.f32.mxu0 0.0
    %v2940 = vand.u32 %v1996, 4294901760
    %2941 = vmatmul.mubr.f32.gmra.mrb[0].mxu0 %v2940
    %v2942 = vpop.f32.mrb[0].mxu0
    %v2943 = vadd.f32 %v2742, %v2942
    %v2944 = vpop.f32.mrb[0].mxu0
    %2945 = vmatprep.mubr.f32.mxu0 0.0
    %v2946 = vand.u32 %v1997, 4294901760
    %2947 = vmatmul.mubr.f32.gmra.mrb[0].mxu0 %v2946
    %v2948 = vpop.f32.mrb[0].mxu0
    %v2949 = vadd.f32 %v2750, %v2948
    %v2950 = vpop.f32.mrb[0].mxu0
    %2951 = vmatprep.mubr.f32.mxu0 0.0
    %v2952 = vand.u32 %v1998, 4294901760
    %2953 = vmatmul.mubr.f32.gmra.mrb[0].mxu0 %v2952
    %v2954 = vpop.f32.mrb[0].mxu0
    %v2955 = vadd.f32 %v2758, %v2954
    %v2956 = vpop.f32.mrb[0].mxu0
    %2957 = vmatprep.mubr.f32.mxu0 0.0
    %v2958 = vand.u32 %v1999, 4294901760
    %2959 = vmatmul.mubr.f32.gmra.mrb[0].mxu0 %v2958
    %v2960 = vpop.f32.mrb[0].mxu0
    %v2961 = vadd.f32 %v2766, %v2960
    %v2962 = vpop.f32.mrb[0].mxu0
    %2963 = vmatprep.mubr.f32.mxu0 0.0
    %v2964 = vand.u32 %v2000, 4294901760
    %2965 = vmatmul.mubr.f32.gmra.mrb[0].mxu0 %v2964
    %v2966 = vpop.f32.mrb[0].mxu0
    %v2967 = vadd.f32 %v2774, %v2966
    %v2968 = vpop.f32.mrb[0].mxu0
    %2969 = vmatprep.mubr.f32.mxu0 0.0
    %v2970 = vand.u32 %v2001, 4294901760
    %2971 = vmatmul.mubr.f32.gmra.mrb[0].mxu0 %v2970
    %v2972 = vpop.f32.mrb[0].mxu0
    %v2973 = vadd.f32 %v2782, %v2972
    %v2974 = vpop.f32.mrb[0].mxu0
    %2975 = vmatprep.mubr.f32.mxu0 0.0
    %v2976 = vand.u32 %v2002, 4294901760
    %2977 = vmatmul.mubr.f32.gmra.mrb[0].mxu0 %v2976
    %v2978 = vpop.f32.mrb[0].mxu0
    %v2979 = vadd.f32 %v2790, %v2978
    %v2980 = vpop.f32.mrb[0].mxu0
    %2981 = vmatprep.mubr.f32.mxu0 0.0
    %v2982 = vand.u32 %v2003, 4294901760
    %2983 = vmatmul.mubr.f32.gmra.mrb[0].mxu0 %v2982
    %v2984 = vpop.f32.mrb[0].mxu0
    %v2985 = vadd.f32 %v2798, %v2984
    %v2986 = vpop.f32.mrb[0].mxu0
    %2987 = vmatprep.mubr.f32.mxu0 0.0
    %v2988 = vand.u32 %v2004, 4294901760
    %2989 = vmatmul.mubr.f32.gmra.mrb[0].mxu0 %v2988
    %v2990 = vpop.f32.mrb[0].mxu0
    %v2991 = vadd.f32 %v2806, %v2990
    %v2992 = vpop.f32.mrb[0].mxu0
    %2993 = vdwg.mxu0
    %2994 = vmatprep.subr.mxu0 0.0
    %v2995 = vand.u32 %v2017, 4294901760
    %2996 = vmatpush1.msra.mxu0 %v2995
    %2997 = vmatprep.subr.mxu0 0.0
    %v2998 = vand.u32 %v2018, 4294901760
    %2999 = vmatpush1.msra.mxu0 %v2998
    %3000 = vmatprep.subr.mxu0 0.0
    %v3001 = vand.u32 %v2019, 4294901760
    %3002 = vmatpush1.msra.mxu0 %v3001
    %3003 = vmatprep.subr.mxu0 0.0
    %v3004 = vand.u32 %v2020, 4294901760
    %3005 = vmatpush1.msra.mxu0 %v3004
    %3006 = vmatprep.subr.mxu0 0.0
    %v3007 = vand.u32 %v2021, 4294901760
    %3008 = vmatpush1.msra.mxu0 %v3007
    %3009 = vmatprep.subr.mxu0 0.0
    %v3010 = vand.u32 %v2022, 4294901760
    %3011 = vmatpush1.msra.mxu0 %v3010
    %3012 = vmatprep.subr.mxu0 0.0
    %v3013 = vand.u32 %v2023, 4294901760
    %3014 = vmatpush1.msra.mxu0 %v3013
    %3015 = vmatprep.subr.mxu0 0.0
    %v3016 = vand.u32 %v2024, 4294901760
    %3017 = vmatpush1.msra.mxu0 %v3016
    %3018 = vmatprep.subr.mxu0 0.0
    %v3019 = vand.u32 %v2025, 4294901760
    %3020 = vmatpush1.msra.mxu0 %v3019
    %3021 = vmatprep.subr.mxu0 0.0
    %v3022 = vand.u32 %v2026, 4294901760
    %3023 = vmatpush1.msra.mxu0 %v3022
    %3024 = vmatprep.subr.mxu0 0.0
    %v3025 = vand.u32 %v2027, 4294901760
    %3026 = vmatpush1.msra.mxu0 %v3025
    %3027 = vmatprep.subr.mxu0 0.0
    %v3028 = vand.u32 %v2028, 4294901760
    %3029 = vmatpush1.msra.mxu0 %v3028
    %3030 = vmatprep.subr.mxu0 0.0
    %v3031 = vand.u32 %v2029, 4294901760
    %3032 = vmatpush1.msra.mxu0 %v3031
    %3033 = vmatprep.subr.mxu0 0.0
    %v3034 = vand.u32 %v2030, 4294901760
    %3035 = vmatpush1.msra.mxu0 %v3034
    %3036 = vmatprep.subr.mxu0 0.0
    %v3037 = vand.u32 %v2031, 4294901760
    %3038 = vmatpush1.msra.mxu0 %v3037
    %3039 = vmatprep.subr.mxu0 0.0
    %v3040 = vand.u32 %v2032, 4294901760
    %3041 = vmatpush1.msra.mxu0 %v3040
    %3042 = vmatprep.subr.mxu0 0.0
    %3043 = vmatpush1.msra.mxu0 0.0
    %3044 = vmatprep.subr.mxu0 0.0
    %3045 = vmatpush1.msra.mxu0 0.0
    %3046 = vmatprep.subr.mxu0 0.0
    %3047 = vmatpush1.msra.mxu0 0.0
    %3048 = vmatprep.subr.mxu0 0.0
    %3049 = vmatpush1.msra.mxu0 0.0
    %3050 = vmatprep.subr.mxu0 0.0
    %3051 = vmatpush1.msra.mxu0 0.0
    %3052 = vmatprep.subr.mxu0 0.0
    %3053 = vmatpush1.msra.mxu0 0.0
    %3054 = vmatprep.subr.mxu0 0.0
    %3055 = vmatpush1.msra.mxu0 0.0
    %3056 = vmatprep.subr.mxu0 0.0
    %3057 = vmatpush1.msra.mxu0 0.0
    %3058 = vmatprep.subr.mxu0 0.0
    %3059 = vmatpush1.msra.mxu0 0.0
    %3060 = vmatprep.subr.mxu0 0.0
    %3061 = vmatpush1.msra.mxu0 0.0
    %3062 = vmatprep.subr.mxu0 0.0
    %3063 = vmatpush1.msra.mxu0 0.0
    %3064 = vmatprep.subr.mxu0 0.0
    %3065 = vmatpush1.msra.mxu0 0.0
    %3066 = vmatprep.subr.mxu0 0.0
    %3067 = vmatpush1.msra.mxu0 0.0
    %3068 = vmatprep.subr.mxu0 0.0
    %3069 = vmatpush1.msra.mxu0 0.0
    %3070 = vmatprep.subr.mxu0 0.0
    %3071 = vmatpush1.msra.mxu0 0.0
    %3072 = vmatprep.subr.mxu0 0.0
    %3073 = vmatpush1.msra.mxu0 0.0
    %3074 = vmatprep.mubr.f32.mxu0 0.0
    %v3075 = vand.u32 %v1993, 4294901760
    %3076 = vmatmul.mubr.f32.gmra.mrb[0].mxu0 %v3075
    %v3077 = vpop.f32.mrb[0].mxu0
    %v3078 = vadd.f32 %v2925, %v3077
    %v3079 = vpop.f32.mrb[0].mxu0
    %3080 = vmatprep.mubr.f32.mxu0 0.0
    %v3081 = vand.u32 %v1994, 4294901760
    %3082 = vmatmul.mubr.f32.gmra.mrb[0].mxu0 %v3081
    %v3083 = vpop.f32.mrb[0].mxu0
    %v3084 = vadd.f32 %v2931, %v3083
    %v3085 = vpop.f32.mrb[0].mxu0
    %3086 = vmatprep.mubr.f32.mxu0 0.0
    %v3087 = vand.u32 %v1995, 4294901760
    %3088 = vmatmul.mubr.f32.gmra.mrb[0].mxu0 %v3087
    %v3089 = vpop.f32.mrb[0].mxu0
    %v3090 = vadd.f32 %v2937, %v3089
    %v3091 = vpop.f32.mrb[0].mxu0
    %3092 = vmatprep.mubr.f32.mxu0 0.0
    %v3093 = vand.u32 %v1996, 4294901760
    %3094 = vmatmul.mubr.f32.gmra.mrb[0].mxu0 %v3093
    %v3095 = vpop.f32.mrb[0].mxu0
    %v3096 = vadd.f32 %v2943, %v3095
    %v3097 = vpop.f32.mrb[0].mxu0
    %3098 = vmatprep.mubr.f32.mxu0 0.0
    %v3099 = vand.u32 %v1997, 4294901760
    %3100 = vmatmul.mubr.f32.gmra.mrb[0].mxu0 %v3099
    %v3101 = vpop.f32.mrb[0].mxu0
    %v3102 = vadd.f32 %v2949, %v3101
    %v3103 = vpop.f32.mrb[0].mxu0
    %3104 = vmatprep.mubr.f32.mxu0 0.0
    %v3105 = vand.u32 %v1998, 4294901760
    %3106 = vmatmul.mubr.f32.gmra.mrb[0].mxu0 %v3105
    %v3107 = vpop.f32.mrb[0].mxu0
    %v3108 = vadd.f32 %v2955, %v3107
    %v3109 = vpop.f32.mrb[0].mxu0
    %3110 = vmatprep.mubr.f32.mxu0 0.0
    %v3111 = vand.u32 %v1999, 4294901760
    %3112 = vmatmul.mubr.f32.gmra.mrb[0].mxu0 %v3111
    %v3113 = vpop.f32.mrb[0].mxu0
    %v3114 = vadd.f32 %v2961, %v3113
    %v3115 = vpop.f32.mrb[0].mxu0
    %3116 = vmatprep.mubr.f32.mxu0 0.0
    %v3117 = vand.u32 %v2000, 4294901760
    %3118 = vmatmul.mubr.f32.gmra.mrb[0].mxu0 %v3117
    %v3119 = vpop.f32.mrb[0].mxu0
    %v3120 = vadd.f32 %v2967, %v3119
    %v3121 = vpop.f32.mrb[0].mxu0
    %3122 = vmatprep.mubr.f32.mxu0 0.0
    %v3123 = vand.u32 %v2001, 4294901760
    %3124 = vmatmul.mubr.f32.gmra.mrb[0].mxu0 %v3123
    %v3125 = vpop.f32.mrb[0].mxu0
    %v3126 = vadd.f32 %v2973, %v3125
    %v3127 = vpop.f32.mrb[0].mxu0
    %3128 = vmatprep.mubr.f32.mxu0 0.0
    %v3129 = vand.u32 %v2002, 4294901760
    %3130 = vmatmul.mubr.f32.gmra.mrb[0].mxu0 %v3129
    %v3131 = vpop.f32.mrb[0].mxu0
    %v3132 = vadd.f32 %v2979, %v3131
    %v3133 = vpop.f32.mrb[0].mxu0
    %3134 = vmatprep.mubr.f32.mxu0 0.0
    %v3135 = vand.u32 %v2003, 4294901760
    %3136 = vmatmul.mubr.f32.gmra.mrb[0].mxu0 %v3135
    %v3137 = vpop.f32.mrb[0].mxu0
    %v3138 = vadd.f32 %v2985, %v3137
    %v3139 = vpop.f32.mrb[0].mxu0
    %3140 = vmatprep.mubr.f32.mxu0 0.0
    %v3141 = vand.u32 %v2004, 4294901760
    %3142 = vmatmul.mubr.f32.gmra.mrb[0].mxu0 %v3141
    %v3143 = vpop.f32.mrb[0].mxu0
    %v3144 = vadd.f32 %v2991, %v3143
    %v3145 = vpop.f32.mrb[0].mxu0
    %3146 = vdwg.mxu0
    %v3147 = vadd.f32 %v2005, %v3078
    %v3148 = vadd.f32 %v2006, %v3084
    %v3149 = vadd.f32 %v2007, %v3090
    %v3150 = vadd.f32 %v2008, %v3096
    %v3151 = vadd.f32 %v2009, %v3102
    %v3152 = vadd.f32 %v2010, %v3108
    %v3153 = vadd.f32 %v2011, %v3114
    %v3154 = vadd.f32 %v2012, %v3120
    %v3155 = vadd.f32 %v2013, %v3126
    %v3156 = vadd.f32 %v2014, %v3132
    %v3157 = vadd.f32 %v2015, %v3138
    %v3158 = vadd.f32 %v2016, %v3144
    %3159 = vst [vmem:[#allocation3] sm:$0xff] %v3147
    %3160 = vst [vmem:[#allocation3 + $0x8] sm:$0xff] %v3148
    %3161 = vst [vmem:[#allocation3 + $0x10] sm:$0xff] %v3149
    %3162 = vst [vmem:[#allocation3 + $0x18] sm:$0xff] %v3150
    %3163 = vst [vmem:[#allocation3 + $0x20] sm:$0xff] %v3151
    %3164 = vst [vmem:[#allocation3 + $0x28] sm:$0xff] %v3152
    %3165 = vst [vmem:[#allocation3 + $0x30] sm:$0xff] %v3153
    %3166 = vst [vmem:[#allocation3 + $0x38] sm:$0xff] %v3154
    %3167 = vst [vmem:[#allocation3 + $0x40] sm:$0xff] %v3155
    %3168 = vst [vmem:[#allocation3 + $0x48] sm:$0xff] %v3156
    %3169 = vst [vmem:[#allocation3 + $0x50] sm:$0xff] %v3157
    %3170 = vst [vmem:[#allocation3 + $0x58] sm:$0xff] %v3158
    %v3171 = vld [vmem:[#allocation2 + $0x60] sm:$0xff]
    %v3172 = vld [vmem:[#allocation2 + $0x68] sm:$0xff]
    %v3173 = vld [vmem:[#allocation2 + $0x70] sm:$0xff]
    %v3174 = vld [vmem:[#allocation2 + $0x78] sm:$0xff]
    %v3175 = vld [vmem:[#allocation2 + $0x80] sm:$0xff]
    %v3176 = vld [vmem:[#allocation2 + $0x88] sm:$0xff]
    %v3177 = vld [vmem:[#allocation2 + $0x90] sm:$0xff]
    %v3178 = vld [vmem:[#allocation2 + $0x98] sm:$0xff]
    %v3179 = vld [vmem:[#allocation2 + $0xa0] sm:$0xff]
    %v3180 = vld [vmem:[#allocation2 + $0xa8] sm:$0xff]
    %v3181 = vld [vmem:[#allocation2 + $0xb0] sm:$0xff]
    %v3182 = vld [vmem:[#allocation2 + $0xb8] sm:$0xff]
    %v3183 = vld [vmem:[#allocation7] sm:$0xff]
    %v3184 = vld [vmem:[#allocation7 + $0x8] sm:$0xff]
    %v3185 = vld [vmem:[#allocation7 + $0x10] sm:$0xff]
    %v3186 = vld [vmem:[#allocation7 + $0x18] sm:$0xff]
    %v3187 = vld [vmem:[#allocation7 + $0x20] sm:$0xff]
    %v3188 = vld [vmem:[#allocation7 + $0x28] sm:$0xff]
    %v3189 = vld [vmem:[#allocation7 + $0x30] sm:$0xff]
    %v3190 = vld [vmem:[#allocation7 + $0x38] sm:$0xff]
    %v3191 = vld [vmem:[#allocation7 + $0x40] sm:$0xff]
    %v3192 = vld [vmem:[#allocation7 + $0x48] sm:$0xff]
    %v3193 = vld [vmem:[#allocation7 + $0x50] sm:$0xff]
    %v3194 = vld [vmem:[#allocation7 + $0x58] sm:$0xff]
    %v3195 = vld [vmem:[#allocation7 + $0x60] sm:$0xff]
    %v3196 = vld [vmem:[#allocation7 + $0x68] sm:$0xff]
    %v3197 = vld [vmem:[#allocation7 + $0x70] sm:$0xff]
    %v3198 = vld [vmem:[#allocation7 + $0x78] sm:$0xff]
    %v3199 = vld [vmem:[#allocation7 + $0x80] sm:$0xff]
    %v3200 = vld [vmem:[#allocation7 + $0x88] sm:$0xff]
    %v3201 = vld [vmem:[#allocation7 + $0x90] sm:$0xff]
    %v3202 = vld [vmem:[#allocation7 + $0x98] sm:$0xff]
    %v3203 = vld [vmem:[#allocation7 + $0xa0] sm:$0xff]
    %v3204 = vld [vmem:[#allocation7 + $0xa8] sm:$0xff]
    %v3205 = vld [vmem:[#allocation7 + $0xb0] sm:$0xff]
    %v3206 = vld [vmem:[#allocation7 + $0xb8] sm:$0xff]
    %v3207 = vld [vmem:[#allocation7 + $0xc0] sm:$0xff]
    %v3208 = vld [vmem:[#allocation7 + $0xc8] sm:$0xff]
    %v3209 = vld [vmem:[#allocation7 + $0xd0] sm:$0xff]
    %v3210 = vld [vmem:[#allocation7 + $0xd8] sm:$0xff]
    %v3211 = vld [vmem:[#allocation7 + $0xe0] sm:$0xff]
    %v3212 = vld [vmem:[#allocation7 + $0xe8] sm:$0xff]
    %v3213 = vld [vmem:[#allocation7 + $0xf0] sm:$0xff]
    %v3214 = vld [vmem:[#allocation7 + $0xf8] sm:$0xff]
    %v3215 = vld [vmem:[%s4] sm:$0x3]
    %v3217 = vlaneseq
    %v3218 = vshrl.u32 %v3217, 7
    %v3219 = vsub.s32 0, %v3218
    %v3220 = vrot.slane %v3215, %v3219
    %v3221 = vlaneseq
    %v3222 = vshrl.u32 %v3221, 7
    %v3223 = vsub.s32 1, %v3222
    %v3224 = vrot.slane %v3215, %v3223
    %v3227 = vand.u32 %v3184, 4294901760
    %3228 = vmatprep.subr.mxu0 %v3227
    %v3229 = vand.u32 %v3183, 4294901760
    %3230 = vmatpush1.msra.mxu0 %v3229
    %v3231 = vand.u32 %v3186, 4294901760
    %3232 = vmatprep.subr.mxu0 %v3231
    %v3233 = vand.u32 %v3185, 4294901760
    %3234 = vmatpush1.msra.mxu0 %v3233
    %v3235 = vand.u32 %v3188, 4294901760
    %3236 = vmatprep.subr.mxu0 %v3235
    %v3237 = vand.u32 %v3187, 4294901760
    %3238 = vmatpush1.msra.mxu0 %v3237
    %v3239 = vand.u32 %v3190, 4294901760
    %3240 = vmatprep.subr.mxu0 %v3239
    %v3241 = vand.u32 %v3189, 4294901760
    %3242 = vmatpush1.msra.mxu0 %v3241
    %v3243 = vand.u32 %v3192, 4294901760
    %3244 = vmatprep.subr.mxu0 %v3243
    %v3245 = vand.u32 %v3191, 4294901760
    %3246 = vmatpush1.msra.mxu0 %v3245
    %v3247 = vand.u32 %v3194, 4294901760
    %3248 = vmatprep.subr.mxu0 %v3247
    %v3249 = vand.u32 %v3193, 4294901760
    %3250 = vmatpush1.msra.mxu0 %v3249
    %v3251 = vand.u32 %v3196, 4294901760
    %3252 = vmatprep.subr.mxu0 %v3251
    %v3253 = vand.u32 %v3195, 4294901760
    %3254 = vmatpush1.msra.mxu0 %v3253
    %v3255 = vand.u32 %v3198, 4294901760
    %3256 = vmatprep.subr.mxu0 %v3255
    %v3257 = vand.u32 %v3197, 4294901760
    %3258 = vmatpush1.msra.mxu0 %v3257
    %v3259 = vand.u32 %v3200, 4294901760
    %3260 = vmatprep.subr.mxu0 %v3259
    %v3261 = vand.u32 %v3199, 4294901760
    %3262 = vmatpush1.msra.mxu0 %v3261
    %v3263 = vand.u32 %v3202, 4294901760
    %3264 = vmatprep.subr.mxu0 %v3263
    %v3265 = vand.u32 %v3201, 4294901760
    %3266 = vmatpush1.msra.mxu0 %v3265
    %v3267 = vand.u32 %v3204, 4294901760
    %3268 = vmatprep.subr.mxu0 %v3267
    %v3269 = vand.u32 %v3203, 4294901760
    %3270 = vmatpush1.msra.mxu0 %v3269
    %v3271 = vand.u32 %v3206, 4294901760
    %3272 = vmatprep.subr.mxu0 %v3271
    %v3273 = vand.u32 %v3205, 4294901760
    %3274 = vmatpush1.msra.mxu0 %v3273
    %v3275 = vand.u32 %v3208, 4294901760
    %3276 = vmatprep.subr.mxu0 %v3275
    %v3277 = vand.u32 %v3207, 4294901760
    %3278 = vmatpush1.msra.mxu0 %v3277
    %v3279 = vand.u32 %v3210, 4294901760
    %3280 = vmatprep.subr.mxu0 %v3279
    %v3281 = vand.u32 %v3209, 4294901760
    %3282 = vmatpush1.msra.mxu0 %v3281
    %v3283 = vand.u32 %v3212, 4294901760
    %3284 = vmatprep.subr.mxu0 %v3283
    %v3285 = vand.u32 %v3211, 4294901760
    %3286 = vmatpush1.msra.mxu0 %v3285
    %v3287 = vand.u32 %v3214, 4294901760
    %3288 = vmatprep.subr.mxu0 %v3287
    %v3289 = vand.u32 %v3213, 4294901760
    %3290 = vmatpush1.msra.mxu0 %v3289
    %3291 = vmatprep.subr.mxu0 0.0
    %3292 = vmatpush1.msra.mxu0 0.0
    %3293 = vmatprep.subr.mxu0 0.0
    %3294 = vmatpush1.msra.mxu0 0.0
    %3295 = vmatprep.subr.mxu0 0.0
    %3296 = vmatpush1.msra.mxu0 0.0
    %3297 = vmatprep.subr.mxu0 0.0
    %3298 = vmatpush1.msra.mxu0 0.0
    %3299 = vmatprep.subr.mxu0 0.0
    %3300 = vmatpush1.msra.mxu0 0.0
    %3301 = vmatprep.subr.mxu0 0.0
    %3302 = vmatpush1.msra.mxu0 0.0
    %3303 = vmatprep.subr.mxu0 0.0
    %3304 = vmatpush1.msra.mxu0 0.0
    %3305 = vmatprep.subr.mxu0 0.0
    %3306 = vmatpush1.msra.mxu0 0.0
    %3307 = vmatprep.subr.mxu0 0.0
    %3308 = vmatpush1.msra.mxu0 0.0
    %3309 = vmatprep.subr.mxu0 0.0
    %3310 = vmatpush1.msra.mxu0 0.0
    %3311 = vmatprep.subr.mxu0 0.0
    %3312 = vmatpush1.msra.mxu0 0.0
    %3313 = vmatprep.subr.mxu0 0.0
    %3314 = vmatpush1.msra.mxu0 0.0
    %3315 = vmatprep.subr.mxu0 0.0
    %3316 = vmatpush1.msra.mxu0 0.0
    %3317 = vmatprep.subr.mxu0 0.0
    %3318 = vmatpush1.msra.mxu0 0.0
    %3319 = vmatprep.subr.mxu0 0.0
    %3320 = vmatpush1.msra.mxu0 0.0
    %3321 = vmatprep.subr.mxu0 0.0
    %3322 = vmatpush1.msra.mxu0 0.0
    %3323 = vmatprep.mubr.f32.mxu0 0.0
    %v3324 = vand.u32 %v3171, 4294901760
    %v3325 = vsub.f32 %v3171, %v3324
    %v3326 = vand.u32 %v3325, 4294901760
    %v3327 = vsub.f32 %v3325, %v3326
    %v3328 = vand.u32 %v3327, 4294901760
    %3329 = vmatmul.mubr.f32.gmra.mrb[0].mxu0 %v3328
    %v3330 = vpop.f32.mrb[0].mxu0
    %v3331 = vadd.f32 %v3220, %v3330
    %v3332 = vpop.f32.mrb[0].mxu0
    %v3333 = vadd.f32 %v3224, %v3332
    %3334 = vmatprep.mubr.f32.mxu0 0.0
    %v3335 = vand.u32 %v3172, 4294901760
    %v3336 = vsub.f32 %v3172, %v3335
    %v3337 = vand.u32 %v3336, 4294901760
    %v3338 = vsub.f32 %v3336, %v3337
    %v3339 = vand.u32 %v3338, 4294901760
    %3340 = vmatmul.mubr.f32.gmra.mrb[0].mxu0 %v3339
    %v3341 = vpop.f32.mrb[0].mxu0
    %v3342 = vadd.f32 %v3220, %v3341
    %v3343 = vpop.f32.mrb[0].mxu0
    %v3344 = vadd.f32 %v3224, %v3343
    %3345 = vmatprep.mubr.f32.mxu0 0.0
    %v3346 = vand.u32 %v3173, 4294901760
    %v3347 = vsub.f32 %v3173, %v3346
    %v3348 = vand.u32 %v3347, 4294901760
    %v3349 = vsub.f32 %v3347, %v3348
    %v3350 = vand.u32 %v3349, 4294901760
    %3351 = vmatmul.mubr.f32.gmra.mrb[0].mxu0 %v3350
    %v3352 = vpop.f32.mrb[0].mxu0
    %v3353 = vadd.f32 %v3220, %v3352
    %v3354 = vpop.f32.mrb[0].mxu0
    %v3355 = vadd.f32 %v3224, %v3354
    %3356 = vmatprep.mubr.f32.mxu0 0.0
    %v3357 = vand.u32 %v3174, 4294901760
    %v3358 = vsub.f32 %v3174, %v3357
    %v3359 = vand.u32 %v3358, 4294901760
    %v3360 = vsub.f32 %v3358, %v3359
    %v3361 = vand.u32 %v3360, 4294901760
    %3362 = vmatmul.mubr.f32.gmra.mrb[0].mxu0 %v3361
    %v3363 = vpop.f32.mrb[0].mxu0
    %v3364 = vadd.f32 %v3220, %v3363
    %v3365 = vpop.f32.mrb[0].mxu0
    %v3366 = vadd.f32 %v3224, %v3365
    %3367 = vmatprep.mubr.f32.mxu0 0.0
    %v3368 = vand.u32 %v3175, 4294901760
    %v3369 = vsub.f32 %v3175, %v3368
    %v3370 = vand.u32 %v3369, 4294901760
    %v3371 = vsub.f32 %v3369, %v3370
    %v3372 = vand.u32 %v3371, 4294901760
    %3373 = vmatmul.mubr.f32.gmra.mrb[0].mxu0 %v3372
    %v3374 = vpop.f32.mrb[0].mxu0
    %v3375 = vadd.f32 %v3220, %v3374
    %v3376 = vpop.f32.mrb[0].mxu0
    %v3377 = vadd.f32 %v3224, %v3376
    %3378 = vmatprep.mubr.f32.mxu0 0.0
    %v3379 = vand.u32 %v3176, 4294901760
    %v3380 = vsub.f32 %v3176, %v3379
    %v3381 = vand.u32 %v3380, 4294901760
    %v3382 = vsub.f32 %v3380, %v3381
    %v3383 = vand.u32 %v3382, 4294901760
    %3384 = vmatmul.mubr.f32.gmra.mrb[0].mxu0 %v3383
    %v3385 = vpop.f32.mrb[0].mxu0
    %v3386 = vadd.f32 %v3220, %v3385
    %v3387 = vpop.f32.mrb[0].mxu0
    %v3388 = vadd.f32 %v3224, %v3387
    %3389 = vmatprep.mubr.f32.mxu0 0.0
    %v3390 = vand.u32 %v3177, 4294901760
    %v3391 = vsub.f32 %v3177, %v3390
    %v3392 = vand.u32 %v3391, 4294901760
    %v3393 = vsub.f32 %v3391, %v3392
    %v3394 = vand.u32 %v3393, 4294901760
    %3395 = vmatmul.mubr.f32.gmra.mrb[0].mxu0 %v3394
    %v3396 = vpop.f32.mrb[0].mxu0
    %v3397 = vadd.f32 %v3220, %v3396
    %v3398 = vpop.f32.mrb[0].mxu0
    %v3399 = vadd.f32 %v3224, %v3398
    %3400 = vmatprep.mubr.f32.mxu0 0.0
    %v3401 = vand.u32 %v3178, 4294901760
    %v3402 = vsub.f32 %v3178, %v3401
    %v3403 = vand.u32 %v3402, 4294901760
    %v3404 = vsub.f32 %v3402, %v3403
    %v3405 = vand.u32 %v3404, 4294901760
    %3406 = vmatmul.mubr.f32.gmra.mrb[0].mxu0 %v3405
    %v3407 = vpop.f32.mrb[0].mxu0
    %v3408 = vadd.f32 %v3220, %v3407
    %v3409 = vpop.f32.mrb[0].mxu0
    %v3410 = vadd.f32 %v3224, %v3409
    %3411 = vmatprep.mubr.f32.mxu0 0.0
    %v3412 = vand.u32 %v3179, 4294901760
    %v3413 = vsub.f32 %v3179, %v3412
    %v3414 = vand.u32 %v3413, 4294901760
    %v3415 = vsub.f32 %v3413, %v3414
    %v3416 = vand.u32 %v3415, 4294901760
    %3417 = vmatmul.mubr.f32.gmra.mrb[0].mxu0 %v3416
    %v3418 = vpop.f32.mrb[0].mxu0
    %v3419 = vadd.f32 %v3220, %v3418
    %v3420 = vpop.f32.mrb[0].mxu0
    %v3421 = vadd.f32 %v3224, %v3420
    %3422 = vmatprep.mubr.f32.mxu0 0.0
    %v3423 = vand.u32 %v3180, 4294901760
    %v3424 = vsub.f32 %v3180, %v3423
    %v3425 = vand.u32 %v3424, 4294901760
    %v3426 = vsub.f32 %v3424, %v3425
    %v3427 = vand.u32 %v3426, 4294901760
    %3428 = vmatmul.mubr.f32.gmra.mrb[0].mxu0 %v3427
    %v3429 = vpop.f32.mrb[0].mxu0
    %v3430 = vadd.f32 %v3220, %v3429
    %v3431 = vpop.f32.mrb[0].mxu0
    %v3432 = vadd.f32 %v3224, %v3431
    %3433 = vmatprep.mubr.f32.mxu0 0.0
    %v3434 = vand.u32 %v3181, 4294901760
    %v3435 = vsub.f32 %v3181, %v3434
    %v3436 = vand.u32 %v3435, 4294901760
    %v3437 = vsub.f32 %v3435, %v3436
    %v3438 = vand.u32 %v3437, 4294901760
    %3439 = vmatmul.mubr.f32.gmra.mrb[0].mxu0 %v3438
    %v3440 = vpop.f32.mrb[0].mxu0
    %v3441 = vadd.f32 %v3220, %v3440
    %v3442 = vpop.f32.mrb[0].mxu0
    %v3443 = vadd.f32 %v3224, %v3442
    %3444 = vmatprep.mubr.f32.mxu0 0.0
    %v3445 = vand.u32 %v3182, 4294901760
    %v3446 = vsub.f32 %v3182, %v3445
    %v3447 = vand.u32 %v3446, 4294901760
    %v3448 = vsub.f32 %v3446, %v3447
    %v3449 = vand.u32 %v3448, 4294901760
    %3450 = vmatmul.mubr.f32.gmra.mrb[0].mxu0 %v3449
    %v3451 = vpop.f32.mrb[0].mxu0
    %v3452 = vadd.f32 %v3220, %v3451
    %v3453 = vpop.f32.mrb[0].mxu0
    %v3454 = vadd.f32 %v3224, %v3453
    %3455 = vdwg.mxu0
    %v3456 = vand.u32 %v3184, 4294901760
    %v3457 = vsub.f32 %v3184, %v3456
    %v3458 = vand.u32 %v3457, 4294901760
    %v3459 = vsub.f32 %v3457, %v3458
    %v3460 = vand.u32 %v3459, 4294901760
    %3461 = vmatprep.subr.mxu0 %v3460
    %v3462 = vand.u32 %v3183, 4294901760
    %v3463 = vsub.f32 %v3183, %v3462
    %v3464 = vand.u32 %v3463, 4294901760
    %v3465 = vsub.f32 %v3463, %v3464
    %v3466 = vand.u32 %v3465, 4294901760
    %3467 = vmatpush1.msra.mxu0 %v3466
    %v3468 = vand.u32 %v3186, 4294901760
    %v3469 = vsub.f32 %v3186, %v3468
    %v3470 = vand.u32 %v3469, 4294901760
    %v3471 = vsub.f32 %v3469, %v3470
    %v3472 = vand.u32 %v3471, 4294901760
    %3473 = vmatprep.subr.mxu0 %v3472
    %v3474 = vand.u32 %v3185, 4294901760
    %v3475 = vsub.f32 %v3185, %v3474
    %v3476 = vand.u32 %v3475, 4294901760
    %v3477 = vsub.f32 %v3475, %v3476
    %v3478 = vand.u32 %v3477, 4294901760
    %3479 = vmatpush1.msra.mxu0 %v3478
    %v3480 = vand.u32 %v3188, 4294901760
    %v3481 = vsub.f32 %v3188, %v3480
    %v3482 = vand.u32 %v3481, 4294901760
    %v3483 = vsub.f32 %v3481, %v3482
    %v3484 = vand.u32 %v3483, 4294901760
    %3485 = vmatprep.subr.mxu0 %v3484
    %v3486 = vand.u32 %v3187, 4294901760
    %v3487 = vsub.f32 %v3187, %v3486
    %v3488 = vand.u32 %v3487, 4294901760
    %v3489 = vsub.f32 %v3487, %v3488
    %v3490 = vand.u32 %v3489, 4294901760
    %3491 = vmatpush1.msra.mxu0 %v3490
    %v3492 = vand.u32 %v3190, 4294901760
    %v3493 = vsub.f32 %v3190, %v3492
    %v3494 = vand.u32 %v3493, 4294901760
    %v3495 = vsub.f32 %v3493, %v3494
    %v3496 = vand.u32 %v3495, 4294901760
    %3497 = vmatprep.subr.mxu0 %v3496
    %v3498 = vand.u32 %v3189, 4294901760
    %v3499 = vsub.f32 %v3189, %v3498
    %v3500 = vand.u32 %v3499, 4294901760
    %v3501 = vsub.f32 %v3499, %v3500
    %v3502 = vand.u32 %v3501, 4294901760
    %3503 = vmatpush1.msra.mxu0 %v3502
    %v3504 = vand.u32 %v3192, 4294901760
    %v3505 = vsub.f32 %v3192, %v3504
    %v3506 = vand.u32 %v3505, 4294901760
    %v3507 = vsub.f32 %v3505, %v3506
    %v3508 = vand.u32 %v3507, 4294901760
    %3509 = vmatprep.subr.mxu0 %v3508
    %v3510 = vand.u32 %v3191, 4294901760
    %v3511 = vsub.f32 %v3191, %v3510
    %v3512 = vand.u32 %v3511, 4294901760
    %v3513 = vsub.f32 %v3511, %v3512
    %v3514 = vand.u32 %v3513, 4294901760
    %3515 = vmatpush1.msra.mxu0 %v3514
    %v3516 = vand.u32 %v3194, 4294901760
    %v3517 = vsub.f32 %v3194, %v3516
    %v3518 = vand.u32 %v3517, 4294901760
    %v3519 = vsub.f32 %v3517, %v3518
    %v3520 = vand.u32 %v3519, 4294901760
    %3521 = vmatprep.subr.mxu0 %v3520
    %v3522 = vand.u32 %v3193, 4294901760
    %v3523 = vsub.f32 %v3193, %v3522
    %v3524 = vand.u32 %v3523, 4294901760
    %v3525 = vsub.f32 %v3523, %v3524
    %v3526 = vand.u32 %v3525, 4294901760
    %3527 = vmatpush1.msra.mxu0 %v3526
    %v3528 = vand.u32 %v3196, 4294901760
    %v3529 = vsub.f32 %v3196, %v3528
    %v3530 = vand.u32 %v3529, 4294901760
    %v3531 = vsub.f32 %v3529, %v3530
    %v3532 = vand.u32 %v3531, 4294901760
    %3533 = vmatprep.subr.mxu0 %v3532
    %v3534 = vand.u32 %v3195, 4294901760
    %v3535 = vsub.f32 %v3195, %v3534
    %v3536 = vand.u32 %v3535, 4294901760
    %v3537 = vsub.f32 %v3535, %v3536
    %v3538 = vand.u32 %v3537, 4294901760
    %3539 = vmatpush1.msra.mxu0 %v3538
    %v3540 = vand.u32 %v3198, 4294901760
    %v3541 = vsub.f32 %v3198, %v3540
    %v3542 = vand.u32 %v3541, 4294901760
    %v3543 = vsub.f32 %v3541, %v3542
    %v3544 = vand.u32 %v3543, 4294901760
    %3545 = vmatprep.subr.mxu0 %v3544
    %v3546 = vand.u32 %v3197, 4294901760
    %v3547 = vsub.f32 %v3197, %v3546
    %v3548 = vand.u32 %v3547, 4294901760
    %v3549 = vsub.f32 %v3547, %v3548
    %v3550 = vand.u32 %v3549, 4294901760
    %3551 = vmatpush1.msra.mxu0 %v3550
    %v3552 = vand.u32 %v3200, 4294901760
    %v3553 = vsub.f32 %v3200, %v3552
    %v3554 = vand.u32 %v3553, 4294901760
    %v3555 = vsub.f32 %v3553, %v3554
    %v3556 = vand.u32 %v3555, 4294901760
    %3557 = vmatprep.subr.mxu0 %v3556
    %v3558 = vand.u32 %v3199, 4294901760
    %v3559 = vsub.f32 %v3199, %v3558
    %v3560 = vand.u32 %v3559, 4294901760
    %v3561 = vsub.f32 %v3559, %v3560
    %v3562 = vand.u32 %v3561, 4294901760
    %3563 = vmatpush1.msra.mxu0 %v3562
    %v3564 = vand.u32 %v3202, 4294901760
    %v3565 = vsub.f32 %v3202, %v3564
    %v3566 = vand.u32 %v3565, 4294901760
    %v3567 = vsub.f32 %v3565, %v3566
    %v3568 = vand.u32 %v3567, 4294901760
    %3569 = vmatprep.subr.mxu0 %v3568
    %v3570 = vand.u32 %v3201, 4294901760
    %v3571 = vsub.f32 %v3201, %v3570
    %v3572 = vand.u32 %v3571, 4294901760
    %v3573 = vsub.f32 %v3571, %v3572
    %v3574 = vand.u32 %v3573, 4294901760
    %3575 = vmatpush1.msra.mxu0 %v3574
    %v3576 = vand.u32 %v3204, 4294901760
    %v3577 = vsub.f32 %v3204, %v3576
    %v3578 = vand.u32 %v3577, 4294901760
    %v3579 = vsub.f32 %v3577, %v3578
    %v3580 = vand.u32 %v3579, 4294901760
    %3581 = vmatprep.subr.mxu0 %v3580
    %v3582 = vand.u32 %v3203, 4294901760
    %v3583 = vsub.f32 %v3203, %v3582
    %v3584 = vand.u32 %v3583, 4294901760
    %v3585 = vsub.f32 %v3583, %v3584
    %v3586 = vand.u32 %v3585, 4294901760
    %3587 = vmatpush1.msra.mxu0 %v3586
    %v3588 = vand.u32 %v3206, 4294901760
    %v3589 = vsub.f32 %v3206, %v3588
    %v3590 = vand.u32 %v3589, 4294901760
    %v3591 = vsub.f32 %v3589, %v3590
    %v3592 = vand.u32 %v3591, 4294901760
    %3593 = vmatprep.subr.mxu0 %v3592
    %v3594 = vand.u32 %v3205, 4294901760
    %v3595 = vsub.f32 %v3205, %v3594
    %v3596 = vand.u32 %v3595, 4294901760
    %v3597 = vsub.f32 %v3595, %v3596
    %v3598 = vand.u32 %v3597, 4294901760
    %3599 = vmatpush1.msra.mxu0 %v3598
    %v3600 = vand.u32 %v3208, 4294901760
    %v3601 = vsub.f32 %v3208, %v3600
    %v3602 = vand.u32 %v3601, 4294901760
    %v3603 = vsub.f32 %v3601, %v3602
    %v3604 = vand.u32 %v3603, 4294901760
    %3605 = vmatprep.subr.mxu0 %v3604
    %v3606 = vand.u32 %v3207, 4294901760
    %v3607 = vsub.f32 %v3207, %v3606
    %v3608 = vand.u32 %v3607, 4294901760
    %v3609 = vsub.f32 %v3607, %v3608
    %v3610 = vand.u32 %v3609, 4294901760
    %3611 = vmatpush1.msra.mxu0 %v3610
    %v3612 = vand.u32 %v3210, 4294901760
    %v3613 = vsub.f32 %v3210, %v3612
    %v3614 = vand.u32 %v3613, 4294901760
    %v3615 = vsub.f32 %v3613, %v3614
    %v3616 = vand.u32 %v3615, 4294901760
    %3617 = vmatprep.subr.mxu0 %v3616
    %v3618 = vand.u32 %v3209, 4294901760
    %v3619 = vsub.f32 %v3209, %v3618
    %v3620 = vand.u32 %v3619, 4294901760
    %v3621 = vsub.f32 %v3619, %v3620
    %v3622 = vand.u32 %v3621, 4294901760
    %3623 = vmatpush1.msra.mxu0 %v3622
    %v3624 = vand.u32 %v3212, 4294901760
    %v3625 = vsub.f32 %v3212, %v3624
    %v3626 = vand.u32 %v3625, 4294901760
    %v3627 = vsub.f32 %v3625, %v3626
    %v3628 = vand.u32 %v3627, 4294901760
    %3629 = vmatprep.subr.mxu0 %v3628
    %v3630 = vand.u32 %v3211, 4294901760
    %v3631 = vsub.f32 %v3211, %v3630
    %v3632 = vand.u32 %v3631, 4294901760
    %v3633 = vsub.f32 %v3631, %v3632
    %v3634 = vand.u32 %v3633, 4294901760
    %3635 = vmatpush1.msra.mxu0 %v3634
    %v3636 = vand.u32 %v3214, 4294901760
    %v3637 = vsub.f32 %v3214, %v3636
    %v3638 = vand.u32 %v3637, 4294901760
    %v3639 = vsub.f32 %v3637, %v3638
    %v3640 = vand.u32 %v3639, 4294901760
    %3641 = vmatprep.subr.mxu0 %v3640
    %v3642 = vand.u32 %v3213, 4294901760
    %v3643 = vsub.f32 %v3213, %v3642
    %v3644 = vand.u32 %v3643, 4294901760
    %v3645 = vsub.f32 %v3643, %v3644
    %v3646 = vand.u32 %v3645, 4294901760
    %3647 = vmatpush1.msra.mxu0 %v3646
    %3648 = vmatprep.subr.mxu0 0.0
    %3649 = vmatpush1.msra.mxu0 0.0
    %3650 = vmatprep.subr.mxu0 0.0
    %3651 = vmatpush1.msra.mxu0 0.0
    %3652 = vmatprep.subr.mxu0 0.0
    %3653 = vmatpush1.msra.mxu0 0.0
    %3654 = vmatprep.subr.mxu0 0.0
    %3655 = vmatpush1.msra.mxu0 0.0
    %3656 = vmatprep.subr.mxu0 0.0
    %3657 = vmatpush1.msra.mxu0 0.0
    %3658 = vmatprep.subr.mxu0 0.0
    %3659 = vmatpush1.msra.mxu0 0.0
    %3660 = vmatprep.subr.mxu0 0.0
    %3661 = vmatpush1.msra.mxu0 0.0
    %3662 = vmatprep.subr.mxu0 0.0
    %3663 = vmatpush1.msra.mxu0 0.0
    %3664 = vmatprep.subr.mxu0 0.0
    %3665 = vmatpush1.msra.mxu0 0.0
    %3666 = vmatprep.subr.mxu0 0.0
    %3667 = vmatpush1.msra.mxu0 0.0
    %3668 = vmatprep.subr.mxu0 0.0
    %3669 = vmatpush1.msra.mxu0 0.0
    %3670 = vmatprep.subr.mxu0 0.0
    %3671 = vmatpush1.msra.mxu0 0.0
    %3672 = vmatprep.subr.mxu0 0.0
    %3673 = vmatpush1.msra.mxu0 0.0
    %3674 = vmatprep.subr.mxu0 0.0
    %3675 = vmatpush1.msra.mxu0 0.0
    %3676 = vmatprep.subr.mxu0 0.0
    %3677 = vmatpush1.msra.mxu0 0.0
    %3678 = vmatprep.subr.mxu0 0.0
    %3679 = vmatpush1.msra.mxu0 0.0
    %3680 = vmatprep.mubr.f32.mxu0 0.0
    %v3681 = vand.u32 %v3171, 4294901760
    %3682 = vmatmul.mubr.f32.gmra.mrb[0].mxu0 %v3681
    %v3683 = vpop.f32.mrb[0].mxu0
    %v3684 = vadd.f32 %v3331, %v3683
    %v3685 = vpop.f32.mrb[0].mxu0
    %v3686 = vadd.f32 %v3333, %v3685
    %3687 = vmatprep.mubr.f32.mxu0 0.0
    %v3688 = vand.u32 %v3172, 4294901760
    %3689 = vmatmul.mubr.f32.gmra.mrb[0].mxu0 %v3688
    %v3690 = vpop.f32.mrb[0].mxu0
    %v3691 = vadd.f32 %v3342, %v3690
    %v3692 = vpop.f32.mrb[0].mxu0
    %v3693 = vadd.f32 %v3344, %v3692
    %3694 = vmatprep.mubr.f32.mxu0 0.0
    %v3695 = vand.u32 %v3173, 4294901760
    %3696 = vmatmul.mubr.f32.gmra.mrb[0].mxu0 %v3695
    %v3697 = vpop.f32.mrb[0].mxu0
    %v3698 = vadd.f32 %v3353, %v3697
    %v3699 = vpop.f32.mrb[0].mxu0
    %v3700 = vadd.f32 %v3355, %v3699
    %3701 = vmatprep.mubr.f32.mxu0 0.0
    %v3702 = vand.u32 %v3174, 4294901760
    %3703 = vmatmul.mubr.f32.gmra.mrb[0].mxu0 %v3702
    %v3704 = vpop.f32.mrb[0].mxu0
    %v3705 = vadd.f32 %v3364, %v3704
    %v3706 = vpop.f32.mrb[0].mxu0
    %v3707 = vadd.f32 %v3366, %v3706
    %3708 = vmatprep.mubr.f32.mxu0 0.0
    %v3709 = vand.u32 %v3175, 4294901760
    %3710 = vmatmul.mubr.f32.gmra.mrb[0].mxu0 %v3709
    %v3711 = vpop.f32.mrb[0].mxu0
    %v3712 = vadd.f32 %v3375, %v3711
    %v3713 = vpop.f32.mrb[0].mxu0
    %v3714 = vadd.f32 %v3377, %v3713
    %3715 = vmatprep.mubr.f32.mxu0 0.0
    %v3716 = vand.u32 %v3176, 4294901760
    %3717 = vmatmul.mubr.f32.gmra.mrb[0].mxu0 %v3716
    %v3718 = vpop.f32.mrb[0].mxu0
    %v3719 = vadd.f32 %v3386, %v3718
    %v3720 = vpop.f32.mrb[0].mxu0
    %v3721 = vadd.f32 %v3388, %v3720
    %3722 = vmatprep.mubr.f32.mxu0 0.0
    %v3723 = vand.u32 %v3177, 4294901760
    %3724 = vmatmul.mubr.f32.gmra.mrb[0].mxu0 %v3723
    %v3725 = vpop.f32.mrb[0].mxu0
    %v3726 = vadd.f32 %v3397, %v3725
    %v3727 = vpop.f32.mrb[0].mxu0
    %v3728 = vadd.f32 %v3399, %v3727
    %3729 = vmatprep.mubr.f32.mxu0 0.0
    %v3730 = vand.u32 %v3178, 4294901760
    %3731 = vmatmul.mubr.f32.gmra.mrb[0].mxu0 %v3730
    %v3732 = vpop.f32.mrb[0].mxu0
    %v3733 = vadd.f32 %v3408, %v3732
    %v3734 = vpop.f32.mrb[0].mxu0
    %v3735 = vadd.f32 %v3410, %v3734
    %3736 = vmatprep.mubr.f32.mxu0 0.0
    %v3737 = vand.u32 %v3179, 4294901760
    %3738 = vmatmul.mubr.f32.gmra.mrb[0].mxu0 %v3737
    %v3739 = vpop.f32.mrb[0].mxu0
    %v3740 = vadd.f32 %v3419, %v3739
    %v3741 = vpop.f32.mrb[0].mxu0
    %v3742 = vadd.f32 %v3421, %v3741
    %3743 = vmatprep.mubr.f32.mxu0 0.0
    %v3744 = vand.u32 %v3180, 4294901760
    %3745 = vmatmul.mubr.f32.gmra.mrb[0].mxu0 %v3744
    %v3746 = vpop.f32.mrb[0].mxu0
    %v3747 = vadd.f32 %v3430, %v3746
    %v3748 = vpop.f32.mrb[0].mxu0
    %v3749 = vadd.f32 %v3432, %v3748
    %3750 = vmatprep.mubr.f32.mxu0 0.0
    %v3751 = vand.u32 %v3181, 4294901760
    %3752 = vmatmul.mubr.f32.gmra.mrb[0].mxu0 %v3751
    %v3753 = vpop.f32.mrb[0].mxu0
    %v3754 = vadd.f32 %v3441, %v3753
    %v3755 = vpop.f32.mrb[0].mxu0
    %v3756 = vadd.f32 %v3443, %v3755
    %3757 = vmatprep.mubr.f32.mxu0 0.0
    %v3758 = vand.u32 %v3182, 4294901760
    %3759 = vmatmul.mubr.f32.gmra.mrb[0].mxu0 %v3758
    %v3760 = vpop.f32.mrb[0].mxu0
    %v3761 = vadd.f32 %v3452, %v3760
    %v3762 = vpop.f32.mrb[0].mxu0
    %v3763 = vadd.f32 %v3454, %v3762
    %3764 = vdwg.mxu0
    %v3765 = vand.u32 %v3184, 4294901760
    %v3766 = vsub.f32 %v3184, %v3765
    %3767 = vmatprep.subr.mxu0 %v3766
    %v3768 = vand.u32 %v3183, 4294901760
    %v3769 = vsub.f32 %v3183, %v3768
    %3770 = vmatpush1.msra.mxu0 %v3769
    %v3771 = vand.u32 %v3186, 4294901760
    %v3772 = vsub.f32 %v3186, %v3771
    %3773 = vmatprep.subr.mxu0 %v3772
    %v3774 = vand.u32 %v3185, 4294901760
    %v3775 = vsub.f32 %v3185, %v3774
    %3776 = vmatpush1.msra.mxu0 %v3775
    %v3777 = vand.u32 %v3188, 4294901760
    %v3778 = vsub.f32 %v3188, %v3777
    %3779 = vmatprep.subr.mxu0 %v3778
    %v3780 = vand.u32 %v3187, 4294901760
    %v3781 = vsub.f32 %v3187, %v3780
    %3782 = vmatpush1.msra.mxu0 %v3781
    %v3783 = vand.u32 %v3190, 4294901760
    %v3784 = vsub.f32 %v3190, %v3783
    %3785 = vmatprep.subr.mxu0 %v3784
    %v3786 = vand.u32 %v3189, 4294901760
    %v3787 = vsub.f32 %v3189, %v3786
    %3788 = vmatpush1.msra.mxu0 %v3787
    %v3789 = vand.u32 %v3192, 4294901760
    %v3790 = vsub.f32 %v3192, %v3789
    %3791 = vmatprep.subr.mxu0 %v3790
    %v3792 = vand.u32 %v3191, 4294901760
    %v3793 = vsub.f32 %v3191, %v3792
    %3794 = vmatpush1.msra.mxu0 %v3793
    %v3795 = vand.u32 %v3194, 4294901760
    %v3796 = vsub.f32 %v3194, %v3795
    %3797 = vmatprep.subr.mxu0 %v3796
    %v3798 = vand.u32 %v3193, 4294901760
    %v3799 = vsub.f32 %v3193, %v3798
    %3800 = vmatpush1.msra.mxu0 %v3799
    %v3801 = vand.u32 %v3196, 4294901760
    %v3802 = vsub.f32 %v3196, %v3801
    %3803 = vmatprep.subr.mxu0 %v3802
    %v3804 = vand.u32 %v3195, 4294901760
    %v3805 = vsub.f32 %v3195, %v3804
    %3806 = vmatpush1.msra.mxu0 %v3805
    %v3807 = vand.u32 %v3198, 4294901760
    %v3808 = vsub.f32 %v3198, %v3807
    %3809 = vmatprep.subr.mxu0 %v3808
    %v3810 = vand.u32 %v3197, 4294901760
    %v3811 = vsub.f32 %v3197, %v3810
    %3812 = vmatpush1.msra.mxu0 %v3811
    %v3813 = vand.u32 %v3200, 4294901760
    %v3814 = vsub.f32 %v3200, %v3813
    %3815 = vmatprep.subr.mxu0 %v3814
    %v3816 = vand.u32 %v3199, 4294901760
    %v3817 = vsub.f32 %v3199, %v3816
    %3818 = vmatpush1.msra.mxu0 %v3817
    %v3819 = vand.u32 %v3202, 4294901760
    %v3820 = vsub.f32 %v3202, %v3819
    %3821 = vmatprep.subr.mxu0 %v3820
    %v3822 = vand.u32 %v3201, 4294901760
    %v3823 = vsub.f32 %v3201, %v3822
    %3824 = vmatpush1.msra.mxu0 %v3823
    %v3825 = vand.u32 %v3204, 4294901760
    %v3826 = vsub.f32 %v3204, %v3825
    %3827 = vmatprep.subr.mxu0 %v3826
    %v3828 = vand.u32 %v3203, 4294901760
    %v3829 = vsub.f32 %v3203, %v3828
    %3830 = vmatpush1.msra.mxu0 %v3829
    %v3831 = vand.u32 %v3206, 4294901760
    %v3832 = vsub.f32 %v3206, %v3831
    %3833 = vmatprep.subr.mxu0 %v3832
    %v3834 = vand.u32 %v3205, 4294901760
    %v3835 = vsub.f32 %v3205, %v3834
    %3836 = vmatpush1.msra.mxu0 %v3835
    %v3837 = vand.u32 %v3208, 4294901760
    %v3838 = vsub.f32 %v3208, %v3837
    %3839 = vmatprep.subr.mxu0 %v3838
    %v3840 = vand.u32 %v3207, 4294901760
    %v3841 = vsub.f32 %v3207, %v3840
    %3842 = vmatpush1.msra.mxu0 %v3841
    %v3843 = vand.u32 %v3210, 4294901760
    %v3844 = vsub.f32 %v3210, %v3843
    %3845 = vmatprep.subr.mxu0 %v3844
    %v3846 = vand.u32 %v3209, 4294901760
    %v3847 = vsub.f32 %v3209, %v3846
    %3848 = vmatpush1.msra.mxu0 %v3847
    %v3849 = vand.u32 %v3212, 4294901760
    %v3850 = vsub.f32 %v3212, %v3849
    %3851 = vmatprep.subr.mxu0 %v3850
    %v3852 = vand.u32 %v3211, 4294901760
    %v3853 = vsub.f32 %v3211, %v3852
    %3854 = vmatpush1.msra.mxu0 %v3853
    %v3855 = vand.u32 %v3214, 4294901760
    %v3856 = vsub.f32 %v3214, %v3855
    %3857 = vmatprep.subr.mxu0 %v3856
    %v3858 = vand.u32 %v3213, 4294901760
    %v3859 = vsub.f32 %v3213, %v3858
    %3860 = vmatpush1.msra.mxu0 %v3859
    %3861 = vmatprep.subr.mxu0 0.0
    %3862 = vmatpush1.msra.mxu0 0.0
    %3863 = vmatprep.subr.mxu0 0.0
    %3864 = vmatpush1.msra.mxu0 0.0
    %3865 = vmatprep.subr.mxu0 0.0
    %3866 = vmatpush1.msra.mxu0 0.0
    %3867 = vmatprep.subr.mxu0 0.0
    %3868 = vmatpush1.msra.mxu0 0.0
    %3869 = vmatprep.subr.mxu0 0.0
    %3870 = vmatpush1.msra.mxu0 0.0
    %3871 = vmatprep.subr.mxu0 0.0
    %3872 = vmatpush1.msra.mxu0 0.0
    %3873 = vmatprep.subr.mxu0 0.0
    %3874 = vmatpush1.msra.mxu0 0.0
    %3875 = vmatprep.subr.mxu0 0.0
    %3876 = vmatpush1.msra.mxu0 0.0
    %3877 = vmatprep.subr.mxu0 0.0
    %3878 = vmatpush1.msra.mxu0 0.0
    %3879 = vmatprep.subr.mxu0 0.0
    %3880 = vmatpush1.msra.mxu0 0.0
    %3881 = vmatprep.subr.mxu0 0.0
    %3882 = vmatpush1.msra.mxu0 0.0
    %3883 = vmatprep.subr.mxu0 0.0
    %3884 = vmatpush1.msra.mxu0 0.0
    %3885 = vmatprep.subr.mxu0 0.0
    %3886 = vmatpush1.msra.mxu0 0.0
    %3887 = vmatprep.subr.mxu0 0.0
    %3888 = vmatpush1.msra.mxu0 0.0
    %3889 = vmatprep.subr.mxu0 0.0
    %3890 = vmatpush1.msra.mxu0 0.0
    %3891 = vmatprep.subr.mxu0 0.0
    %3892 = vmatpush1.msra.mxu0 0.0
    %3893 = vmatprep.mubr.f32.mxu0 0.0
    %v3894 = vand.u32 %v3171, 4294901760
    %v3895 = vsub.f32 %v3171, %v3894
    %3896 = vmatmul.mubr.f32.gmra.mrb[0].mxu0 %v3895
    %v3897 = vpop.f32.mrb[0].mxu0
    %v3898 = vadd.f32 %v3684, %v3897
    %v3899 = vpop.f32.mrb[0].mxu0
    %v3900 = vadd.f32 %v3686, %v3899
    %3901 = vmatprep.mubr.f32.mxu0 0.0
    %v3902 = vand.u32 %v3172, 4294901760
    %v3903 = vsub.f32 %v3172, %v3902
    %3904 = vmatmul.mubr.f32.gmra.mrb[0].mxu0 %v3903
    %v3905 = vpop.f32.mrb[0].mxu0
    %v3906 = vadd.f32 %v3691, %v3905
    %v3907 = vpop.f32.mrb[0].mxu0
    %v3908 = vadd.f32 %v3693, %v3907
    %3909 = vmatprep.mubr.f32.mxu0 0.0
    %v3910 = vand.u32 %v3173, 4294901760
    %v3911 = vsub.f32 %v3173, %v3910
    %3912 = vmatmul.mubr.f32.gmra.mrb[0].mxu0 %v3911
    %v3913 = vpop.f32.mrb[0].mxu0
    %v3914 = vadd.f32 %v3698, %v3913
    %v3915 = vpop.f32.mrb[0].mxu0
    %v3916 = vadd.f32 %v3700, %v3915
    %3917 = vmatprep.mubr.f32.mxu0 0.0
    %v3918 = vand.u32 %v3174, 4294901760
    %v3919 = vsub.f32 %v3174, %v3918
    %3920 = vmatmul.mubr.f32.gmra.mrb[0].mxu0 %v3919
    %v3921 = vpop.f32.mrb[0].mxu0
    %v3922 = vadd.f32 %v3705, %v3921
    %v3923 = vpop.f32.mrb[0].mxu0
    %v3924 = vadd.f32 %v3707, %v3923
    %3925 = vmatprep.mubr.f32.mxu0 0.0
    %v3926 = vand.u32 %v3175, 4294901760
    %v3927 = vsub.f32 %v3175, %v3926
    %3928 = vmatmul.mubr.f32.gmra.mrb[0].mxu0 %v3927
    %v3929 = vpop.f32.mrb[0].mxu0
    %v3930 = vadd.f32 %v3712, %v3929
    %v3931 = vpop.f32.mrb[0].mxu0
    %v3932 = vadd.f32 %v3714, %v3931
    %3933 = vmatprep.mubr.f32.mxu0 0.0
    %v3934 = vand.u32 %v3176, 4294901760
    %v3935 = vsub.f32 %v3176, %v3934
    %3936 = vmatmul.mubr.f32.gmra.mrb[0].mxu0 %v3935
    %v3937 = vpop.f32.mrb[0].mxu0
    %v3938 = vadd.f32 %v3719, %v3937
    %v3939 = vpop.f32.mrb[0].mxu0
    %v3940 = vadd.f32 %v3721, %v3939
    %3941 = vmatprep.mubr.f32.mxu0 0.0
    %v3942 = vand.u32 %v3177, 4294901760
    %v3943 = vsub.f32 %v3177, %v3942
    %3944 = vmatmul.mubr.f32.gmra.mrb[0].mxu0 %v3943
    %v3945 = vpop.f32.mrb[0].mxu0
    %v3946 = vadd.f32 %v3726, %v3945
    %v3947 = vpop.f32.mrb[0].mxu0
    %v3948 = vadd.f32 %v3728, %v3947
    %3949 = vmatprep.mubr.f32.mxu0 0.0
    %v3950 = vand.u32 %v3178, 4294901760
    %v3951 = vsub.f32 %v3178, %v3950
    %3952 = vmatmul.mubr.f32.gmra.mrb[0].mxu0 %v3951
    %v3953 = vpop.f32.mrb[0].mxu0
    %v3954 = vadd.f32 %v3733, %v3953
    %v3955 = vpop.f32.mrb[0].mxu0
    %v3956 = vadd.f32 %v3735, %v3955
    %3957 = vmatprep.mubr.f32.mxu0 0.0
    %v3958 = vand.u32 %v3179, 4294901760
    %v3959 = vsub.f32 %v3179, %v3958
    %3960 = vmatmul.mubr.f32.gmra.mrb[0].mxu0 %v3959
    %v3961 = vpop.f32.mrb[0].mxu0
    %v3962 = vadd.f32 %v3740, %v3961
    %v3963 = vpop.f32.mrb[0].mxu0
    %v3964 = vadd.f32 %v3742, %v3963
    %3965 = vmatprep.mubr.f32.mxu0 0.0
    %v3966 = vand.u32 %v3180, 4294901760
    %v3967 = vsub.f32 %v3180, %v3966
    %3968 = vmatmul.mubr.f32.gmra.mrb[0].mxu0 %v3967
    %v3969 = vpop.f32.mrb[0].mxu0
    %v3970 = vadd.f32 %v3747, %v3969
    %v3971 = vpop.f32.mrb[0].mxu0
    %v3972 = vadd.f32 %v3749, %v3971
    %3973 = vmatprep.mubr.f32.mxu0 0.0
    %v3974 = vand.u32 %v3181, 4294901760
    %v3975 = vsub.f32 %v3181, %v3974
    %3976 = vmatmul.mubr.f32.gmra.mrb[0].mxu0 %v3975
    %v3977 = vpop.f32.mrb[0].mxu0
    %v3978 = vadd.f32 %v3754, %v3977
    %v3979 = vpop.f32.mrb[0].mxu0
    %v3980 = vadd.f32 %v3756, %v3979
    %3981 = vmatprep.mubr.f32.mxu0 0.0
    %v3982 = vand.u32 %v3182, 4294901760
    %v3983 = vsub.f32 %v3182, %v3982
    %3984 = vmatmul.mubr.f32.gmra.mrb[0].mxu0 %v3983
    %v3985 = vpop.f32.mrb[0].mxu0
    %v3986 = vadd.f32 %v3761, %v3985
    %v3987 = vpop.f32.mrb[0].mxu0
    %v3988 = vadd.f32 %v3763, %v3987
    %3989 = vdwg.mxu0
    %v3990 = vand.u32 %v3184, 4294901760
    %3991 = vmatprep.subr.mxu0 %v3990
    %v3992 = vand.u32 %v3183, 4294901760
    %3993 = vmatpush1.msra.mxu0 %v3992
    %v3994 = vand.u32 %v3186, 4294901760
    %3995 = vmatprep.subr.mxu0 %v3994
    %v3996 = vand.u32 %v3185, 4294901760
    %3997 = vmatpush1.msra.mxu0 %v3996
    %v3998 = vand.u32 %v3188, 4294901760
    %3999 = vmatprep.subr.mxu0 %v3998
    %v4000 = vand.u32 %v3187, 4294901760
    %4001 = vmatpush1.msra.mxu0 %v4000
    %v4002 = vand.u32 %v3190, 4294901760
    %4003 = vmatprep.subr.mxu0 %v4002
    %v4004 = vand.u32 %v3189, 4294901760
    %4005 = vmatpush1.msra.mxu0 %v4004
    %v4006 = vand.u32 %v3192, 4294901760
    %4007 = vmatprep.subr.mxu0 %v4006
    %v4008 = vand.u32 %v3191, 4294901760
    %4009 = vmatpush1.msra.mxu0 %v4008
    %v4010 = vand.u32 %v3194, 4294901760
    %4011 = vmatprep.subr.mxu0 %v4010
    %v4012 = vand.u32 %v3193, 4294901760
    %4013 = vmatpush1.msra.mxu0 %v4012
    %v4014 = vand.u32 %v3196, 4294901760
    %4015 = vmatprep.subr.mxu0 %v4014
    %v4016 = vand.u32 %v3195, 4294901760
    %4017 = vmatpush1.msra.mxu0 %v4016
    %v4018 = vand.u32 %v3198, 4294901760
    %4019 = vmatprep.subr.mxu0 %v4018
    %v4020 = vand.u32 %v3197, 4294901760
    %4021 = vmatpush1.msra.mxu0 %v4020
    %v4022 = vand.u32 %v3200, 4294901760
    %4023 = vmatprep.subr.mxu0 %v4022
    %v4024 = vand.u32 %v3199, 4294901760
    %4025 = vmatpush1.msra.mxu0 %v4024
    %v4026 = vand.u32 %v3202, 4294901760
    %4027 = vmatprep.subr.mxu0 %v4026
    %v4028 = vand.u32 %v3201, 4294901760
    %4029 = vmatpush1.msra.mxu0 %v4028
    %v4030 = vand.u32 %v3204, 4294901760
    %4031 = vmatprep.subr.mxu0 %v4030
    %v4032 = vand.u32 %v3203, 4294901760
    %4033 = vmatpush1.msra.mxu0 %v4032
    %v4034 = vand.u32 %v3206, 4294901760
    %4035 = vmatprep.subr.mxu0 %v4034
    %v4036 = vand.u32 %v3205, 4294901760
    %4037 = vmatpush1.msra.mxu0 %v4036
    %v4038 = vand.u32 %v3208, 4294901760
    %4039 = vmatprep.subr.mxu0 %v4038
    %v4040 = vand.u32 %v3207, 4294901760
    %4041 = vmatpush1.msra.mxu0 %v4040
    %v4042 = vand.u32 %v3210, 4294901760
    %4043 = vmatprep.subr.mxu0 %v4042
    %v4044 = vand.u32 %v3209, 4294901760
    %4045 = vmatpush1.msra.mxu0 %v4044
    %v4046 = vand.u32 %v3212, 4294901760
    %4047 = vmatprep.subr.mxu0 %v4046
    %v4048 = vand.u32 %v3211, 4294901760
    %4049 = vmatpush1.msra.mxu0 %v4048
    %v4050 = vand.u32 %v3214, 4294901760
    %4051 = vmatprep.subr.mxu0 %v4050
    %v4052 = vand.u32 %v3213, 4294901760
    %4053 = vmatpush1.msra.mxu0 %v4052
    %4054 = vmatprep.subr.mxu0 0.0
    %4055 = vmatpush1.msra.mxu0 0.0
    %4056 = vmatprep.subr.mxu0 0.0
    %4057 = vmatpush1.msra.mxu0 0.0
    %4058 = vmatprep.subr.mxu0 0.0
    %4059 = vmatpush1.msra.mxu0 0.0
    %4060 = vmatprep.subr.mxu0 0.0
    %4061 = vmatpush1.msra.mxu0 0.0
    %4062 = vmatprep.subr.mxu0 0.0
    %4063 = vmatpush1.msra.mxu0 0.0
    %4064 = vmatprep.subr.mxu0 0.0
    %4065 = vmatpush1.msra.mxu0 0.0
    %4066 = vmatprep.subr.mxu0 0.0
    %4067 = vmatpush1.msra.mxu0 0.0
    %4068 = vmatprep.subr.mxu0 0.0
    %4069 = vmatpush1.msra.mxu0 0.0
    %4070 = vmatprep.subr.mxu0 0.0
    %4071 = vmatpush1.msra.mxu0 0.0
    %4072 = vmatprep.subr.mxu0 0.0
    %4073 = vmatpush1.msra.mxu0 0.0
    %4074 = vmatprep.subr.mxu0 0.0
    %4075 = vmatpush1.msra.mxu0 0.0
    %4076 = vmatprep.subr.mxu0 0.0
    %4077 = vmatpush1.msra.mxu0 0.0
    %4078 = vmatprep.subr.mxu0 0.0
    %4079 = vmatpush1.msra.mxu0 0.0
    %4080 = vmatprep.subr.mxu0 0.0
    %4081 = vmatpush1.msra.mxu0 0.0
    %4082 = vmatprep.subr.mxu0 0.0
    %4083 = vmatpush1.msra.mxu0 0.0
    %4084 = vmatprep.subr.mxu0 0.0
    %4085 = vmatpush1.msra.mxu0 0.0
    %4086 = vmatprep.mubr.f32.mxu0 0.0
    %v4087 = vand.u32 %v3171, 4294901760
    %v4088 = vsub.f32 %v3171, %v4087
    %v4089 = vand.u32 %v4088, 4294901760
    %4090 = vmatmul.mubr.f32.gmra.mrb[0].mxu0 %v4089
    %v4091 = vpop.f32.mrb[0].mxu0
    %v4092 = vadd.f32 %v3898, %v4091
    %v4093 = vpop.f32.mrb[0].mxu0
    %v4094 = vadd.f32 %v3900, %v4093
    %4095 = vmatprep.mubr.f32.mxu0 0.0
    %v4096 = vand.u32 %v3172, 4294901760
    %v4097 = vsub.f32 %v3172, %v4096
    %v4098 = vand.u32 %v4097, 4294901760
    %4099 = vmatmul.mubr.f32.gmra.mrb[0].mxu0 %v4098
    %v4100 = vpop.f32.mrb[0].mxu0
    %v4101 = vadd.f32 %v3906, %v4100
    %v4102 = vpop.f32.mrb[0].mxu0
    %v4103 = vadd.f32 %v3908, %v4102
    %4104 = vmatprep.mubr.f32.mxu0 0.0
    %v4105 = vand.u32 %v3173, 4294901760
    %v4106 = vsub.f32 %v3173, %v4105
    %v4107 = vand.u32 %v4106, 4294901760
    %4108 = vmatmul.mubr.f32.gmra.mrb[0].mxu0 %v4107
    %v4109 = vpop.f32.mrb[0].mxu0
    %v4110 = vadd.f32 %v3914, %v4109
    %v4111 = vpop.f32.mrb[0].mxu0
    %v4112 = vadd.f32 %v3916, %v4111
    %4113 = vmatprep.mubr.f32.mxu0 0.0
    %v4114 = vand.u32 %v3174, 4294901760
    %v4115 = vsub.f32 %v3174, %v4114
    %v4116 = vand.u32 %v4115, 4294901760
    %4117 = vmatmul.mubr.f32.gmra.mrb[0].mxu0 %v4116
    %v4118 = vpop.f32.mrb[0].mxu0
    %v4119 = vadd.f32 %v3922, %v4118
    %v4120 = vpop.f32.mrb[0].mxu0
    %v4121 = vadd.f32 %v3924, %v4120
    %4122 = vmatprep.mubr.f32.mxu0 0.0
    %v4123 = vand.u32 %v3175, 4294901760
    %v4124 = vsub.f32 %v3175, %v4123
    %v4125 = vand.u32 %v4124, 4294901760
    %4126 = vmatmul.mubr.f32.gmra.mrb[0].mxu0 %v4125
    %v4127 = vpop.f32.mrb[0].mxu0
    %v4128 = vadd.f32 %v3930, %v4127
    %v4129 = vpop.f32.mrb[0].mxu0
    %v4130 = vadd.f32 %v3932, %v4129
    %4131 = vmatprep.mubr.f32.mxu0 0.0
    %v4132 = vand.u32 %v3176, 4294901760
    %v4133 = vsub.f32 %v3176, %v4132
    %v4134 = vand.u32 %v4133, 4294901760
    %4135 = vmatmul.mubr.f32.gmra.mrb[0].mxu0 %v4134
    %v4136 = vpop.f32.mrb[0].mxu0
    %v4137 = vadd.f32 %v3938, %v4136
    %v4138 = vpop.f32.mrb[0].mxu0
    %v4139 = vadd.f32 %v3940, %v4138
    %4140 = vmatprep.mubr.f32.mxu0 0.0
    %v4141 = vand.u32 %v3177, 4294901760
    %v4142 = vsub.f32 %v3177, %v4141
    %v4143 = vand.u32 %v4142, 4294901760
    %4144 = vmatmul.mubr.f32.gmra.mrb[0].mxu0 %v4143
    %v4145 = vpop.f32.mrb[0].mxu0
    %v4146 = vadd.f32 %v3946, %v4145
    %v4147 = vpop.f32.mrb[0].mxu0
    %v4148 = vadd.f32 %v3948, %v4147
    %4149 = vmatprep.mubr.f32.mxu0 0.0
    %v4150 = vand.u32 %v3178, 4294901760
    %v4151 = vsub.f32 %v3178, %v4150
    %v4152 = vand.u32 %v4151, 4294901760
    %4153 = vmatmul.mubr.f32.gmra.mrb[0].mxu0 %v4152
    %v4154 = vpop.f32.mrb[0].mxu0
    %v4155 = vadd.f32 %v3954, %v4154
    %v4156 = vpop.f32.mrb[0].mxu0
    %v4157 = vadd.f32 %v3956, %v4156
    %4158 = vmatprep.mubr.f32.mxu0 0.0
    %v4159 = vand.u32 %v3179, 4294901760
    %v4160 = vsub.f32 %v3179, %v4159
    %v4161 = vand.u32 %v4160, 4294901760
    %4162 = vmatmul.mubr.f32.gmra.mrb[0].mxu0 %v4161
    %v4163 = vpop.f32.mrb[0].mxu0
    %v4164 = vadd.f32 %v3962, %v4163
    %v4165 = vpop.f32.mrb[0].mxu0
    %v4166 = vadd.f32 %v3964, %v4165
    %4167 = vmatprep.mubr.f32.mxu0 0.0
    %v4168 = vand.u32 %v3180, 4294901760
    %v4169 = vsub.f32 %v3180, %v4168
    %v4170 = vand.u32 %v4169, 4294901760
    %4171 = vmatmul.mubr.f32.gmra.mrb[0].mxu0 %v4170
    %v4172 = vpop.f32.mrb[0].mxu0
    %v4173 = vadd.f32 %v3970, %v4172
    %v4174 = vpop.f32.mrb[0].mxu0
    %v4175 = vadd.f32 %v3972, %v4174
    %4176 = vmatprep.mubr.f32.mxu0 0.0
    %v4177 = vand.u32 %v3181, 4294901760
    %v4178 = vsub.f32 %v3181, %v4177
    %v4179 = vand.u32 %v4178, 4294901760
    %4180 = vmatmul.mubr.f32.gmra.mrb[0].mxu0 %v4179
    %v4181 = vpop.f32.mrb[0].mxu0
    %v4182 = vadd.f32 %v3978, %v4181
    %v4183 = vpop.f32.mrb[0].mxu0
    %v4184 = vadd.f32 %v3980, %v4183
    %4185 = vmatprep.mubr.f32.mxu0 0.0
    %v4186 = vand.u32 %v3182, 4294901760
    %v4187 = vsub.f32 %v3182, %v4186
    %v4188 = vand.u32 %v4187, 4294901760
    %4189 = vmatmul.mubr.f32.gmra.mrb[0].mxu0 %v4188
    %v4190 = vpop.f32.mrb[0].mxu0
    %v4191 = vadd.f32 %v3986, %v4190
    %v4192 = vpop.f32.mrb[0].mxu0
    %v4193 = vadd.f32 %v3988, %v4192
    %4194 = vdwg.mxu0
    %v4195 = vand.u32 %v3184, 4294901760
    %v4196 = vsub.f32 %v3184, %v4195
    %v4197 = vand.u32 %v4196, 4294901760
    %4198 = vmatprep.subr.mxu0 %v4197
    %v4199 = vand.u32 %v3183, 4294901760
    %v4200 = vsub.f32 %v3183, %v4199
    %v4201 = vand.u32 %v4200, 4294901760
    %4202 = vmatpush1.msra.mxu0 %v4201
    %v4203 = vand.u32 %v3186, 4294901760
    %v4204 = vsub.f32 %v3186, %v4203
    %v4205 = vand.u32 %v4204, 4294901760
    %4206 = vmatprep.subr.mxu0 %v4205
    %v4207 = vand.u32 %v3185, 4294901760
    %v4208 = vsub.f32 %v3185, %v4207
    %v4209 = vand.u32 %v4208, 4294901760
    %4210 = vmatpush1.msra.mxu0 %v4209
    %v4211 = vand.u32 %v3188, 4294901760
    %v4212 = vsub.f32 %v3188, %v4211
    %v4213 = vand.u32 %v4212, 4294901760
    %4214 = vmatprep.subr.mxu0 %v4213
    %v4215 = vand.u32 %v3187, 4294901760
    %v4216 = vsub.f32 %v3187, %v4215
    %v4217 = vand.u32 %v4216, 4294901760
    %4218 = vmatpush1.msra.mxu0 %v4217
    %v4219 = vand.u32 %v3190, 4294901760
    %v4220 = vsub.f32 %v3190, %v4219
    %v4221 = vand.u32 %v4220, 4294901760
    %4222 = vmatprep.subr.mxu0 %v4221
    %v4223 = vand.u32 %v3189, 4294901760
    %v4224 = vsub.f32 %v3189, %v4223
    %v4225 = vand.u32 %v4224, 4294901760
    %4226 = vmatpush1.msra.mxu0 %v4225
    %v4227 = vand.u32 %v3192, 4294901760
    %v4228 = vsub.f32 %v3192, %v4227
    %v4229 = vand.u32 %v4228, 4294901760
    %4230 = vmatprep.subr.mxu0 %v4229
    %v4231 = vand.u32 %v3191, 4294901760
    %v4232 = vsub.f32 %v3191, %v4231
    %v4233 = vand.u32 %v4232, 4294901760
    %4234 = vmatpush1.msra.mxu0 %v4233
    %v4235 = vand.u32 %v3194, 4294901760
    %v4236 = vsub.f32 %v3194, %v4235
    %v4237 = vand.u32 %v4236, 4294901760
    %4238 = vmatprep.subr.mxu0 %v4237
    %v4239 = vand.u32 %v3193, 4294901760
    %v4240 = vsub.f32 %v3193, %v4239
    %v4241 = vand.u32 %v4240, 4294901760
    %4242 = vmatpush1.msra.mxu0 %v4241
    %v4243 = vand.u32 %v3196, 4294901760
    %v4244 = vsub.f32 %v3196, %v4243
    %v4245 = vand.u32 %v4244, 4294901760
    %4246 = vmatprep.subr.mxu0 %v4245
    %v4247 = vand.u32 %v3195, 4294901760
    %v4248 = vsub.f32 %v3195, %v4247
    %v4249 = vand.u32 %v4248, 4294901760
    %4250 = vmatpush1.msra.mxu0 %v4249
    %v4251 = vand.u32 %v3198, 4294901760
    %v4252 = vsub.f32 %v3198, %v4251
    %v4253 = vand.u32 %v4252, 4294901760
    %4254 = vmatprep.subr.mxu0 %v4253
    %v4255 = vand.u32 %v3197, 4294901760
    %v4256 = vsub.f32 %v3197, %v4255
    %v4257 = vand.u32 %v4256, 4294901760
    %4258 = vmatpush1.msra.mxu0 %v4257
    %v4259 = vand.u32 %v3200, 4294901760
    %v4260 = vsub.f32 %v3200, %v4259
    %v4261 = vand.u32 %v4260, 4294901760
    %4262 = vmatprep.subr.mxu0 %v4261
    %v4263 = vand.u32 %v3199, 4294901760
    %v4264 = vsub.f32 %v3199, %v4263
    %v4265 = vand.u32 %v4264, 4294901760
    %4266 = vmatpush1.msra.mxu0 %v4265
    %v4267 = vand.u32 %v3202, 4294901760
    %v4268 = vsub.f32 %v3202, %v4267
    %v4269 = vand.u32 %v4268, 4294901760
    %4270 = vmatprep.subr.mxu0 %v4269
    %v4271 = vand.u32 %v3201, 4294901760
    %v4272 = vsub.f32 %v3201, %v4271
    %v4273 = vand.u32 %v4272, 4294901760
    %4274 = vmatpush1.msra.mxu0 %v4273
    %v4275 = vand.u32 %v3204, 4294901760
    %v4276 = vsub.f32 %v3204, %v4275
    %v4277 = vand.u32 %v4276, 4294901760
    %4278 = vmatprep.subr.mxu0 %v4277
    %v4279 = vand.u32 %v3203, 4294901760
    %v4280 = vsub.f32 %v3203, %v4279
    %v4281 = vand.u32 %v4280, 4294901760
    %4282 = vmatpush1.msra.mxu0 %v4281
    %v4283 = vand.u32 %v3206, 4294901760
    %v4284 = vsub.f32 %v3206, %v4283
    %v4285 = vand.u32 %v4284, 4294901760
    %4286 = vmatprep.subr.mxu0 %v4285
    %v4287 = vand.u32 %v3205, 4294901760
    %v4288 = vsub.f32 %v3205, %v4287
    %v4289 = vand.u32 %v4288, 4294901760
    %4290 = vmatpush1.msra.mxu0 %v4289
    %v4291 = vand.u32 %v3208, 4294901760
    %v4292 = vsub.f32 %v3208, %v4291
    %v4293 = vand.u32 %v4292, 4294901760
    %4294 = vmatprep.subr.mxu0 %v4293
    %v4295 = vand.u32 %v3207, 4294901760
    %v4296 = vsub.f32 %v3207, %v4295
    %v4297 = vand.u32 %v4296, 4294901760
    %4298 = vmatpush1.msra.mxu0 %v4297
    %v4299 = vand.u32 %v3210, 4294901760
    %v4300 = vsub.f32 %v3210, %v4299
    %v4301 = vand.u32 %v4300, 4294901760
    %4302 = vmatprep.subr.mxu0 %v4301
    %v4303 = vand.u32 %v3209, 4294901760
    %v4304 = vsub.f32 %v3209, %v4303
    %v4305 = vand.u32 %v4304, 4294901760
    %4306 = vmatpush1.msra.mxu0 %v4305
    %v4307 = vand.u32 %v3212, 4294901760
    %v4308 = vsub.f32 %v3212, %v4307
    %v4309 = vand.u32 %v4308, 4294901760
    %4310 = vmatprep.subr.mxu0 %v4309
    %v4311 = vand.u32 %v3211, 4294901760
    %v4312 = vsub.f32 %v3211, %v4311
    %v4313 = vand.u32 %v4312, 4294901760
    %4314 = vmatpush1.msra.mxu0 %v4313
    %v4315 = vand.u32 %v3214, 4294901760
    %v4316 = vsub.f32 %v3214, %v4315
    %v4317 = vand.u32 %v4316, 4294901760
    %4318 = vmatprep.subr.mxu0 %v4317
    %v4319 = vand.u32 %v3213, 4294901760
    %v4320 = vsub.f32 %v3213, %v4319
    %v4321 = vand.u32 %v4320, 4294901760
    %4322 = vmatpush1.msra.mxu0 %v4321
    %4323 = vmatprep.subr.mxu0 0.0
    %4324 = vmatpush1.msra.mxu0 0.0
    %4325 = vmatprep.subr.mxu0 0.0
    %4326 = vmatpush1.msra.mxu0 0.0
    %4327 = vmatprep.subr.mxu0 0.0
    %4328 = vmatpush1.msra.mxu0 0.0
    %4329 = vmatprep.subr.mxu0 0.0
    %4330 = vmatpush1.msra.mxu0 0.0
    %4331 = vmatprep.subr.mxu0 0.0
    %4332 = vmatpush1.msra.mxu0 0.0
    %4333 = vmatprep.subr.mxu0 0.0
    %4334 = vmatpush1.msra.mxu0 0.0
    %4335 = vmatprep.subr.mxu0 0.0
    %4336 = vmatpush1.msra.mxu0 0.0
    %4337 = vmatprep.subr.mxu0 0.0
    %4338 = vmatpush1.msra.mxu0 0.0
    %4339 = vmatprep.subr.mxu0 0.0
    %4340 = vmatpush1.msra.mxu0 0.0
    %4341 = vmatprep.subr.mxu0 0.0
    %4342 = vmatpush1.msra.mxu0 0.0
    %4343 = vmatprep.subr.mxu0 0.0
    %4344 = vmatpush1.msra.mxu0 0.0
    %4345 = vmatprep.subr.mxu0 0.0
    %4346 = vmatpush1.msra.mxu0 0.0
    %4347 = vmatprep.subr.mxu0 0.0
    %4348 = vmatpush1.msra.mxu0 0.0
    %4349 = vmatprep.subr.mxu0 0.0
    %4350 = vmatpush1.msra.mxu0 0.0
    %4351 = vmatprep.subr.mxu0 0.0
    %4352 = vmatpush1.msra.mxu0 0.0
    %4353 = vmatprep.subr.mxu0 0.0
    %4354 = vmatpush1.msra.mxu0 0.0
    %4355 = vmatprep.mubr.f32.mxu0 0.0
    %v4356 = vand.u32 %v3171, 4294901760
    %4357 = vmatmul.mubr.f32.gmra.mrb[0].mxu0 %v4356
    %v4358 = vpop.f32.mrb[0].mxu0
    %v4359 = vadd.f32 %v4092, %v4358
    %v4360 = vpop.f32.mrb[0].mxu0
    %v4361 = vadd.f32 %v4094, %v4360
    %4362 = vmatprep.mubr.f32.mxu0 0.0
    %v4363 = vand.u32 %v3172, 4294901760
    %4364 = vmatmul.mubr.f32.gmra.mrb[0].mxu0 %v4363
    %v4365 = vpop.f32.mrb[0].mxu0
    %v4366 = vadd.f32 %v4101, %v4365
    %v4367 = vpop.f32.mrb[0].mxu0
    %v4368 = vadd.f32 %v4103, %v4367
    %4369 = vmatprep.mubr.f32.mxu0 0.0
    %v4370 = vand.u32 %v3173, 4294901760
    %4371 = vmatmul.mubr.f32.gmra.mrb[0].mxu0 %v4370
    %v4372 = vpop.f32.mrb[0].mxu0
    %v4373 = vadd.f32 %v4110, %v4372
    %v4374 = vpop.f32.mrb[0].mxu0
    %v4375 = vadd.f32 %v4112, %v4374
    %4376 = vmatprep.mubr.f32.mxu0 0.0
    %v4377 = vand.u32 %v3174, 4294901760
    %4378 = vmatmul.mubr.f32.gmra.mrb[0].mxu0 %v4377
    %v4379 = vpop.f32.mrb[0].mxu0
    %v4380 = vadd.f32 %v4119, %v4379
    %v4381 = vpop.f32.mrb[0].mxu0
    %v4382 = vadd.f32 %v4121, %v4381
    %4383 = vmatprep.mubr.f32.mxu0 0.0
    %v4384 = vand.u32 %v3175, 4294901760
    %4385 = vmatmul.mubr.f32.gmra.mrb[0].mxu0 %v4384
    %v4386 = vpop.f32.mrb[0].mxu0
    %v4387 = vadd.f32 %v4128, %v4386
    %v4388 = vpop.f32.mrb[0].mxu0
    %v4389 = vadd.f32 %v4130, %v4388
    %4390 = vmatprep.mubr.f32.mxu0 0.0
    %v4391 = vand.u32 %v3176, 4294901760
    %4392 = vmatmul.mubr.f32.gmra.mrb[0].mxu0 %v4391
    %v4393 = vpop.f32.mrb[0].mxu0
    %v4394 = vadd.f32 %v4137, %v4393
    %v4395 = vpop.f32.mrb[0].mxu0
    %v4396 = vadd.f32 %v4139, %v4395
    %4397 = vmatprep.mubr.f32.mxu0 0.0
    %v4398 = vand.u32 %v3177, 4294901760
    %4399 = vmatmul.mubr.f32.gmra.mrb[0].mxu0 %v4398
    %v4400 = vpop.f32.mrb[0].mxu0
    %v4401 = vadd.f32 %v4146, %v4400
    %v4402 = vpop.f32.mrb[0].mxu0
    %v4403 = vadd.f32 %v4148, %v4402
    %4404 = vmatprep.mubr.f32.mxu0 0.0
    %v4405 = vand.u32 %v3178, 4294901760
    %4406 = vmatmul.mubr.f32.gmra.mrb[0].mxu0 %v4405
    %v4407 = vpop.f32.mrb[0].mxu0
    %v4408 = vadd.f32 %v4155, %v4407
    %v4409 = vpop.f32.mrb[0].mxu0
    %v4410 = vadd.f32 %v4157, %v4409
    %4411 = vmatprep.mubr.f32.mxu0 0.0
    %v4412 = vand.u32 %v3179, 4294901760
    %4413 = vmatmul.mubr.f32.gmra.mrb[0].mxu0 %v4412
    %v4414 = vpop.f32.mrb[0].mxu0
    %v4415 = vadd.f32 %v4164, %v4414
    %v4416 = vpop.f32.mrb[0].mxu0
    %v4417 = vadd.f32 %v4166, %v4416
    %4418 = vmatprep.mubr.f32.mxu0 0.0
    %v4419 = vand.u32 %v3180, 4294901760
    %4420 = vmatmul.mubr.f32.gmra.mrb[0].mxu0 %v4419
    %v4421 = vpop.f32.mrb[0].mxu0
    %v4422 = vadd.f32 %v4173, %v4421
    %v4423 = vpop.f32.mrb[0].mxu0
    %v4424 = vadd.f32 %v4175, %v4423
    %4425 = vmatprep.mubr.f32.mxu0 0.0
    %v4426 = vand.u32 %v3181, 4294901760
    %4427 = vmatmul.mubr.f32.gmra.mrb[0].mxu0 %v4426
    %v4428 = vpop.f32.mrb[0].mxu0
    %v4429 = vadd.f32 %v4182, %v4428
    %v4430 = vpop.f32.mrb[0].mxu0
    %v4431 = vadd.f32 %v4184, %v4430
    %4432 = vmatprep.mubr.f32.mxu0 0.0
    %v4433 = vand.u32 %v3182, 4294901760
    %4434 = vmatmul.mubr.f32.gmra.mrb[0].mxu0 %v4433
    %v4435 = vpop.f32.mrb[0].mxu0
    %v4436 = vadd.f32 %v4191, %v4435
    %v4437 = vpop.f32.mrb[0].mxu0
    %v4438 = vadd.f32 %v4193, %v4437
    %4439 = vdwg.mxu0
    %v4440 = vand.u32 %v3184, 4294901760
    %4441 = vmatprep.subr.mxu0 %v4440
    %v4442 = vand.u32 %v3183, 4294901760
    %4443 = vmatpush1.msra.mxu0 %v4442
    %v4444 = vand.u32 %v3186, 4294901760
    %4445 = vmatprep.subr.mxu0 %v4444
    %v4446 = vand.u32 %v3185, 4294901760
    %4447 = vmatpush1.msra.mxu0 %v4446
    %v4448 = vand.u32 %v3188, 4294901760
    %4449 = vmatprep.subr.mxu0 %v4448
    %v4450 = vand.u32 %v3187, 4294901760
    %4451 = vmatpush1.msra.mxu0 %v4450
    %v4452 = vand.u32 %v3190, 4294901760
    %4453 = vmatprep.subr.mxu0 %v4452
    %v4454 = vand.u32 %v3189, 4294901760
    %4455 = vmatpush1.msra.mxu0 %v4454
    %v4456 = vand.u32 %v3192, 4294901760
    %4457 = vmatprep.subr.mxu0 %v4456
    %v4458 = vand.u32 %v3191, 4294901760
    %4459 = vmatpush1.msra.mxu0 %v4458
    %v4460 = vand.u32 %v3194, 4294901760
    %4461 = vmatprep.subr.mxu0 %v4460
    %v4462 = vand.u32 %v3193, 4294901760
    %4463 = vmatpush1.msra.mxu0 %v4462
    %v4464 = vand.u32 %v3196, 4294901760
    %4465 = vmatprep.subr.mxu0 %v4464
    %v4466 = vand.u32 %v3195, 4294901760
    %4467 = vmatpush1.msra.mxu0 %v4466
    %v4468 = vand.u32 %v3198, 4294901760
    %4469 = vmatprep.subr.mxu0 %v4468
    %v4470 = vand.u32 %v3197, 4294901760
    %4471 = vmatpush1.msra.mxu0 %v4470
    %v4472 = vand.u32 %v3200, 4294901760
    %4473 = vmatprep.subr.mxu0 %v4472
    %v4474 = vand.u32 %v3199, 4294901760
    %4475 = vmatpush1.msra.mxu0 %v4474
    %v4476 = vand.u32 %v3202, 4294901760
    %4477 = vmatprep.subr.mxu0 %v4476
    %v4478 = vand.u32 %v3201, 4294901760
    %4479 = vmatpush1.msra.mxu0 %v4478
    %v4480 = vand.u32 %v3204, 4294901760
    %4481 = vmatprep.subr.mxu0 %v4480
    %v4482 = vand.u32 %v3203, 4294901760
    %4483 = vmatpush1.msra.mxu0 %v4482
    %v4484 = vand.u32 %v3206, 4294901760
    %4485 = vmatprep.subr.mxu0 %v4484
    %v4486 = vand.u32 %v3205, 4294901760
    %4487 = vmatpush1.msra.mxu0 %v4486
    %v4488 = vand.u32 %v3208, 4294901760
    %4489 = vmatprep.subr.mxu0 %v4488
    %v4490 = vand.u32 %v3207, 4294901760
    %4491 = vmatpush1.msra.mxu0 %v4490
    %v4492 = vand.u32 %v3210, 4294901760
    %4493 = vmatprep.subr.mxu0 %v4492
    %v4494 = vand.u32 %v3209, 4294901760
    %4495 = vmatpush1.msra.mxu0 %v4494
    %v4496 = vand.u32 %v3212, 4294901760
    %4497 = vmatprep.subr.mxu0 %v4496
    %v4498 = vand.u32 %v3211, 4294901760
    %4499 = vmatpush1.msra.mxu0 %v4498
    %v4500 = vand.u32 %v3214, 4294901760
    %4501 = vmatprep.subr.mxu0 %v4500
    %v4502 = vand.u32 %v3213, 4294901760
    %4503 = vmatpush1.msra.mxu0 %v4502
    %4504 = vmatprep.subr.mxu0 0.0
    %4505 = vmatpush1.msra.mxu0 0.0
    %4506 = vmatprep.subr.mxu0 0.0
    %4507 = vmatpush1.msra.mxu0 0.0
    %4508 = vmatprep.subr.mxu0 0.0
    %4509 = vmatpush1.msra.mxu0 0.0
    %4510 = vmatprep.subr.mxu0 0.0
    %4511 = vmatpush1.msra.mxu0 0.0
    %4512 = vmatprep.subr.mxu0 0.0
    %4513 = vmatpush1.msra.mxu0 0.0
    %4514 = vmatprep.subr.mxu0 0.0
    %4515 = vmatpush1.msra.mxu0 0.0
    %4516 = vmatprep.subr.mxu0 0.0
    %4517 = vmatpush1.msra.mxu0 0.0
    %4518 = vmatprep.subr.mxu0 0.0
    %4519 = vmatpush1.msra.mxu0 0.0
    %4520 = vmatprep.subr.mxu0 0.0
    %4521 = vmatpush1.msra.mxu0 0.0
    %4522 = vmatprep.subr.mxu0 0.0
    %4523 = vmatpush1.msra.mxu0 0.0
    %4524 = vmatprep.subr.mxu0 0.0
    %4525 = vmatpush1.msra.mxu0 0.0
    %4526 = vmatprep.subr.mxu0 0.0
    %4527 = vmatpush1.msra.mxu0 0.0
    %4528 = vmatprep.subr.mxu0 0.0
    %4529 = vmatpush1.msra.mxu0 0.0
    %4530 = vmatprep.subr.mxu0 0.0
    %4531 = vmatpush1.msra.mxu0 0.0
    %4532 = vmatprep.subr.mxu0 0.0
    %4533 = vmatpush1.msra.mxu0 0.0
    %4534 = vmatprep.subr.mxu0 0.0
    %4535 = vmatpush1.msra.mxu0 0.0
    %4536 = vmatprep.mubr.f32.mxu0 0.0
    %v4537 = vand.u32 %v3171, 4294901760
    %4538 = vmatmul.mubr.f32.gmra.mrb[0].mxu0 %v4537
    %v4539 = vpop.f32.mrb[0].mxu0
    %v4540 = vadd.f32 %v4359, %v4539
    %v4541 = vpop.f32.mrb[0].mxu0
    %v4542 = vadd.f32 %v4361, %v4541
    %4543 = vmatprep.mubr.f32.mxu0 0.0
    %v4544 = vand.u32 %v3172, 4294901760
    %4545 = vmatmul.mubr.f32.gmra.mrb[0].mxu0 %v4544
    %v4546 = vpop.f32.mrb[0].mxu0
    %v4547 = vadd.f32 %v4366, %v4546
    %v4548 = vpop.f32.mrb[0].mxu0
    %v4549 = vadd.f32 %v4368, %v4548
    %4550 = vmatprep.mubr.f32.mxu0 0.0
    %v4551 = vand.u32 %v3173, 4294901760
    %4552 = vmatmul.mubr.f32.gmra.mrb[0].mxu0 %v4551
    %v4553 = vpop.f32.mrb[0].mxu0
    %v4554 = vadd.f32 %v4373, %v4553
    %v4555 = vpop.f32.mrb[0].mxu0
    %v4556 = vadd.f32 %v4375, %v4555
    %4557 = vmatprep.mubr.f32.mxu0 0.0
    %v4558 = vand.u32 %v3174, 4294901760
    %4559 = vmatmul.mubr.f32.gmra.mrb[0].mxu0 %v4558
    %v4560 = vpop.f32.mrb[0].mxu0
    %v4561 = vadd.f32 %v4380, %v4560
    %v4562 = vpop.f32.mrb[0].mxu0
    %v4563 = vadd.f32 %v4382, %v4562
    %4564 = vmatprep.mubr.f32.mxu0 0.0
    %v4565 = vand.u32 %v3175, 4294901760
    %4566 = vmatmul.mubr.f32.gmra.mrb[0].mxu0 %v4565
    %v4567 = vpop.f32.mrb[0].mxu0
    %v4568 = vadd.f32 %v4387, %v4567
    %v4569 = vpop.f32.mrb[0].mxu0
    %v4570 = vadd.f32 %v4389, %v4569
    %4571 = vmatprep.mubr.f32.mxu0 0.0
    %v4572 = vand.u32 %v3176, 4294901760
    %4573 = vmatmul.mubr.f32.gmra.mrb[0].mxu0 %v4572
    %v4574 = vpop.f32.mrb[0].mxu0
    %v4575 = vadd.f32 %v4394, %v4574
    %v4576 = vpop.f32.mrb[0].mxu0
    %v4577 = vadd.f32 %v4396, %v4576
    %4578 = vmatprep.mubr.f32.mxu0 0.0
    %v4579 = vand.u32 %v3177, 4294901760
    %4580 = vmatmul.mubr.f32.gmra.mrb[0].mxu0 %v4579
    %v4581 = vpop.f32.mrb[0].mxu0
    %v4582 = vadd.f32 %v4401, %v4581
    %v4583 = vpop.f32.mrb[0].mxu0
    %v4584 = vadd.f32 %v4403, %v4583
    %4585 = vmatprep.mubr.f32.mxu0 0.0
    %v4586 = vand.u32 %v3178, 4294901760
    %4587 = vmatmul.mubr.f32.gmra.mrb[0].mxu0 %v4586
    %v4588 = vpop.f32.mrb[0].mxu0
    %v4589 = vadd.f32 %v4408, %v4588
    %v4590 = vpop.f32.mrb[0].mxu0
    %v4591 = vadd.f32 %v4410, %v4590
    %4592 = vmatprep.mubr.f32.mxu0 0.0
    %v4593 = vand.u32 %v3179, 4294901760
    %4594 = vmatmul.mubr.f32.gmra.mrb[0].mxu0 %v4593
    %v4595 = vpop.f32.mrb[0].mxu0
    %v4596 = vadd.f32 %v4415, %v4595
    %v4597 = vpop.f32.mrb[0].mxu0
    %v4598 = vadd.f32 %v4417, %v4597
    %4599 = vmatprep.mubr.f32.mxu0 0.0
    %v4600 = vand.u32 %v3180, 4294901760
    %4601 = vmatmul.mubr.f32.gmra.mrb[0].mxu0 %v4600
    %v4602 = vpop.f32.mrb[0].mxu0
    %v4603 = vadd.f32 %v4422, %v4602
    %v4604 = vpop.f32.mrb[0].mxu0
    %v4605 = vadd.f32 %v4424, %v4604
    %4606 = vmatprep.mubr.f32.mxu0 0.0
    %v4607 = vand.u32 %v3181, 4294901760
    %4608 = vmatmul.mubr.f32.gmra.mrb[0].mxu0 %v4607
    %v4609 = vpop.f32.mrb[0].mxu0
    %v4610 = vadd.f32 %v4429, %v4609
    %v4611 = vpop.f32.mrb[0].mxu0
    %v4612 = vadd.f32 %v4431, %v4611
    %4613 = vmatprep.mubr.f32.mxu0 0.0
    %v4614 = vand.u32 %v3182, 4294901760
    %4615 = vmatmul.mubr.f32.gmra.mrb[0].mxu0 %v4614
    %v4616 = vpop.f32.mrb[0].mxu0
    %v4617 = vadd.f32 %v4436, %v4616
    %v4618 = vpop.f32.mrb[0].mxu0
    %v4619 = vadd.f32 %v4438, %v4618
    %4620 = vdwg.mxu0
    %v4621 = vxor.u32 %v4542, 2147483648
    %v4622 = vxor.u32 %v4549, 2147483648
    %v4623 = vxor.u32 %v4556, 2147483648
    %v4624 = vxor.u32 %v4563, 2147483648
    %v4625 = vxor.u32 %v4570, 2147483648
    %v4626 = vxor.u32 %v4577, 2147483648
    %v4627 = vxor.u32 %v4584, 2147483648
    %v4628 = vxor.u32 %v4591, 2147483648
    %v4629 = vxor.u32 %v4598, 2147483648
    %v4630 = vxor.u32 %v4605, 2147483648
    %v4631 = vxor.u32 %v4612, 2147483648
    %v4632 = vxor.u32 %v4619, 2147483648
    %v4633 = vmul.f32 %v4621, 1.442695
    %v4634 = vpow.pop %v4633
    %v4635 = vmul.f32 %v4622, 1.442695
    %v4636 = vpow.pop %v4635
    %v4637 = vmul.f32 %v4623, 1.442695
    %v4638 = vpow.pop %v4637
    %v4639 = vmul.f32 %v4624, 1.442695
    %v4640 = vpow.pop %v4639
    %v4641 = vmul.f32 %v4625, 1.442695
    %v4642 = vpow.pop %v4641
    %v4643 = vmul.f32 %v4626, 1.442695
    %v4644 = vpow.pop %v4643
    %v4645 = vmul.f32 %v4627, 1.442695
    %v4646 = vpow.pop %v4645
    %v4647 = vmul.f32 %v4628, 1.442695
    %v4648 = vpow.pop %v4647
    %v4649 = vmul.f32 %v4629, 1.442695
    %v4650 = vpow.pop %v4649
    %v4651 = vmul.f32 %v4630, 1.442695
    %v4652 = vpow.pop %v4651
    %v4653 = vmul.f32 %v4631, 1.442695
    %v4654 = vpow.pop %v4653
    %v4655 = vmul.f32 %v4632, 1.442695
    %v4656 = vpow.pop %v4655
    %v4657 = vadd.f32 %v4634, 1.0
    %v4658 = vadd.f32 %v4636, 1.0
    %v4659 = vadd.f32 %v4638, 1.0
    %v4660 = vadd.f32 %v4640, 1.0
    %v4661 = vadd.f32 %v4642, 1.0
    %v4662 = vadd.f32 %v4644, 1.0
    %v4663 = vadd.f32 %v4646, 1.0
    %v4664 = vadd.f32 %v4648, 1.0
    %v4665 = vadd.f32 %v4650, 1.0
    %v4666 = vadd.f32 %v4652, 1.0
    %v4667 = vadd.f32 %v4654, 1.0
    %v4668 = vadd.f32 %v4656, 1.0
    %v4669 = vrcp.pop %v4657
    %v4670 = vmul.f32 1.0, %v4669
    %v4671 = vrcp.pop %v4658
    %v4672 = vmul.f32 1.0, %v4671
    %v4673 = vrcp.pop %v4659
    %v4674 = vmul.f32 1.0, %v4673
    %v4675 = vrcp.pop %v4660
    %v4676 = vmul.f32 1.0, %v4675
    %v4677 = vrcp.pop %v4661
    %v4678 = vmul.f32 1.0, %v4677
    %v4679 = vrcp.pop %v4662
    %v4680 = vmul.f32 1.0, %v4679
    %v4681 = vrcp.pop %v4663
    %v4682 = vmul.f32 1.0, %v4681
    %v4683 = vrcp.pop %v4664
    %v4684 = vmul.f32 1.0, %v4683
    %v4685 = vrcp.pop %v4665
    %v4686 = vmul.f32 1.0, %v4685
    %v4687 = vrcp.pop %v4666
    %v4688 = vmul.f32 1.0, %v4687
    %v4689 = vrcp.pop %v4667
    %v4690 = vmul.f32 1.0, %v4689
    %v4691 = vrcp.pop %v4668
    %v4692 = vmul.f32 1.0, %v4691
    %v4693 = vmul.f32 %v4540, %v4670
    %v4694 = vmul.f32 %v4547, %v4672
    %v4695 = vmul.f32 %v4554, %v4674
    %v4696 = vmul.f32 %v4561, %v4676
    %v4697 = vmul.f32 %v4568, %v4678
    %v4698 = vmul.f32 %v4575, %v4680
    %v4699 = vmul.f32 %v4582, %v4682
    %v4700 = vmul.f32 %v4589, %v4684
    %v4701 = vmul.f32 %v4596, %v4686
    %v4702 = vmul.f32 %v4603, %v4688
    %v4703 = vmul.f32 %v4610, %v4690
    %v4704 = vmul.f32 %v4617, %v4692
    %v4705 = vld [vmem:[#allocation3 + $0x60] sm:$0xff]
    %v4706 = vld [vmem:[#allocation3 + $0x68] sm:$0xff]
    %v4707 = vld [vmem:[#allocation3 + $0x70] sm:$0xff]
    %v4708 = vld [vmem:[#allocation3 + $0x78] sm:$0xff]
    %v4709 = vld [vmem:[#allocation3 + $0x80] sm:$0xff]
    %v4710 = vld [vmem:[#allocation3 + $0x88] sm:$0xff]
    %v4711 = vld [vmem:[#allocation3 + $0x90] sm:$0xff]
    %v4712 = vld [vmem:[#allocation3 + $0x98] sm:$0xff]
    %v4713 = vld [vmem:[#allocation3 + $0xa0] sm:$0xff]
    %v4714 = vld [vmem:[#allocation3 + $0xa8] sm:$0xff]
    %v4715 = vld [vmem:[#allocation3 + $0xb0] sm:$0xff]
    %v4716 = vld [vmem:[#allocation3 + $0xb8] sm:$0xff]
    %v4717 = vld [vmem:[#allocation9] sm:$0xff]
    %v4718 = vld [vmem:[#allocation9 + $0x8] sm:$0xff]
    %v4719 = vld [vmem:[#allocation9 + $0x10] sm:$0xff]
    %v4720 = vld [vmem:[#allocation9 + $0x18] sm:$0xff]
    %v4721 = vld [vmem:[#allocation9 + $0x20] sm:$0xff]
    %v4722 = vld [vmem:[#allocation9 + $0x28] sm:$0xff]
    %v4723 = vld [vmem:[#allocation9 + $0x30] sm:$0xff]
    %v4724 = vld [vmem:[#allocation9 + $0x38] sm:$0xff]
    %v4725 = vld [vmem:[#allocation9 + $0x40] sm:$0xff]
    %v4726 = vld [vmem:[#allocation9 + $0x48] sm:$0xff]
    %v4727 = vld [vmem:[#allocation9 + $0x50] sm:$0xff]
    %v4728 = vld [vmem:[#allocation9 + $0x58] sm:$0xff]
    %v4729 = vld [vmem:[#allocation9 + $0x60] sm:$0xff]
    %v4730 = vld [vmem:[#allocation9 + $0x68] sm:$0xff]
    %v4731 = vld [vmem:[#allocation9 + $0x70] sm:$0xff]
    %v4732 = vld [vmem:[#allocation9 + $0x78] sm:$0xff]
    %4733 = vmatprep.subr.mxu0 0.0
    %v4734 = vand.u32 %v4717, 4294901760
    %4735 = vmatpush1.msra.mxu0 %v4734
    %4736 = vmatprep.subr.mxu0 0.0
    %v4737 = vand.u32 %v4718, 4294901760
    %4738 = vmatpush1.msra.mxu0 %v4737
    %4739 = vmatprep.subr.mxu0 0.0
    %v4740 = vand.u32 %v4719, 4294901760
    %4741 = vmatpush1.msra.mxu0 %v4740
    %4742 = vmatprep.subr.mxu0 0.0
    %v4743 = vand.u32 %v4720, 4294901760
    %4744 = vmatpush1.msra.mxu0 %v4743
    %4745 = vmatprep.subr.mxu0 0.0
    %v4746 = vand.u32 %v4721, 4294901760
    %4747 = vmatpush1.msra.mxu0 %v4746
    %4748 = vmatprep.subr.mxu0 0.0
    %v4749 = vand.u32 %v4722, 4294901760
    %4750 = vmatpush1.msra.mxu0 %v4749
    %4751 = vmatprep.subr.mxu0 0.0
    %v4752 = vand.u32 %v4723, 4294901760
    %4753 = vmatpush1.msra.mxu0 %v4752
    %4754 = vmatprep.subr.mxu0 0.0
    %v4755 = vand.u32 %v4724, 4294901760
    %4756 = vmatpush1.msra.mxu0 %v4755
    %4757 = vmatprep.subr.mxu0 0.0
    %v4758 = vand.u32 %v4725, 4294901760
    %4759 = vmatpush1.msra.mxu0 %v4758
    %4760 = vmatprep.subr.mxu0 0.0
    %v4761 = vand.u32 %v4726, 4294901760
    %4762 = vmatpush1.msra.mxu0 %v4761
    %4763 = vmatprep.subr.mxu0 0.0
    %v4764 = vand.u32 %v4727, 4294901760
    %4765 = vmatpush1.msra.mxu0 %v4764
    %4766 = vmatprep.subr.mxu0 0.0
    %v4767 = vand.u32 %v4728, 4294901760
    %4768 = vmatpush1.msra.mxu0 %v4767
    %4769 = vmatprep.subr.mxu0 0.0
    %v4770 = vand.u32 %v4729, 4294901760
    %4771 = vmatpush1.msra.mxu0 %v4770
    %4772 = vmatprep.subr.mxu0 0.0
    %v4773 = vand.u32 %v4730, 4294901760
    %4774 = vmatpush1.msra.mxu0 %v4773
    %4775 = vmatprep.subr.mxu0 0.0
    %v4776 = vand.u32 %v4731, 4294901760
    %4777 = vmatpush1.msra.mxu0 %v4776
    %4778 = vmatprep.subr.mxu0 0.0
    %v4779 = vand.u32 %v4732, 4294901760
    %4780 = vmatpush1.msra.mxu0 %v4779
    %4781 = vmatprep.subr.mxu0 0.0
    %4782 = vmatpush1.msra.mxu0 0.0
    %4783 = vmatprep.subr.mxu0 0.0
    %4784 = vmatpush1.msra.mxu0 0.0
    %4785 = vmatprep.subr.mxu0 0.0
    %4786 = vmatpush1.msra.mxu0 0.0
    %4787 = vmatprep.subr.mxu0 0.0
    %4788 = vmatpush1.msra.mxu0 0.0
    %4789 = vmatprep.subr.mxu0 0.0
    %4790 = vmatpush1.msra.mxu0 0.0
    %4791 = vmatprep.subr.mxu0 0.0
    %4792 = vmatpush1.msra.mxu0 0.0
    %4793 = vmatprep.subr.mxu0 0.0
    %4794 = vmatpush1.msra.mxu0 0.0
    %4795 = vmatprep.subr.mxu0 0.0
    %4796 = vmatpush1.msra.mxu0 0.0
    %4797 = vmatprep.subr.mxu0 0.0
    %4798 = vmatpush1.msra.mxu0 0.0
    %4799 = vmatprep.subr.mxu0 0.0
    %4800 = vmatpush1.msra.mxu0 0.0
    %4801 = vmatprep.subr.mxu0 0.0
    %4802 = vmatpush1.msra.mxu0 0.0
    %4803 = vmatprep.subr.mxu0 0.0
    %4804 = vmatpush1.msra.mxu0 0.0
    %4805 = vmatprep.subr.mxu0 0.0
    %4806 = vmatpush1.msra.mxu0 0.0
    %4807 = vmatprep.subr.mxu0 0.0
    %4808 = vmatpush1.msra.mxu0 0.0
    %4809 = vmatprep.subr.mxu0 0.0
    %4810 = vmatpush1.msra.mxu0 0.0
    %4811 = vmatprep.subr.mxu0 0.0
    %4812 = vmatpush1.msra.mxu0 0.0
    %4813 = vmatprep.mubr.f32.mxu0 0.0
    %v4814 = vand.u32 %v4693, 4294901760
    %v4815 = vsub.f32 %v4693, %v4814
    %v4816 = vand.u32 %v4815, 4294901760
    %v4817 = vsub.f32 %v4815, %v4816
    %v4818 = vand.u32 %v4817, 4294901760
    %4819 = vmatmul.mubr.f32.gmra.mrb[0].mxu0 %v4818
    %v4820 = vpop.f32.mrb[0].mxu0
    %v4821 = vadd.f32 0.0, %v4820
    %v4822 = vpop.f32.mrb[0].mxu0
    %4823 = vmatprep.mubr.f32.mxu0 0.0
    %v4824 = vand.u32 %v4694, 4294901760
    %v4825 = vsub.f32 %v4694, %v4824
    %v4826 = vand.u32 %v4825, 4294901760
    %v4827 = vsub.f32 %v4825, %v4826
    %v4828 = vand.u32 %v4827, 4294901760
    %4829 = vmatmul.mubr.f32.gmra.mrb[0].mxu0 %v4828
    %v4830 = vpop.f32.mrb[0].mxu0
    %v4831 = vadd.f32 0.0, %v4830
    %v4832 = vpop.f32.mrb[0].mxu0
    %4833 = vmatprep.mubr.f32.mxu0 0.0
    %v4834 = vand.u32 %v4695, 4294901760
    %v4835 = vsub.f32 %v4695, %v4834
    %v4836 = vand.u32 %v4835, 4294901760
    %v4837 = vsub.f32 %v4835, %v4836
    %v4838 = vand.u32 %v4837, 4294901760
    %4839 = vmatmul.mubr.f32.gmra.mrb[0].mxu0 %v4838
    %v4840 = vpop.f32.mrb[0].mxu0
    %v4841 = vadd.f32 0.0, %v4840
    %v4842 = vpop.f32.mrb[0].mxu0
    %4843 = vmatprep.mubr.f32.mxu0 0.0
    %v4844 = vand.u32 %v4696, 4294901760
    %v4845 = vsub.f32 %v4696, %v4844
    %v4846 = vand.u32 %v4845, 4294901760
    %v4847 = vsub.f32 %v4845, %v4846
    %v4848 = vand.u32 %v4847, 4294901760
    %4849 = vmatmul.mubr.f32.gmra.mrb[0].mxu0 %v4848
    %v4850 = vpop.f32.mrb[0].mxu0
    %v4851 = vadd.f32 0.0, %v4850
    %v4852 = vpop.f32.mrb[0].mxu0
    %4853 = vmatprep.mubr.f32.mxu0 0.0
    %v4854 = vand.u32 %v4697, 4294901760
    %v4855 = vsub.f32 %v4697, %v4854
    %v4856 = vand.u32 %v4855, 4294901760
    %v4857 = vsub.f32 %v4855, %v4856
    %v4858 = vand.u32 %v4857, 4294901760
    %4859 = vmatmul.mubr.f32.gmra.mrb[0].mxu0 %v4858
    %v4860 = vpop.f32.mrb[0].mxu0
    %v4861 = vadd.f32 0.0, %v4860
    %v4862 = vpop.f32.mrb[0].mxu0
    %4863 = vmatprep.mubr.f32.mxu0 0.0
    %v4864 = vand.u32 %v4698, 4294901760
    %v4865 = vsub.f32 %v4698, %v4864
    %v4866 = vand.u32 %v4865, 4294901760
    %v4867 = vsub.f32 %v4865, %v4866
    %v4868 = vand.u32 %v4867, 4294901760
    %4869 = vmatmul.mubr.f32.gmra.mrb[0].mxu0 %v4868
    %v4870 = vpop.f32.mrb[0].mxu0
    %v4871 = vadd.f32 0.0, %v4870
    %v4872 = vpop.f32.mrb[0].mxu0
    %4873 = vmatprep.mubr.f32.mxu0 0.0
    %v4874 = vand.u32 %v4699, 4294901760
    %v4875 = vsub.f32 %v4699, %v4874
    %v4876 = vand.u32 %v4875, 4294901760
    %v4877 = vsub.f32 %v4875, %v4876
    %v4878 = vand.u32 %v4877, 4294901760
    %4879 = vmatmul.mubr.f32.gmra.mrb[0].mxu0 %v4878
    %v4880 = vpop.f32.mrb[0].mxu0
    %v4881 = vadd.f32 0.0, %v4880
    %v4882 = vpop.f32.mrb[0].mxu0
    %4883 = vmatprep.mubr.f32.mxu0 0.0
    %v4884 = vand.u32 %v4700, 4294901760
    %v4885 = vsub.f32 %v4700, %v4884
    %v4886 = vand.u32 %v4885, 4294901760
    %v4887 = vsub.f32 %v4885, %v4886
    %v4888 = vand.u32 %v4887, 4294901760
    %4889 = vmatmul.mubr.f32.gmra.mrb[0].mxu0 %v4888
    %v4890 = vpop.f32.mrb[0].mxu0
    %v4891 = vadd.f32 0.0, %v4890
    %v4892 = vpop.f32.mrb[0].mxu0
    %4893 = vmatprep.mubr.f32.mxu0 0.0
    %v4894 = vand.u32 %v4701, 4294901760
    %v4895 = vsub.f32 %v4701, %v4894
    %v4896 = vand.u32 %v4895, 4294901760
    %v4897 = vsub.f32 %v4895, %v4896
    %v4898 = vand.u32 %v4897, 4294901760
    %4899 = vmatmul.mubr.f32.gmra.mrb[0].mxu0 %v4898
    %v4900 = vpop.f32.mrb[0].mxu0
    %v4901 = vadd.f32 0.0, %v4900
    %v4902 = vpop.f32.mrb[0].mxu0
    %4903 = vmatprep.mubr.f32.mxu0 0.0
    %v4904 = vand.u32 %v4702, 4294901760
    %v4905 = vsub.f32 %v4702, %v4904
    %v4906 = vand.u32 %v4905, 4294901760
    %v4907 = vsub.f32 %v4905, %v4906
    %v4908 = vand.u32 %v4907, 4294901760
    %4909 = vmatmul.mubr.f32.gmra.mrb[0].mxu0 %v4908
    %v4910 = vpop.f32.mrb[0].mxu0
    %v4911 = vadd.f32 0.0, %v4910
    %v4912 = vpop.f32.mrb[0].mxu0
    %4913 = vmatprep.mubr.f32.mxu0 0.0
    %v4914 = vand.u32 %v4703, 4294901760
    %v4915 = vsub.f32 %v4703, %v4914
    %v4916 = vand.u32 %v4915, 4294901760
    %v4917 = vsub.f32 %v4915, %v4916
    %v4918 = vand.u32 %v4917, 4294901760
    %4919 = vmatmul.mubr.f32.gmra.mrb[0].mxu0 %v4918
    %v4920 = vpop.f32.mrb[0].mxu0
    %v4921 = vadd.f32 0.0, %v4920
    %v4922 = vpop.f32.mrb[0].mxu0
    %4923 = vmatprep.mubr.f32.mxu0 0.0
    %v4924 = vand.u32 %v4704, 4294901760
    %v4925 = vsub.f32 %v4704, %v4924
    %v4926 = vand.u32 %v4925, 4294901760
    %v4927 = vsub.f32 %v4925, %v4926
    %v4928 = vand.u32 %v4927, 4294901760
    %4929 = vmatmul.mubr.f32.gmra.mrb[0].mxu0 %v4928
    %v4930 = vpop.f32.mrb[0].mxu0
    %v4931 = vadd.f32 0.0, %v4930
    %v4932 = vpop.f32.mrb[0].mxu0
    %4933 = vdwg.mxu0
    %4934 = vmatprep.subr.mxu0 0.0
    %v4935 = vand.u32 %v4717, 4294901760
    %v4936 = vsub.f32 %v4717, %v4935
    %v4937 = vand.u32 %v4936, 4294901760
    %v4938 = vsub.f32 %v4936, %v4937
    %v4939 = vand.u32 %v4938, 4294901760
    %4940 = vmatpush1.msra.mxu0 %v4939
    %4941 = vmatprep.subr.mxu0 0.0
    %v4942 = vand.u32 %v4718, 4294901760
    %v4943 = vsub.f32 %v4718, %v4942
    %v4944 = vand.u32 %v4943, 4294901760
    %v4945 = vsub.f32 %v4943, %v4944
    %v4946 = vand.u32 %v4945, 4294901760
    %4947 = vmatpush1.msra.mxu0 %v4946
    %4948 = vmatprep.subr.mxu0 0.0
    %v4949 = vand.u32 %v4719, 4294901760
    %v4950 = vsub.f32 %v4719, %v4949
    %v4951 = vand.u32 %v4950, 4294901760
    %v4952 = vsub.f32 %v4950, %v4951
    %v4953 = vand.u32 %v4952, 4294901760
    %4954 = vmatpush1.msra.mxu0 %v4953
    %4955 = vmatprep.subr.mxu0 0.0
    %v4956 = vand.u32 %v4720, 4294901760
    %v4957 = vsub.f32 %v4720, %v4956
    %v4958 = vand.u32 %v4957, 4294901760
    %v4959 = vsub.f32 %v4957, %v4958
    %v4960 = vand.u32 %v4959, 4294901760
    %4961 = vmatpush1.msra.mxu0 %v4960
    %4962 = vmatprep.subr.mxu0 0.0
    %v4963 = vand.u32 %v4721, 4294901760
    %v4964 = vsub.f32 %v4721, %v4963
    %v4965 = vand.u32 %v4964, 4294901760
    %v4966 = vsub.f32 %v4964, %v4965
    %v4967 = vand.u32 %v4966, 4294901760
    %4968 = vmatpush1.msra.mxu0 %v4967
    %4969 = vmatprep.subr.mxu0 0.0
    %v4970 = vand.u32 %v4722, 4294901760
    %v4971 = vsub.f32 %v4722, %v4970
    %v4972 = vand.u32 %v4971, 4294901760
    %v4973 = vsub.f32 %v4971, %v4972
    %v4974 = vand.u32 %v4973, 4294901760
    %4975 = vmatpush1.msra.mxu0 %v4974
    %4976 = vmatprep.subr.mxu0 0.0
    %v4977 = vand.u32 %v4723, 4294901760
    %v4978 = vsub.f32 %v4723, %v4977
    %v4979 = vand.u32 %v4978, 4294901760
    %v4980 = vsub.f32 %v4978, %v4979
    %v4981 = vand.u32 %v4980, 4294901760
    %4982 = vmatpush1.msra.mxu0 %v4981
    %4983 = vmatprep.subr.mxu0 0.0
    %v4984 = vand.u32 %v4724, 4294901760
    %v4985 = vsub.f32 %v4724, %v4984
    %v4986 = vand.u32 %v4985, 4294901760
    %v4987 = vsub.f32 %v4985, %v4986
    %v4988 = vand.u32 %v4987, 4294901760
    %4989 = vmatpush1.msra.mxu0 %v4988
    %4990 = vmatprep.subr.mxu0 0.0
    %v4991 = vand.u32 %v4725, 4294901760
    %v4992 = vsub.f32 %v4725, %v4991
    %v4993 = vand.u32 %v4992, 4294901760
    %v4994 = vsub.f32 %v4992, %v4993
    %v4995 = vand.u32 %v4994, 4294901760
    %4996 = vmatpush1.msra.mxu0 %v4995
    %4997 = vmatprep.subr.mxu0 0.0
    %v4998 = vand.u32 %v4726, 4294901760
    %v4999 = vsub.f32 %v4726, %v4998
    %v5000 = vand.u32 %v4999, 4294901760
    %v5001 = vsub.f32 %v4999, %v5000
    %v5002 = vand.u32 %v5001, 4294901760
    %5003 = vmatpush1.msra.mxu0 %v5002
    %5004 = vmatprep.subr.mxu0 0.0
    %v5005 = vand.u32 %v4727, 4294901760
    %v5006 = vsub.f32 %v4727, %v5005
    %v5007 = vand.u32 %v5006, 4294901760
    %v5008 = vsub.f32 %v5006, %v5007
    %v5009 = vand.u32 %v5008, 4294901760
    %5010 = vmatpush1.msra.mxu0 %v5009
    %5011 = vmatprep.subr.mxu0 0.0
    %v5012 = vand.u32 %v4728, 4294901760
    %v5013 = vsub.f32 %v4728, %v5012
    %v5014 = vand.u32 %v5013, 4294901760
    %v5015 = vsub.f32 %v5013, %v5014
    %v5016 = vand.u32 %v5015, 4294901760
    %5017 = vmatpush1.msra.mxu0 %v5016
    %5018 = vmatprep.subr.mxu0 0.0
    %v5019 = vand.u32 %v4729, 4294901760
    %v5020 = vsub.f32 %v4729, %v5019
    %v5021 = vand.u32 %v5020, 4294901760
    %v5022 = vsub.f32 %v5020, %v5021
    %v5023 = vand.u32 %v5022, 4294901760
    %5024 = vmatpush1.msra.mxu0 %v5023
    %5025 = vmatprep.subr.mxu0 0.0
    %v5026 = vand.u32 %v4730, 4294901760
    %v5027 = vsub.f32 %v4730, %v5026
    %v5028 = vand.u32 %v5027, 4294901760
    %v5029 = vsub.f32 %v5027, %v5028
    %v5030 = vand.u32 %v5029, 4294901760
    %5031 = vmatpush1.msra.mxu0 %v5030
    %5032 = vmatprep.subr.mxu0 0.0
    %v5033 = vand.u32 %v4731, 4294901760
    %v5034 = vsub.f32 %v4731, %v5033
    %v5035 = vand.u32 %v5034, 4294901760
    %v5036 = vsub.f32 %v5034, %v5035
    %v5037 = vand.u32 %v5036, 4294901760
    %5038 = vmatpush1.msra.mxu0 %v5037
    %5039 = vmatprep.subr.mxu0 0.0
    %v5040 = vand.u32 %v4732, 4294901760
    %v5041 = vsub.f32 %v4732, %v5040
    %v5042 = vand.u32 %v5041, 4294901760
    %v5043 = vsub.f32 %v5041, %v5042
    %v5044 = vand.u32 %v5043, 4294901760
    %5045 = vmatpush1.msra.mxu0 %v5044
    %5046 = vmatprep.subr.mxu0 0.0
    %5047 = vmatpush1.msra.mxu0 0.0
    %5048 = vmatprep.subr.mxu0 0.0
    %5049 = vmatpush1.msra.mxu0 0.0
    %5050 = vmatprep.subr.mxu0 0.0
    %5051 = vmatpush1.msra.mxu0 0.0
    %5052 = vmatprep.subr.mxu0 0.0
    %5053 = vmatpush1.msra.mxu0 0.0
    %5054 = vmatprep.subr.mxu0 0.0
    %5055 = vmatpush1.msra.mxu0 0.0
    %5056 = vmatprep.subr.mxu0 0.0
    %5057 = vmatpush1.msra.mxu0 0.0
    %5058 = vmatprep.subr.mxu0 0.0
    %5059 = vmatpush1.msra.mxu0 0.0
    %5060 = vmatprep.subr.mxu0 0.0
    %5061 = vmatpush1.msra.mxu0 0.0
    %5062 = vmatprep.subr.mxu0 0.0
    %5063 = vmatpush1.msra.mxu0 0.0
    %5064 = vmatprep.subr.mxu0 0.0
    %5065 = vmatpush1.msra.mxu0 0.0
    %5066 = vmatprep.subr.mxu0 0.0
    %5067 = vmatpush1.msra.mxu0 0.0
    %5068 = vmatprep.subr.mxu0 0.0
    %5069 = vmatpush1.msra.mxu0 0.0
    %5070 = vmatprep.subr.mxu0 0.0
    %5071 = vmatpush1.msra.mxu0 0.0
    %5072 = vmatprep.subr.mxu0 0.0
    %5073 = vmatpush1.msra.mxu0 0.0
    %5074 = vmatprep.subr.mxu0 0.0
    %5075 = vmatpush1.msra.mxu0 0.0
    %5076 = vmatprep.subr.mxu0 0.0
    %5077 = vmatpush1.msra.mxu0 0.0
    %5078 = vmatprep.mubr.f32.mxu0 0.0
    %v5079 = vand.u32 %v4693, 4294901760
    %5080 = vmatmul.mubr.f32.gmra.mrb[0].mxu0 %v5079
    %v5081 = vpop.f32.mrb[0].mxu0
    %v5082 = vadd.f32 %v4821, %v5081
    %v5083 = vpop.f32.mrb[0].mxu0
    %5084 = vmatprep.mubr.f32.mxu0 0.0
    %v5085 = vand.u32 %v4694, 4294901760
    %5086 = vmatmul.mubr.f32.gmra.mrb[0].mxu0 %v5085
    %v5087 = vpop.f32.mrb[0].mxu0
    %v5088 = vadd.f32 %v4831, %v5087
    %v5089 = vpop.f32.mrb[0].mxu0
    %5090 = vmatprep.mubr.f32.mxu0 0.0
    %v5091 = vand.u32 %v4695, 4294901760
    %5092 = vmatmul.mubr.f32.gmra.mrb[0].mxu0 %v5091
    %v5093 = vpop.f32.mrb[0].mxu0
    %v5094 = vadd.f32 %v4841, %v5093
    %v5095 = vpop.f32.mrb[0].mxu0
    %5096 = vmatprep.mubr.f32.mxu0 0.0
    %v5097 = vand.u32 %v4696, 4294901760
    %5098 = vmatmul.mubr.f32.gmra.mrb[0].mxu0 %v5097
    %v5099 = vpop.f32.mrb[0].mxu0
    %v5100 = vadd.f32 %v4851, %v5099
    %v5101 = vpop.f32.mrb[0].mxu0
    %5102 = vmatprep.mubr.f32.mxu0 0.0
    %v5103 = vand.u32 %v4697, 4294901760
    %5104 = vmatmul.mubr.f32.gmra.mrb[0].mxu0 %v5103
    %v5105 = vpop.f32.mrb[0].mxu0
    %v5106 = vadd.f32 %v4861, %v5105
    %v5107 = vpop.f32.mrb[0].mxu0
    %5108 = vmatprep.mubr.f32.mxu0 0.0
    %v5109 = vand.u32 %v4698, 4294901760
    %5110 = vmatmul.mubr.f32.gmra.mrb[0].mxu0 %v5109
    %v5111 = vpop.f32.mrb[0].mxu0
    %v5112 = vadd.f32 %v4871, %v5111
    %v5113 = vpop.f32.mrb[0].mxu0
    %5114 = vmatprep.mubr.f32.mxu0 0.0
    %v5115 = vand.u32 %v4699, 4294901760
    %5116 = vmatmul.mubr.f32.gmra.mrb[0].mxu0 %v5115
    %v5117 = vpop.f32.mrb[0].mxu0
    %v5118 = vadd.f32 %v4881, %v5117
    %v5119 = vpop.f32.mrb[0].mxu0
    %5120 = vmatprep.mubr.f32.mxu0 0.0
    %v5121 = vand.u32 %v4700, 4294901760
    %5122 = vmatmul.mubr.f32.gmra.mrb[0].mxu0 %v5121
    %v5123 = vpop.f32.mrb[0].mxu0
    %v5124 = vadd.f32 %v4891, %v5123
    %v5125 = vpop.f32.mrb[0].mxu0
    %5126 = vmatprep.mubr.f32.mxu0 0.0
    %v5127 = vand.u32 %v4701, 4294901760
    %5128 = vmatmul.mubr.f32.gmra.mrb[0].mxu0 %v5127
    %v5129 = vpop.f32.mrb[0].mxu0
    %v5130 = vadd.f32 %v4901, %v5129
    %v5131 = vpop.f32.mrb[0].mxu0
    %5132 = vmatprep.mubr.f32.mxu0 0.0
    %v5133 = vand.u32 %v4702, 4294901760
    %5134 = vmatmul.mubr.f32.gmra.mrb[0].mxu0 %v5133
    %v5135 = vpop.f32.mrb[0].mxu0
    %v5136 = vadd.f32 %v4911, %v5135
    %v5137 = vpop.f32.mrb[0].mxu0
    %5138 = vmatprep.mubr.f32.mxu0 0.0
    %v5139 = vand.u32 %v4703, 4294901760
    %5140 = vmatmul.mubr.f32.gmra.mrb[0].mxu0 %v5139
    %v5141 = vpop.f32.mrb[0].mxu0
    %v5142 = vadd.f32 %v4921, %v5141
    %v5143 = vpop.f32.mrb[0].mxu0
    %5144 = vmatprep.mubr.f32.mxu0 0.0
    %v5145 = vand.u32 %v4704, 4294901760
    %5146 = vmatmul.mubr.f32.gmra.mrb[0].mxu0 %v5145
    %v5147 = vpop.f32.mrb[0].mxu0
    %v5148 = vadd.f32 %v4931, %v5147
    %v5149 = vpop.f32.mrb[0].mxu0
    %5150 = vdwg.mxu0
    %5151 = vmatprep.subr.mxu0 0.0
    %v5152 = vand.u32 %v4717, 4294901760
    %v5153 = vsub.f32 %v4717, %v5152
    %5154 = vmatpush1.msra.mxu0 %v5153
    %5155 = vmatprep.subr.mxu0 0.0
    %v5156 = vand.u32 %v4718, 4294901760
    %v5157 = vsub.f32 %v4718, %v5156
    %5158 = vmatpush1.msra.mxu0 %v5157
    %5159 = vmatprep.subr.mxu0 0.0
    %v5160 = vand.u32 %v4719, 4294901760
    %v5161 = vsub.f32 %v4719, %v5160
    %5162 = vmatpush1.msra.mxu0 %v5161
    %5163 = vmatprep.subr.mxu0 0.0
    %v5164 = vand.u32 %v4720, 4294901760
    %v5165 = vsub.f32 %v4720, %v5164
    %5166 = vmatpush1.msra.mxu0 %v5165
    %5167 = vmatprep.subr.mxu0 0.0
    %v5168 = vand.u32 %v4721, 4294901760
    %v5169 = vsub.f32 %v4721, %v5168
    %5170 = vmatpush1.msra.mxu0 %v5169
    %5171 = vmatprep.subr.mxu0 0.0
    %v5172 = vand.u32 %v4722, 4294901760
    %v5173 = vsub.f32 %v4722, %v5172
    %5174 = vmatpush1.msra.mxu0 %v5173
    %5175 = vmatprep.subr.mxu0 0.0
    %v5176 = vand.u32 %v4723, 4294901760
    %v5177 = vsub.f32 %v4723, %v5176
    %5178 = vmatpush1.msra.mxu0 %v5177
    %5179 = vmatprep.subr.mxu0 0.0
    %v5180 = vand.u32 %v4724, 4294901760
    %v5181 = vsub.f32 %v4724, %v5180
    %5182 = vmatpush1.msra.mxu0 %v5181
    %5183 = vmatprep.subr.mxu0 0.0
    %v5184 = vand.u32 %v4725, 4294901760
    %v5185 = vsub.f32 %v4725, %v5184
    %5186 = vmatpush1.msra.mxu0 %v5185
    %5187 = vmatprep.subr.mxu0 0.0
    %v5188 = vand.u32 %v4726, 4294901760
    %v5189 = vsub.f32 %v4726, %v5188
    %5190 = vmatpush1.msra.mxu0 %v5189
    %5191 = vmatprep.subr.mxu0 0.0
    %v5192 = vand.u32 %v4727, 4294901760
    %v5193 = vsub.f32 %v4727, %v5192
    %5194 = vmatpush1.msra.mxu0 %v5193
    %5195 = vmatprep.subr.mxu0 0.0
    %v5196 = vand.u32 %v4728, 4294901760
    %v5197 = vsub.f32 %v4728, %v5196
    %5198 = vmatpush1.msra.mxu0 %v5197
    %5199 = vmatprep.subr.mxu0 0.0
    %v5200 = vand.u32 %v4729, 4294901760
    %v5201 = vsub.f32 %v4729, %v5200
    %5202 = vmatpush1.msra.mxu0 %v5201
    %5203 = vmatprep.subr.mxu0 0.0
    %v5204 = vand.u32 %v4730, 4294901760
    %v5205 = vsub.f32 %v4730, %v5204
    %5206 = vmatpush1.msra.mxu0 %v5205
    %5207 = vmatprep.subr.mxu0 0.0
    %v5208 = vand.u32 %v4731, 4294901760
    %v5209 = vsub.f32 %v4731, %v5208
    %5210 = vmatpush1.msra.mxu0 %v5209
    %5211 = vmatprep.subr.mxu0 0.0
    %v5212 = vand.u32 %v4732, 4294901760
    %v5213 = vsub.f32 %v4732, %v5212
    %5214 = vmatpush1.msra.mxu0 %v5213
    %5215 = vmatprep.subr.mxu0 0.0
    %5216 = vmatpush1.msra.mxu0 0.0
    %5217 = vmatprep.subr.mxu0 0.0
    %5218 = vmatpush1.msra.mxu0 0.0
    %5219 = vmatprep.subr.mxu0 0.0
    %5220 = vmatpush1.msra.mxu0 0.0
    %5221 = vmatprep.subr.mxu0 0.0
    %5222 = vmatpush1.msra.mxu0 0.0
    %5223 = vmatprep.subr.mxu0 0.0
    %5224 = vmatpush1.msra.mxu0 0.0
    %5225 = vmatprep.subr.mxu0 0.0
    %5226 = vmatpush1.msra.mxu0 0.0
    %5227 = vmatprep.subr.mxu0 0.0
    %5228 = vmatpush1.msra.mxu0 0.0
    %5229 = vmatprep.subr.mxu0 0.0
    %5230 = vmatpush1.msra.mxu0 0.0
    %5231 = vmatprep.subr.mxu0 0.0
    %5232 = vmatpush1.msra.mxu0 0.0
    %5233 = vmatprep.subr.mxu0 0.0
    %5234 = vmatpush1.msra.mxu0 0.0
    %5235 = vmatprep.subr.mxu0 0.0
    %5236 = vmatpush1.msra.mxu0 0.0
    %5237 = vmatprep.subr.mxu0 0.0
    %5238 = vmatpush1.msra.mxu0 0.0
    %5239 = vmatprep.subr.mxu0 0.0
    %5240 = vmatpush1.msra.mxu0 0.0
    %5241 = vmatprep.subr.mxu0 0.0
    %5242 = vmatpush1.msra.mxu0 0.0
    %5243 = vmatprep.subr.mxu0 0.0
    %5244 = vmatpush1.msra.mxu0 0.0
    %5245 = vmatprep.subr.mxu0 0.0
    %5246 = vmatpush1.msra.mxu0 0.0
    %5247 = vmatprep.mubr.f32.mxu0 0.0
    %v5248 = vand.u32 %v4693, 4294901760
    %v5249 = vsub.f32 %v4693, %v5248
    %5250 = vmatmul.mubr.f32.gmra.mrb[0].mxu0 %v5249
    %v5251 = vpop.f32.mrb[0].mxu0
    %v5252 = vadd.f32 %v5082, %v5251
    %v5253 = vpop.f32.mrb[0].mxu0
    %5254 = vmatprep.mubr.f32.mxu0 0.0
    %v5255 = vand.u32 %v4694, 4294901760
    %v5256 = vsub.f32 %v4694, %v5255
    %5257 = vmatmul.mubr.f32.gmra.mrb[0].mxu0 %v5256
    %v5258 = vpop.f32.mrb[0].mxu0
    %v5259 = vadd.f32 %v5088, %v5258
    %v5260 = vpop.f32.mrb[0].mxu0
    %5261 = vmatprep.mubr.f32.mxu0 0.0
    %v5262 = vand.u32 %v4695, 4294901760
    %v5263 = vsub.f32 %v4695, %v5262
    %5264 = vmatmul.mubr.f32.gmra.mrb[0].mxu0 %v5263
    %v5265 = vpop.f32.mrb[0].mxu0
    %v5266 = vadd.f32 %v5094, %v5265
    %v5267 = vpop.f32.mrb[0].mxu0
    %5268 = vmatprep.mubr.f32.mxu0 0.0
    %v5269 = vand.u32 %v4696, 4294901760
    %v5270 = vsub.f32 %v4696, %v5269
    %5271 = vmatmul.mubr.f32.gmra.mrb[0].mxu0 %v5270
    %v5272 = vpop.f32.mrb[0].mxu0
    %v5273 = vadd.f32 %v5100, %v5272
    %v5274 = vpop.f32.mrb[0].mxu0
    %5275 = vmatprep.mubr.f32.mxu0 0.0
    %v5276 = vand.u32 %v4697, 4294901760
    %v5277 = vsub.f32 %v4697, %v5276
    %5278 = vmatmul.mubr.f32.gmra.mrb[0].mxu0 %v5277
    %v5279 = vpop.f32.mrb[0].mxu0
    %v5280 = vadd.f32 %v5106, %v5279
    %v5281 = vpop.f32.mrb[0].mxu0
    %5282 = vmatprep.mubr.f32.mxu0 0.0
    %v5283 = vand.u32 %v4698, 4294901760
    %v5284 = vsub.f32 %v4698, %v5283
    %5285 = vmatmul.mubr.f32.gmra.mrb[0].mxu0 %v5284
    %v5286 = vpop.f32.mrb[0].mxu0
    %v5287 = vadd.f32 %v5112, %v5286
    %v5288 = vpop.f32.mrb[0].mxu0
    %5289 = vmatprep.mubr.f32.mxu0 0.0
    %v5290 = vand.u32 %v4699, 4294901760
    %v5291 = vsub.f32 %v4699, %v5290
    %5292 = vmatmul.mubr.f32.gmra.mrb[0].mxu0 %v5291
    %v5293 = vpop.f32.mrb[0].mxu0
    %v5294 = vadd.f32 %v5118, %v5293
    %v5295 = vpop.f32.mrb[0].mxu0
    %5296 = vmatprep.mubr.f32.mxu0 0.0
    %v5297 = vand.u32 %v4700, 4294901760
    %v5298 = vsub.f32 %v4700, %v5297
    %5299 = vmatmul.mubr.f32.gmra.mrb[0].mxu0 %v5298
    %v5300 = vpop.f32.mrb[0].mxu0
    %v5301 = vadd.f32 %v5124, %v5300
    %v5302 = vpop.f32.mrb[0].mxu0
    %5303 = vmatprep.mubr.f32.mxu0 0.0
    %v5304 = vand.u32 %v4701, 4294901760
    %v5305 = vsub.f32 %v4701, %v5304
    %5306 = vmatmul.mubr.f32.gmra.mrb[0].mxu0 %v5305
    %v5307 = vpop.f32.mrb[0].mxu0
    %v5308 = vadd.f32 %v5130, %v5307
    %v5309 = vpop.f32.mrb[0].mxu0
    %5310 = vmatprep.mubr.f32.mxu0 0.0
    %v5311 = vand.u32 %v4702, 4294901760
    %v5312 = vsub.f32 %v4702, %v5311
    %5313 = vmatmul.mubr.f32.gmra.mrb[0].mxu0 %v5312
    %v5314 = vpop.f32.mrb[0].mxu0
    %v5315 = vadd.f32 %v5136, %v5314
    %v5316 = vpop.f32.mrb[0].mxu0
    %5317 = vmatprep.mubr.f32.mxu0 0.0
    %v5318 = vand.u32 %v4703, 4294901760
    %v5319 = vsub.f32 %v4703, %v5318
    %5320 = vmatmul.mubr.f32.gmra.mrb[0].mxu0 %v5319
    %v5321 = vpop.f32.mrb[0].mxu0
    %v5322 = vadd.f32 %v5142, %v5321
    %v5323 = vpop.f32.mrb[0].mxu0
    %5324 = vmatprep.mubr.f32.mxu0 0.0
    %v5325 = vand.u32 %v4704, 4294901760
    %v5326 = vsub.f32 %v4704, %v5325
    %5327 = vmatmul.mubr.f32.gmra.mrb[0].mxu0 %v5326
    %v5328 = vpop.f32.mrb[0].mxu0
    %v5329 = vadd.f32 %v5148, %v5328
    %v5330 = vpop.f32.mrb[0].mxu0
    %5331 = vdwg.mxu0
    %5332 = vmatprep.subr.mxu0 0.0
    %v5333 = vand.u32 %v4717, 4294901760
    %5334 = vmatpush1.msra.mxu0 %v5333
    %5335 = vmatprep.subr.mxu0 0.0
    %v5336 = vand.u32 %v4718, 4294901760
    %5337 = vmatpush1.msra.mxu0 %v5336
    %5338 = vmatprep.subr.mxu0 0.0
    %v5339 = vand.u32 %v4719, 4294901760
    %5340 = vmatpush1.msra.mxu0 %v5339
    %5341 = vmatprep.subr.mxu0 0.0
    %v5342 = vand.u32 %v4720, 4294901760
    %5343 = vmatpush1.msra.mxu0 %v5342
    %5344 = vmatprep.subr.mxu0 0.0
    %v5345 = vand.u32 %v4721, 4294901760
    %5346 = vmatpush1.msra.mxu0 %v5345
    %5347 = vmatprep.subr.mxu0 0.0
    %v5348 = vand.u32 %v4722, 4294901760
    %5349 = vmatpush1.msra.mxu0 %v5348
    %5350 = vmatprep.subr.mxu0 0.0
    %v5351 = vand.u32 %v4723, 4294901760
    %5352 = vmatpush1.msra.mxu0 %v5351
    %5353 = vmatprep.subr.mxu0 0.0
    %v5354 = vand.u32 %v4724, 4294901760
    %5355 = vmatpush1.msra.mxu0 %v5354
    %5356 = vmatprep.subr.mxu0 0.0
    %v5357 = vand.u32 %v4725, 4294901760
    %5358 = vmatpush1.msra.mxu0 %v5357
    %5359 = vmatprep.subr.mxu0 0.0
    %v5360 = vand.u32 %v4726, 4294901760
    %5361 = vmatpush1.msra.mxu0 %v5360
    %5362 = vmatprep.subr.mxu0 0.0
    %v5363 = vand.u32 %v4727, 4294901760
    %5364 = vmatpush1.msra.mxu0 %v5363
    %5365 = vmatprep.subr.mxu0 0.0
    %v5366 = vand.u32 %v4728, 4294901760
    %5367 = vmatpush1.msra.mxu0 %v5366
    %5368 = vmatprep.subr.mxu0 0.0
    %v5369 = vand.u32 %v4729, 4294901760
    %5370 = vmatpush1.msra.mxu0 %v5369
    %5371 = vmatprep.subr.mxu0 0.0
    %v5372 = vand.u32 %v4730, 4294901760
    %5373 = vmatpush1.msra.mxu0 %v5372
    %5374 = vmatprep.subr.mxu0 0.0
    %v5375 = vand.u32 %v4731, 4294901760
    %5376 = vmatpush1.msra.mxu0 %v5375
    %5377 = vmatprep.subr.mxu0 0.0
    %v5378 = vand.u32 %v4732, 4294901760
    %5379 = vmatpush1.msra.mxu0 %v5378
    %5380 = vmatprep.subr.mxu0 0.0
    %5381 = vmatpush1.msra.mxu0 0.0
    %5382 = vmatprep.subr.mxu0 0.0
    %5383 = vmatpush1.msra.mxu0 0.0
    %5384 = vmatprep.subr.mxu0 0.0
    %5385 = vmatpush1.msra.mxu0 0.0
    %5386 = vmatprep.subr.mxu0 0.0
    %5387 = vmatpush1.msra.mxu0 0.0
    %5388 = vmatprep.subr.mxu0 0.0
    %5389 = vmatpush1.msra.mxu0 0.0
    %5390 = vmatprep.subr.mxu0 0.0
    %5391 = vmatpush1.msra.mxu0 0.0
    %5392 = vmatprep.subr.mxu0 0.0
    %5393 = vmatpush1.msra.mxu0 0.0
    %5394 = vmatprep.subr.mxu0 0.0
    %5395 = vmatpush1.msra.mxu0 0.0
    %5396 = vmatprep.subr.mxu0 0.0
    %5397 = vmatpush1.msra.mxu0 0.0
    %5398 = vmatprep.subr.mxu0 0.0
    %5399 = vmatpush1.msra.mxu0 0.0
    %5400 = vmatprep.subr.mxu0 0.0
    %5401 = vmatpush1.msra.mxu0 0.0
    %5402 = vmatprep.subr.mxu0 0.0
    %5403 = vmatpush1.msra.mxu0 0.0
    %5404 = vmatprep.subr.mxu0 0.0
    %5405 = vmatpush1.msra.mxu0 0.0
    %5406 = vmatprep.subr.mxu0 0.0
    %5407 = vmatpush1.msra.mxu0 0.0
    %5408 = vmatprep.subr.mxu0 0.0
    %5409 = vmatpush1.msra.mxu0 0.0
    %5410 = vmatprep.subr.mxu0 0.0
    %5411 = vmatpush1.msra.mxu0 0.0
    %5412 = vmatprep.mubr.f32.mxu0 0.0
    %v5413 = vand.u32 %v4693, 4294901760
    %v5414 = vsub.f32 %v4693, %v5413
    %v5415 = vand.u32 %v5414, 4294901760
    %5416 = vmatmul.mubr.f32.gmra.mrb[0].mxu0 %v5415
    %v5417 = vpop.f32.mrb[0].mxu0
    %v5418 = vadd.f32 %v5252, %v5417
    %v5419 = vpop.f32.mrb[0].mxu0
    %5420 = vmatprep.mubr.f32.mxu0 0.0
    %v5421 = vand.u32 %v4694, 4294901760
    %v5422 = vsub.f32 %v4694, %v5421
    %v5423 = vand.u32 %v5422, 4294901760
    %5424 = vmatmul.mubr.f32.gmra.mrb[0].mxu0 %v5423
    %v5425 = vpop.f32.mrb[0].mxu0
    %v5426 = vadd.f32 %v5259, %v5425
    %v5427 = vpop.f32.mrb[0].mxu0
    %5428 = vmatprep.mubr.f32.mxu0 0.0
    %v5429 = vand.u32 %v4695, 4294901760
    %v5430 = vsub.f32 %v4695, %v5429
    %v5431 = vand.u32 %v5430, 4294901760
    %5432 = vmatmul.mubr.f32.gmra.mrb[0].mxu0 %v5431
    %v5433 = vpop.f32.mrb[0].mxu0
    %v5434 = vadd.f32 %v5266, %v5433
    %v5435 = vpop.f32.mrb[0].mxu0
    %5436 = vmatprep.mubr.f32.mxu0 0.0
    %v5437 = vand.u32 %v4696, 4294901760
    %v5438 = vsub.f32 %v4696, %v5437
    %v5439 = vand.u32 %v5438, 4294901760
    %5440 = vmatmul.mubr.f32.gmra.mrb[0].mxu0 %v5439
    %v5441 = vpop.f32.mrb[0].mxu0
    %v5442 = vadd.f32 %v5273, %v5441
    %v5443 = vpop.f32.mrb[0].mxu0
    %5444 = vmatprep.mubr.f32.mxu0 0.0
    %v5445 = vand.u32 %v4697, 4294901760
    %v5446 = vsub.f32 %v4697, %v5445
    %v5447 = vand.u32 %v5446, 4294901760
    %5448 = vmatmul.mubr.f32.gmra.mrb[0].mxu0 %v5447
    %v5449 = vpop.f32.mrb[0].mxu0
    %v5450 = vadd.f32 %v5280, %v5449
    %v5451 = vpop.f32.mrb[0].mxu0
    %5452 = vmatprep.mubr.f32.mxu0 0.0
    %v5453 = vand.u32 %v4698, 4294901760
    %v5454 = vsub.f32 %v4698, %v5453
    %v5455 = vand.u32 %v5454, 4294901760
    %5456 = vmatmul.mubr.f32.gmra.mrb[0].mxu0 %v5455
    %v5457 = vpop.f32.mrb[0].mxu0
    %v5458 = vadd.f32 %v5287, %v5457
    %v5459 = vpop.f32.mrb[0].mxu0
    %5460 = vmatprep.mubr.f32.mxu0 0.0
    %v5461 = vand.u32 %v4699, 4294901760
    %v5462 = vsub.f32 %v4699, %v5461
    %v5463 = vand.u32 %v5462, 4294901760
    %5464 = vmatmul.mubr.f32.gmra.mrb[0].mxu0 %v5463
    %v5465 = vpop.f32.mrb[0].mxu0
    %v5466 = vadd.f32 %v5294, %v5465
    %v5467 = vpop.f32.mrb[0].mxu0
    %5468 = vmatprep.mubr.f32.mxu0 0.0
    %v5469 = vand.u32 %v4700, 4294901760
    %v5470 = vsub.f32 %v4700, %v5469
    %v5471 = vand.u32 %v5470, 4294901760
    %5472 = vmatmul.mubr.f32.gmra.mrb[0].mxu0 %v5471
    %v5473 = vpop.f32.mrb[0].mxu0
    %v5474 = vadd.f32 %v5301, %v5473
    %v5475 = vpop.f32.mrb[0].mxu0
    %5476 = vmatprep.mubr.f32.mxu0 0.0
    %v5477 = vand.u32 %v4701, 4294901760
    %v5478 = vsub.f32 %v4701, %v5477
    %v5479 = vand.u32 %v5478, 4294901760
    %5480 = vmatmul.mubr.f32.gmra.mrb[0].mxu0 %v5479
    %v5481 = vpop.f32.mrb[0].mxu0
    %v5482 = vadd.f32 %v5308, %v5481
    %v5483 = vpop.f32.mrb[0].mxu0
    %5484 = vmatprep.mubr.f32.mxu0 0.0
    %v5485 = vand.u32 %v4702, 4294901760
    %v5486 = vsub.f32 %v4702, %v5485
    %v5487 = vand.u32 %v5486, 4294901760
    %5488 = vmatmul.mubr.f32.gmra.mrb[0].mxu0 %v5487
    %v5489 = vpop.f32.mrb[0].mxu0
    %v5490 = vadd.f32 %v5315, %v5489
    %v5491 = vpop.f32.mrb[0].mxu0
    %5492 = vmatprep.mubr.f32.mxu0 0.0
    %v5493 = vand.u32 %v4703, 4294901760
    %v5494 = vsub.f32 %v4703, %v5493
    %v5495 = vand.u32 %v5494, 4294901760
    %5496 = vmatmul.mubr.f32.gmra.mrb[0].mxu0 %v5495
    %v5497 = vpop.f32.mrb[0].mxu0
    %v5498 = vadd.f32 %v5322, %v5497
    %v5499 = vpop.f32.mrb[0].mxu0
    %5500 = vmatprep.mubr.f32.mxu0 0.0
    %v5501 = vand.u32 %v4704, 4294901760
    %v5502 = vsub.f32 %v4704, %v5501
    %v5503 = vand.u32 %v5502, 4294901760
    %5504 = vmatmul.mubr.f32.gmra.mrb[0].mxu0 %v5503
    %v5505 = vpop.f32.mrb[0].mxu0
    %v5506 = vadd.f32 %v5329, %v5505
    %v5507 = vpop.f32.mrb[0].mxu0
    %5508 = vdwg.mxu0
    %5509 = vmatprep.subr.mxu0 0.0
    %v5510 = vand.u32 %v4717, 4294901760
    %v5511 = vsub.f32 %v4717, %v5510
    %v5512 = vand.u32 %v5511, 4294901760
    %5513 = vmatpush1.msra.mxu0 %v5512
    %5514 = vmatprep.subr.mxu0 0.0
    %v5515 = vand.u32 %v4718, 4294901760
    %v5516 = vsub.f32 %v4718, %v5515
    %v5517 = vand.u32 %v5516, 4294901760
    %5518 = vmatpush1.msra.mxu0 %v5517
    %5519 = vmatprep.subr.mxu0 0.0
    %v5520 = vand.u32 %v4719, 4294901760
    %v5521 = vsub.f32 %v4719, %v5520
    %v5522 = vand.u32 %v5521, 4294901760
    %5523 = vmatpush1.msra.mxu0 %v5522
    %5524 = vmatprep.subr.mxu0 0.0
    %v5525 = vand.u32 %v4720, 4294901760
    %v5526 = vsub.f32 %v4720, %v5525
    %v5527 = vand.u32 %v5526, 4294901760
    %5528 = vmatpush1.msra.mxu0 %v5527
    %5529 = vmatprep.subr.mxu0 0.0
    %v5530 = vand.u32 %v4721, 4294901760
    %v5531 = vsub.f32 %v4721, %v5530
    %v5532 = vand.u32 %v5531, 4294901760
    %5533 = vmatpush1.msra.mxu0 %v5532
    %5534 = vmatprep.subr.mxu0 0.0
    %v5535 = vand.u32 %v4722, 4294901760
    %v5536 = vsub.f32 %v4722, %v5535
    %v5537 = vand.u32 %v5536, 4294901760
    %5538 = vmatpush1.msra.mxu0 %v5537
    %5539 = vmatprep.subr.mxu0 0.0
    %v5540 = vand.u32 %v4723, 4294901760
    %v5541 = vsub.f32 %v4723, %v5540
    %v5542 = vand.u32 %v5541, 4294901760
    %5543 = vmatpush1.msra.mxu0 %v5542
    %5544 = vmatprep.subr.mxu0 0.0
    %v5545 = vand.u32 %v4724, 4294901760
    %v5546 = vsub.f32 %v4724, %v5545
    %v5547 = vand.u32 %v5546, 4294901760
    %5548 = vmatpush1.msra.mxu0 %v5547
    %5549 = vmatprep.subr.mxu0 0.0
    %v5550 = vand.u32 %v4725, 4294901760
    %v5551 = vsub.f32 %v4725, %v5550
    %v5552 = vand.u32 %v5551, 4294901760
    %5553 = vmatpush1.msra.mxu0 %v5552
    %5554 = vmatprep.subr.mxu0 0.0
    %v5555 = vand.u32 %v4726, 4294901760
    %v5556 = vsub.f32 %v4726, %v5555
    %v5557 = vand.u32 %v5556, 4294901760
    %5558 = vmatpush1.msra.mxu0 %v5557
    %5559 = vmatprep.subr.mxu0 0.0
    %v5560 = vand.u32 %v4727, 4294901760
    %v5561 = vsub.f32 %v4727, %v5560
    %v5562 = vand.u32 %v5561, 4294901760
    %5563 = vmatpush1.msra.mxu0 %v5562
    %5564 = vmatprep.subr.mxu0 0.0
    %v5565 = vand.u32 %v4728, 4294901760
    %v5566 = vsub.f32 %v4728, %v5565
    %v5567 = vand.u32 %v5566, 4294901760
    %5568 = vmatpush1.msra.mxu0 %v5567
    %5569 = vmatprep.subr.mxu0 0.0
    %v5570 = vand.u32 %v4729, 4294901760
    %v5571 = vsub.f32 %v4729, %v5570
    %v5572 = vand.u32 %v5571, 4294901760
    %5573 = vmatpush1.msra.mxu0 %v5572
    %5574 = vmatprep.subr.mxu0 0.0
    %v5575 = vand.u32 %v4730, 4294901760
    %v5576 = vsub.f32 %v4730, %v5575
    %v5577 = vand.u32 %v5576, 4294901760
    %5578 = vmatpush1.msra.mxu0 %v5577
    %5579 = vmatprep.subr.mxu0 0.0
    %v5580 = vand.u32 %v4731, 4294901760
    %v5581 = vsub.f32 %v4731, %v5580
    %v5582 = vand.u32 %v5581, 4294901760
    %5583 = vmatpush1.msra.mxu0 %v5582
    %5584 = vmatprep.subr.mxu0 0.0
    %v5585 = vand.u32 %v4732, 4294901760
    %v5586 = vsub.f32 %v4732, %v5585
    %v5587 = vand.u32 %v5586, 4294901760
    %5588 = vmatpush1.msra.mxu0 %v5587
    %5589 = vmatprep.subr.mxu0 0.0
    %5590 = vmatpush1.msra.mxu0 0.0
    %5591 = vmatprep.subr.mxu0 0.0
    %5592 = vmatpush1.msra.mxu0 0.0
    %5593 = vmatprep.subr.mxu0 0.0
    %5594 = vmatpush1.msra.mxu0 0.0
    %5595 = vmatprep.subr.mxu0 0.0
    %5596 = vmatpush1.msra.mxu0 0.0
    %5597 = vmatprep.subr.mxu0 0.0
    %5598 = vmatpush1.msra.mxu0 0.0
    %5599 = vmatprep.subr.mxu0 0.0
    %5600 = vmatpush1.msra.mxu0 0.0
    %5601 = vmatprep.subr.mxu0 0.0
    %5602 = vmatpush1.msra.mxu0 0.0
    %5603 = vmatprep.subr.mxu0 0.0
    %5604 = vmatpush1.msra.mxu0 0.0
    %5605 = vmatprep.subr.mxu0 0.0
    %5606 = vmatpush1.msra.mxu0 0.0
    %5607 = vmatprep.subr.mxu0 0.0
    %5608 = vmatpush1.msra.mxu0 0.0
    %5609 = vmatprep.subr.mxu0 0.0
    %5610 = vmatpush1.msra.mxu0 0.0
    %5611 = vmatprep.subr.mxu0 0.0
    %5612 = vmatpush1.msra.mxu0 0.0
    %5613 = vmatprep.subr.mxu0 0.0
    %5614 = vmatpush1.msra.mxu0 0.0
    %5615 = vmatprep.subr.mxu0 0.0
    %5616 = vmatpush1.msra.mxu0 0.0
    %5617 = vmatprep.subr.mxu0 0.0
    %5618 = vmatpush1.msra.mxu0 0.0
    %5619 = vmatprep.subr.mxu0 0.0
    %5620 = vmatpush1.msra.mxu0 0.0
    %5621 = vmatprep.mubr.f32.mxu0 0.0
    %v5622 = vand.u32 %v4693, 4294901760
    %5623 = vmatmul.mubr.f32.gmra.mrb[0].mxu0 %v5622
    %v5624 = vpop.f32.mrb[0].mxu0
    %v5625 = vadd.f32 %v5418, %v5624
    %v5626 = vpop.f32.mrb[0].mxu0
    %5627 = vmatprep.mubr.f32.mxu0 0.0
    %v5628 = vand.u32 %v4694, 4294901760
    %5629 = vmatmul.mubr.f32.gmra.mrb[0].mxu0 %v5628
    %v5630 = vpop.f32.mrb[0].mxu0
    %v5631 = vadd.f32 %v5426, %v5630
    %v5632 = vpop.f32.mrb[0].mxu0
    %5633 = vmatprep.mubr.f32.mxu0 0.0
    %v5634 = vand.u32 %v4695, 4294901760
    %5635 = vmatmul.mubr.f32.gmra.mrb[0].mxu0 %v5634
    %v5636 = vpop.f32.mrb[0].mxu0
    %v5637 = vadd.f32 %v5434, %v5636
    %v5638 = vpop.f32.mrb[0].mxu0
    %5639 = vmatprep.mubr.f32.mxu0 0.0
    %v5640 = vand.u32 %v4696, 4294901760
    %5641 = vmatmul.mubr.f32.gmra.mrb[0].mxu0 %v5640
    %v5642 = vpop.f32.mrb[0].mxu0
    %v5643 = vadd.f32 %v5442, %v5642
    %v5644 = vpop.f32.mrb[0].mxu0
    %5645 = vmatprep.mubr.f32.mxu0 0.0
    %v5646 = vand.u32 %v4697, 4294901760
    %5647 = vmatmul.mubr.f32.gmra.mrb[0].mxu0 %v5646
    %v5648 = vpop.f32.mrb[0].mxu0
    %v5649 = vadd.f32 %v5450, %v5648
    %v5650 = vpop.f32.mrb[0].mxu0
    %5651 = vmatprep.mubr.f32.mxu0 0.0
    %v5652 = vand.u32 %v4698, 4294901760
    %5653 = vmatmul.mubr.f32.gmra.mrb[0].mxu0 %v5652
    %v5654 = vpop.f32.mrb[0].mxu0
    %v5655 = vadd.f32 %v5458, %v5654
    %v5656 = vpop.f32.mrb[0].mxu0
    %5657 = vmatprep.mubr.f32.mxu0 0.0
    %v5658 = vand.u32 %v4699, 4294901760
    %5659 = vmatmul.mubr.f32.gmra.mrb[0].mxu0 %v5658
    %v5660 = vpop.f32.mrb[0].mxu0
    %v5661 = vadd.f32 %v5466, %v5660
    %v5662 = vpop.f32.mrb[0].mxu0
    %5663 = vmatprep.mubr.f32.mxu0 0.0
    %v5664 = vand.u32 %v4700, 4294901760
    %5665 = vmatmul.mubr.f32.gmra.mrb[0].mxu0 %v5664
    %v5666 = vpop.f32.mrb[0].mxu0
    %v5667 = vadd.f32 %v5474, %v5666
    %v5668 = vpop.f32.mrb[0].mxu0
    %5669 = vmatprep.mubr.f32.mxu0 0.0
    %v5670 = vand.u32 %v4701, 4294901760
    %5671 = vmatmul.mubr.f32.gmra.mrb[0].mxu0 %v5670
    %v5672 = vpop.f32.mrb[0].mxu0
    %v5673 = vadd.f32 %v5482, %v5672
    %v5674 = vpop.f32.mrb[0].mxu0
    %5675 = vmatprep.mubr.f32.mxu0 0.0
    %v5676 = vand.u32 %v4702, 4294901760
    %5677 = vmatmul.mubr.f32.gmra.mrb[0].mxu0 %v5676
    %v5678 = vpop.f32.mrb[0].mxu0
    %v5679 = vadd.f32 %v5490, %v5678
    %v5680 = vpop.f32.mrb[0].mxu0
    %5681 = vmatprep.mubr.f32.mxu0 0.0
    %v5682 = vand.u32 %v4703, 4294901760
    %5683 = vmatmul.mubr.f32.gmra.mrb[0].mxu0 %v5682
    %v5684 = vpop.f32.mrb[0].mxu0
    %v5685 = vadd.f32 %v5498, %v5684
    %v5686 = vpop.f32.mrb[0].mxu0
    %5687 = vmatprep.mubr.f32.mxu0 0.0
    %v5688 = vand.u32 %v4704, 4294901760
    %5689 = vmatmul.mubr.f32.gmra.mrb[0].mxu0 %v5688
    %v5690 = vpop.f32.mrb[0].mxu0
    %v5691 = vadd.f32 %v5506, %v5690
    %v5692 = vpop.f32.mrb[0].mxu0
    %5693 = vdwg.mxu0
    %5694 = vmatprep.subr.mxu0 0.0
    %v5695 = vand.u32 %v4717, 4294901760
    %5696 = vmatpush1.msra.mxu0 %v5695
    %5697 = vmatprep.subr.mxu0 0.0
    %v5698 = vand.u32 %v4718, 4294901760
    %5699 = vmatpush1.msra.mxu0 %v5698
    %5700 = vmatprep.subr.mxu0 0.0
    %v5701 = vand.u32 %v4719, 4294901760
    %5702 = vmatpush1.msra.mxu0 %v5701
    %5703 = vmatprep.subr.mxu0 0.0
    %v5704 = vand.u32 %v4720, 4294901760
    %5705 = vmatpush1.msra.mxu0 %v5704
    %5706 = vmatprep.subr.mxu0 0.0
    %v5707 = vand.u32 %v4721, 4294901760
    %5708 = vmatpush1.msra.mxu0 %v5707
    %5709 = vmatprep.subr.mxu0 0.0
    %v5710 = vand.u32 %v4722, 4294901760
    %5711 = vmatpush1.msra.mxu0 %v5710
    %5712 = vmatprep.subr.mxu0 0.0
    %v5713 = vand.u32 %v4723, 4294901760
    %5714 = vmatpush1.msra.mxu0 %v5713
    %5715 = vmatprep.subr.mxu0 0.0
    %v5716 = vand.u32 %v4724, 4294901760
    %5717 = vmatpush1.msra.mxu0 %v5716
    %5718 = vmatprep.subr.mxu0 0.0
    %v5719 = vand.u32 %v4725, 4294901760
    %5720 = vmatpush1.msra.mxu0 %v5719
    %5721 = vmatprep.subr.mxu0 0.0
    %v5722 = vand.u32 %v4726, 4294901760
    %5723 = vmatpush1.msra.mxu0 %v5722
    %5724 = vmatprep.subr.mxu0 0.0
    %v5725 = vand.u32 %v4727, 4294901760
    %5726 = vmatpush1.msra.mxu0 %v5725
    %5727 = vmatprep.subr.mxu0 0.0
    %v5728 = vand.u32 %v4728, 4294901760
    %5729 = vmatpush1.msra.mxu0 %v5728
    %5730 = vmatprep.subr.mxu0 0.0
    %v5731 = vand.u32 %v4729, 4294901760
    %5732 = vmatpush1.msra.mxu0 %v5731
    %5733 = vmatprep.subr.mxu0 0.0
    %v5734 = vand.u32 %v4730, 4294901760
    %5735 = vmatpush1.msra.mxu0 %v5734
    %5736 = vmatprep.subr.mxu0 0.0
    %v5737 = vand.u32 %v4731, 4294901760
    %5738 = vmatpush1.msra.mxu0 %v5737
    %5739 = vmatprep.subr.mxu0 0.0
    %v5740 = vand.u32 %v4732, 4294901760
    %5741 = vmatpush1.msra.mxu0 %v5740
    %5742 = vmatprep.subr.mxu0 0.0
    %5743 = vmatpush1.msra.mxu0 0.0
    %5744 = vmatprep.subr.mxu0 0.0
    %5745 = vmatpush1.msra.mxu0 0.0
    %5746 = vmatprep.subr.mxu0 0.0
    %5747 = vmatpush1.msra.mxu0 0.0
    %5748 = vmatprep.subr.mxu0 0.0
    %5749 = vmatpush1.msra.mxu0 0.0
    %5750 = vmatprep.subr.mxu0 0.0
    %5751 = vmatpush1.msra.mxu0 0.0
    %5752 = vmatprep.subr.mxu0 0.0
    %5753 = vmatpush1.msra.mxu0 0.0
    %5754 = vmatprep.subr.mxu0 0.0
    %5755 = vmatpush1.msra.mxu0 0.0
    %5756 = vmatprep.subr.mxu0 0.0
    %5757 = vmatpush1.msra.mxu0 0.0
    %5758 = vmatprep.subr.mxu0 0.0
    %5759 = vmatpush1.msra.mxu0 0.0
    %5760 = vmatprep.subr.mxu0 0.0
    %5761 = vmatpush1.msra.mxu0 0.0
    %5762 = vmatprep.subr.mxu0 0.0
    %5763 = vmatpush1.msra.mxu0 0.0
    %5764 = vmatprep.subr.mxu0 0.0
    %5765 = vmatpush1.msra.mxu0 0.0
    %5766 = vmatprep.subr.mxu0 0.0
    %5767 = vmatpush1.msra.mxu0 0.0
    %5768 = vmatprep.subr.mxu0 0.0
    %5769 = vmatpush1.msra.mxu0 0.0
    %5770 = vmatprep.subr.mxu0 0.0
    %5771 = vmatpush1.msra.mxu0 0.0
    %5772 = vmatprep.subr.mxu0 0.0
    %5773 = vmatpush1.msra.mxu0 0.0
    %5774 = vmatprep.mubr.f32.mxu0 0.0
    %v5775 = vand.u32 %v4693, 4294901760
    %5776 = vmatmul.mubr.f32.gmra.mrb[0].mxu0 %v5775
    %v5777 = vpop.f32.mrb[0].mxu0
    %v5778 = vadd.f32 %v5625, %v5777
    %v5779 = vpop.f32.mrb[0].mxu0
    %5780 = vmatprep.mubr.f32.mxu0 0.0
    %v5781 = vand.u32 %v4694, 4294901760
    %5782 = vmatmul.mubr.f32.gmra.mrb[0].mxu0 %v5781
    %v5783 = vpop.f32.mrb[0].mxu0
    %v5784 = vadd.f32 %v5631, %v5783
    %v5785 = vpop.f32.mrb[0].mxu0
    %5786 = vmatprep.mubr.f32.mxu0 0.0
    %v5787 = vand.u32 %v4695, 4294901760
    %5788 = vmatmul.mubr.f32.gmra.mrb[0].mxu0 %v5787
    %v5789 = vpop.f32.mrb[0].mxu0
    %v5790 = vadd.f32 %v5637, %v5789
    %v5791 = vpop.f32.mrb[0].mxu0
    %5792 = vmatprep.mubr.f32.mxu0 0.0
    %v5793 = vand.u32 %v4696, 4294901760
    %5794 = vmatmul.mubr.f32.gmra.mrb[0].mxu0 %v5793
    %v5795 = vpop.f32.mrb[0].mxu0
    %v5796 = vadd.f32 %v5643, %v5795
    %v5797 = vpop.f32.mrb[0].mxu0
    %5798 = vmatprep.mubr.f32.mxu0 0.0
    %v5799 = vand.u32 %v4697, 4294901760
    %5800 = vmatmul.mubr.f32.gmra.mrb[0].mxu0 %v5799
    %v5801 = vpop.f32.mrb[0].mxu0
    %v5802 = vadd.f32 %v5649, %v5801
    %v5803 = vpop.f32.mrb[0].mxu0
    %5804 = vmatprep.mubr.f32.mxu0 0.0
    %v5805 = vand.u32 %v4698, 4294901760
    %5806 = vmatmul.mubr.f32.gmra.mrb[0].mxu0 %v5805
    %v5807 = vpop.f32.mrb[0].mxu0
    %v5808 = vadd.f32 %v5655, %v5807
    %v5809 = vpop.f32.mrb[0].mxu0
    %5810 = vmatprep.mubr.f32.mxu0 0.0
    %v5811 = vand.u32 %v4699, 4294901760
    %5812 = vmatmul.mubr.f32.gmra.mrb[0].mxu0 %v5811
    %v5813 = vpop.f32.mrb[0].mxu0
    %v5814 = vadd.f32 %v5661, %v5813
    %v5815 = vpop.f32.mrb[0].mxu0
    %5816 = vmatprep.mubr.f32.mxu0 0.0
    %v5817 = vand.u32 %v4700, 4294901760
    %5818 = vmatmul.mubr.f32.gmra.mrb[0].mxu0 %v5817
    %v5819 = vpop.f32.mrb[0].mxu0
    %v5820 = vadd.f32 %v5667, %v5819
    %v5821 = vpop.f32.mrb[0].mxu0
    %5822 = vmatprep.mubr.f32.mxu0 0.0
    %v5823 = vand.u32 %v4701, 4294901760
    %5824 = vmatmul.mubr.f32.gmra.mrb[0].mxu0 %v5823
    %v5825 = vpop.f32.mrb[0].mxu0
    %v5826 = vadd.f32 %v5673, %v5825
    %v5827 = vpop.f32.mrb[0].mxu0
    %5828 = vmatprep.mubr.f32.mxu0 0.0
    %v5829 = vand.u32 %v4702, 4294901760
    %5830 = vmatmul.mubr.f32.gmra.mrb[0].mxu0 %v5829
    %v5831 = vpop.f32.mrb[0].mxu0
    %v5832 = vadd.f32 %v5679, %v5831
    %v5833 = vpop.f32.mrb[0].mxu0
    %5834 = vmatprep.mubr.f32.mxu0 0.0
    %v5835 = vand.u32 %v4703, 4294901760
    %5836 = vmatmul.mubr.f32.gmra.mrb[0].mxu0 %v5835
    %v5837 = vpop.f32.mrb[0].mxu0
    %v5838 = vadd.f32 %v5685, %v5837
    %v5839 = vpop.f32.mrb[0].mxu0
    %5840 = vmatprep.mubr.f32.mxu0 0.0
    %v5841 = vand.u32 %v4704, 4294901760
    %5842 = vmatmul.mubr.f32.gmra.mrb[0].mxu0 %v5841
    %v5843 = vpop.f32.mrb[0].mxu0
    %v5844 = vadd.f32 %v5691, %v5843
    %v5845 = vpop.f32.mrb[0].mxu0
    %5846 = vdwg.mxu0
    %v5847 = vadd.f32 %v4705, %v5778
    %v5848 = vadd.f32 %v4706, %v5784
    %v5849 = vadd.f32 %v4707, %v5790
    %v5850 = vadd.f32 %v4708, %v5796
    %v5851 = vadd.f32 %v4709, %v5802
    %v5852 = vadd.f32 %v4710, %v5808
    %v5853 = vadd.f32 %v4711, %v5814
    %v5854 = vadd.f32 %v4712, %v5820
    %v5855 = vadd.f32 %v4713, %v5826
    %v5856 = vadd.f32 %v4714, %v5832
    %v5857 = vadd.f32 %v4715, %v5838
    %v5858 = vadd.f32 %v4716, %v5844
    %5859 = vst [vmem:[#allocation3 + $0x60] sm:$0xff] %v5847
    %5860 = vst [vmem:[#allocation3 + $0x68] sm:$0xff] %v5848
    %5861 = vst [vmem:[#allocation3 + $0x70] sm:$0xff] %v5849
    %5862 = vst [vmem:[#allocation3 + $0x78] sm:$0xff] %v5850
    %5863 = vst [vmem:[#allocation3 + $0x80] sm:$0xff] %v5851
    %5864 = vst [vmem:[#allocation3 + $0x88] sm:$0xff] %v5852
    %5865 = vst [vmem:[#allocation3 + $0x90] sm:$0xff] %v5853
    %5866 = vst [vmem:[#allocation3 + $0x98] sm:$0xff] %v5854
    %5867 = vst [vmem:[#allocation3 + $0xa0] sm:$0xff] %v5855
    %5868 = vst [vmem:[#allocation3 + $0xa8] sm:$0xff] %v5856
    %5869 = vst [vmem:[#allocation3 + $0xb0] sm:$0xff] %v5857
    %5870 = vst [vmem:[#allocation3 + $0xb8] sm:$0xff] %v5858
    // Predicated region
    $region46: #{tpu_custom_call.1} parent=1 // pred_check
      %p5871 = pneg %p68
    $region47: #{tpu_custom_call.1} parent=1 // pred_check_branch
      %5873 = sbr.rel (%p5871) target = $region49
    $region48: #{tpu_custom_call.1} parent=1 // pred_region
      %v5874 = vld [vmem:[#allocation3] sm:$0xff]
      %v5875 = vld [vmem:[#allocation3 + $0x8] sm:$0xff]
      %v5876 = vld [vmem:[#allocation3 + $0x10] sm:$0xff]
      %v5877 = vld [vmem:[#allocation3 + $0x18] sm:$0xff]
      %v5878 = vld [vmem:[#allocation3 + $0x20] sm:$0xff]
      %v5879 = vld [vmem:[#allocation3 + $0x28] sm:$0xff]
      %v5880 = vld [vmem:[#allocation3 + $0x30] sm:$0xff]
      %v5881 = vld [vmem:[#allocation3 + $0x38] sm:$0xff]
      %v5882 = vld [vmem:[#allocation3 + $0x40] sm:$0xff]
      %v5883 = vld [vmem:[#allocation3 + $0x48] sm:$0xff]
      %v5884 = vld [vmem:[#allocation3 + $0x50] sm:$0xff]
      %v5885 = vld [vmem:[#allocation3 + $0x58] sm:$0xff]
      %v5886 = vld [vmem:[#allocation3 + $0x60] sm:$0xff]
      %v5887 = vld [vmem:[#allocation3 + $0x68] sm:$0xff]
      %v5888 = vld [vmem:[#allocation3 + $0x70] sm:$0xff]
      %v5889 = vld [vmem:[#allocation3 + $0x78] sm:$0xff]
      %v5890 = vld [vmem:[#allocation3 + $0x80] sm:$0xff]
      %v5891 = vld [vmem:[#allocation3 + $0x88] sm:$0xff]
      %v5892 = vld [vmem:[#allocation3 + $0x90] sm:$0xff]
      %v5893 = vld [vmem:[#allocation3 + $0x98] sm:$0xff]
      %v5894 = vld [vmem:[#allocation3 + $0xa0] sm:$0xff]
      %v5895 = vld [vmem:[#allocation3 + $0xa8] sm:$0xff]
      %v5896 = vld [vmem:[#allocation3 + $0xb0] sm:$0xff]
      %v5897 = vld [vmem:[#allocation3 + $0xb8] sm:$0xff]
      %v5898 = vld [vmem:[%s6] sm:$0x1]
      %v5900 = vlaneseq
      %v5901 = vshrl.u32 %v5900, 7
      %v5902 = vsub.s32 0, %v5901
      %v5903 = vrot.slane %v5898, %v5902
      %v5905 = vadd.f32 %v5874, %v5903
      %v5906 = vadd.f32 %v5875, %v5903
      %v5907 = vadd.f32 %v5876, %v5903
      %v5908 = vadd.f32 %v5877, %v5903
      %v5909 = vadd.f32 %v5878, %v5903
      %v5910 = vadd.f32 %v5879, %v5903
      %v5911 = vadd.f32 %v5880, %v5903
      %v5912 = vadd.f32 %v5881, %v5903
      %v5913 = vadd.f32 %v5882, %v5903
      %v5914 = vadd.f32 %v5883, %v5903
      %v5915 = vadd.f32 %v5884, %v5903
      %v5916 = vadd.f32 %v5885, %v5903
      %v5917 = vadd.f32 %v5886, %v5903
      %v5918 = vadd.f32 %v5887, %v5903
      %v5919 = vadd.f32 %v5888, %v5903
      %v5920 = vadd.f32 %v5889, %v5903
      %v5921 = vadd.f32 %v5890, %v5903
      %v5922 = vadd.f32 %v5891, %v5903
      %v5923 = vadd.f32 %v5892, %v5903
      %v5924 = vadd.f32 %v5893, %v5903
      %v5925 = vadd.f32 %v5894, %v5903
      %v5926 = vadd.f32 %v5895, %v5903
      %v5927 = vadd.f32 %v5896, %v5903
      %v5928 = vadd.f32 %v5897, %v5903
      %v5929 = vld [vmem:[#allocation4] sm:$0xff]
      %v5930 = vld [vmem:[#allocation4 + $0x8] sm:$0xff]
      %v5931 = vld [vmem:[#allocation4 + $0x10] sm:$0xff]
      %v5932 = vld [vmem:[#allocation4 + $0x18] sm:$0xff]
      %v5933 = vld [vmem:[#allocation4 + $0x20] sm:$0xff]
      %v5934 = vld [vmem:[#allocation4 + $0x28] sm:$0xff]
      %v5935 = vld [vmem:[#allocation4 + $0x30] sm:$0xff]
      %v5936 = vld [vmem:[#allocation4 + $0x38] sm:$0xff]
      %v5937 = vld [vmem:[#allocation4 + $0x40] sm:$0xff]
      %v5938 = vld [vmem:[#allocation4 + $0x48] sm:$0xff]
      %v5939 = vld [vmem:[#allocation4 + $0x50] sm:$0xff]
      %v5940 = vld [vmem:[#allocation4 + $0x58] sm:$0xff]
      %v5941 = vld [vmem:[#allocation4 + $0x60] sm:$0xff]
      %v5942 = vld [vmem:[#allocation4 + $0x68] sm:$0xff]
      %v5943 = vld [vmem:[#allocation4 + $0x70] sm:$0xff]
      %v5944 = vld [vmem:[#allocation4 + $0x78] sm:$0xff]
      %v5945 = vld [vmem:[#allocation4 + $0x80] sm:$0xff]
      %v5946 = vld [vmem:[#allocation4 + $0x88] sm:$0xff]
      %v5947 = vld [vmem:[#allocation4 + $0x90] sm:$0xff]
      %v5948 = vld [vmem:[#allocation4 + $0x98] sm:$0xff]
      %v5949 = vld [vmem:[#allocation4 + $0xa0] sm:$0xff]
      %v5950 = vld [vmem:[#allocation4 + $0xa8] sm:$0xff]
      %v5951 = vld [vmem:[#allocation4 + $0xb0] sm:$0xff]
      %v5952 = vld [vmem:[#allocation4 + $0xb8] sm:$0xff]
      %v5953 = vadd.f32 %v5905, %v5929
      %v5954 = vadd.f32 %v5906, %v5930
      %v5955 = vadd.f32 %v5907, %v5931
      %v5956 = vadd.f32 %v5908, %v5932
      %v5957 = vadd.f32 %v5909, %v5933
      %v5958 = vadd.f32 %v5910, %v5934
      %v5959 = vadd.f32 %v5911, %v5935
      %v5960 = vadd.f32 %v5912, %v5936
      %v5961 = vadd.f32 %v5913, %v5937
      %v5962 = vadd.f32 %v5914, %v5938
      %v5963 = vadd.f32 %v5915, %v5939
      %v5964 = vadd.f32 %v5916, %v5940
      %v5965 = vadd.f32 %v5917, %v5941
      %v5966 = vadd.f32 %v5918, %v5942
      %v5967 = vadd.f32 %v5919, %v5943
      %v5968 = vadd.f32 %v5920, %v5944
      %v5969 = vadd.f32 %v5921, %v5945
      %v5970 = vadd.f32 %v5922, %v5946
      %v5971 = vadd.f32 %v5923, %v5947
      %v5972 = vadd.f32 %v5924, %v5948
      %v5973 = vadd.f32 %v5925, %v5949
      %v5974 = vadd.f32 %v5926, %v5950
      %v5975 = vadd.f32 %v5927, %v5951
      %v5976 = vadd.f32 %v5928, %v5952
      %5977 = vst [vmem:[#allocation10] sm:$0xff] %v5953
      %5978 = vst [vmem:[#allocation10 + $0x8] sm:$0xff] %v5954
      %5979 = vst [vmem:[#allocation10 + $0x10] sm:$0xff] %v5955
      %5980 = vst [vmem:[#allocation10 + $0x18] sm:$0xff] %v5956
      %5981 = vst [vmem:[#allocation10 + $0x20] sm:$0xff] %v5957
      %5982 = vst [vmem:[#allocation10 + $0x28] sm:$0xff] %v5958
      %5983 = vst [vmem:[#allocation10 + $0x30] sm:$0xff] %v5959
      %5984 = vst [vmem:[#allocation10 + $0x38] sm:$0xff] %v5960
      %5985 = vst [vmem:[#allocation10 + $0x40] sm:$0xff] %v5961
      %5986 = vst [vmem:[#allocation10 + $0x48] sm:$0xff] %v5962
      %5987 = vst [vmem:[#allocation10 + $0x50] sm:$0xff] %v5963
      %5988 = vst [vmem:[#allocation10 + $0x58] sm:$0xff] %v5964
      %5989 = vst [vmem:[#allocation10 + $0x60] sm:$0xff] %v5965
      %5990 = vst [vmem:[#allocation10 + $0x68] sm:$0xff] %v5966
      %5991 = vst [vmem:[#allocation10 + $0x70] sm:$0xff] %v5967
      %5992 = vst [vmem:[#allocation10 + $0x78] sm:$0xff] %v5968
      %5993 = vst [vmem:[#allocation10 + $0x80] sm:$0xff] %v5969
      %5994 = vst [vmem:[#allocation10 + $0x88] sm:$0xff] %v5970
      %5995 = vst [vmem:[#allocation10 + $0x90] sm:$0xff] %v5971
      %5996 = vst [vmem:[#allocation10 + $0x98] sm:$0xff] %v5972
      %5997 = vst [vmem:[#allocation10 + $0xa0] sm:$0xff] %v5973
      %5998 = vst [vmem:[#allocation10 + $0xa8] sm:$0xff] %v5974
      %5999 = vst [vmem:[#allocation10 + $0xb0] sm:$0xff] %v5975
      %6000 = vst [vmem:[#allocation10 + $0xb8] sm:$0xff] %v5976
    $region49: #{tpu_custom_call.1} parent=1 // pred_fallthru
      _
    // Predicated region
    $region50: #{tpu_custom_call.1} parent=1 // pred_check
      _
    $region51: #{tpu_custom_call.1} parent=1 // pred_check_branch
      %6002 = sbr.rel (0) target = $region53
    $region52: #{tpu_custom_call.1} parent=1 // pred_region
      %s6004 = ssub.s32 3072, 3072
      %6005 = vsyncadd [#allocation6], %s6004
      %s6006 = sshll.u32 [#allocation10], 4
      %s6007 = int_to_ptr.vmem [resolvable:$true] %s6006
      %6012 = dma.vmem_to_hbm [thread:$0]  %s6007, 3072, %s7, [#allocation6], 128, 128, 8
    $region53: #{tpu_custom_call.1} parent=1 // pred_fallthru
      _
    // Predicated region
    $region54: #{tpu_custom_call.1} parent=1 // pred_check
      _
    $region55: #{tpu_custom_call.1} parent=1 // pred_check_branch
      %6014 = sbr.rel (0) target = $region57
    $region56: #{tpu_custom_call.1} parent=1 // pred_region
      %6015 = dma.done [#allocation6], 3072
    $region57: #{tpu_custom_call.1} parent=1 // pred_fallthru
      _
    %6016 = vsyncpa [#allocation5], 1
    %6017 = vsyncpa [#allocation8], 1
    %6018 = vsyncpa [#allocation6], 1

</llo_original>
